<compile_context>
chip_gen: v7x
topology: tpu7x:2x2x1
jax: 0.10.0
libtpu: 0.0.40
codegen_flags: <defaults>
</compile_context>

<pallas_src>
import functools

import jax
import jax.numpy as jnp
from jax import lax
from jax.experimental import pallas as pl
from jax.experimental.pallas import tpu as pltpu


CFG = dict(
    vocab=64,
    max_pos=16,
    type_vocab=2,
    hidden=32,
    heads=2,
    intermediate=64,
    layers=2,
    num_labels=24,
)

_LANE = 128                       # pad narrow output last-dims to lane-dense width
_VMEM_LIMIT = 32 * 1024 * 1024    # re-derive per generation at real scale (<64MiB on v7x)


# ----------------------------- Pallas kernels -----------------------------

def _ln(h, g, b):
    """LayerNorm over the last axis, eps = 1e-12 (BERT default). f32 math."""
    mu = jnp.mean(h, axis=-1, keepdims=True)
    var = jnp.mean((h - mu) * (h - mu), axis=-1, keepdims=True)
    return (h - mu) * lax.rsqrt(var + 1e-12) * g + b


def _encoder_layer_kernel(x_ref, addm_ref, lnin_g_ref, lnin_b_ref,
                          wqkv_ref, bqkv_ref, wo_ref, bo_ref,
                          ln1g_ref, ln1b_ref,
                          w1_ref, b1_ref, w2_ref, b2_ref,
                          ln2g_ref, ln2b_ref,
                          o_ref, *, heads, scale, fuse_input_ln):
    """One full BERT encoder layer for one batch element, resident in VMEM."""
    x = x_ref[0].astype(jnp.float32)                  # (S, D)
    if fuse_input_ln:                                 # layer 0: fused embedding LN
        x = _ln(x, lnin_g_ref[...], lnin_b_ref[...])
    S, D = x.shape
    dh = D // heads

    # --- fused QKV projection: one (D, 3D) bf16 matmul, f32 accumulation ---
    qkv = jnp.dot(x.astype(jnp.bfloat16), wqkv_ref[...],
                  preferred_element_type=jnp.float32) + bqkv_ref[...]

    # --- head-batched attention (head is the dot_general batch dim) ---
    q = qkv[:, 0 * D:1 * D].reshape(S, heads, dh).astype(jnp.bfloat16)
    k = qkv[:, 1 * D:2 * D].reshape(S, heads, dh).astype(jnp.bfloat16)
    v = qkv[:, 2 * D:3 * D].reshape(S, heads, dh).astype(jnp.bfloat16)
    s = jnp.einsum("qhd,khd->hqk", q, k,
                   preferred_element_type=jnp.float32) * scale
    s = s + addm_ref[0][None, :, :]                   # (1,1,S) mask over keys
    s = s - jnp.max(s, axis=-1, keepdims=True)
    p = jnp.exp(s)
    p = p * pl.reciprocal(jnp.sum(p, axis=-1, keepdims=True), approx=True)
    ctx = jnp.einsum("hqk,khd->qhd", p.astype(jnp.bfloat16), v,
                     preferred_element_type=jnp.float32).reshape(S, D)

    # --- attention output projection + residual + LayerNorm ---
    attn_out = jnp.dot(ctx.astype(jnp.bfloat16), wo_ref[...],
                       preferred_element_type=jnp.float32) + bo_ref[...]
    x1 = _ln(x + attn_out, ln1g_ref[...], ln1b_ref[...])

    # --- FFN (exact erf GELU, matching BERT) + residual + LayerNorm ---
    # TODO(synk): at real scale tile this over I with an f32 accumulator (v7x VMEM).
    hdn = jnp.dot(x1.astype(jnp.bfloat16), w1_ref[...],
                  preferred_element_type=jnp.float32) + b1_ref[...]
    hdn = 0.5 * hdn * (1.0 + lax.erf(hdn * jnp.float32(0.7071067811865476)))
    ffn = jnp.dot(hdn.astype(jnp.bfloat16), w2_ref[...],
                  preferred_element_type=jnp.float32) + b2_ref[...]
    o_ref[0] = _ln(x1 + ffn, ln2g_ref[...], ln2b_ref[...]).astype(o_ref.dtype)


def pallas_encoder_layer(x, addm, lyr, emb_ln_g, emb_ln_b, heads,
                         fuse_input_ln):
    B, S, D = x.shape
    I = lyr["w1"].shape[1]
    dh = D // heads
    kern = functools.partial(_encoder_layer_kernel, heads=heads,
                             scale=1.0 / (dh ** 0.5),
                             fuse_input_ln=fuse_input_ln)

    def const(shape):
        # Constant over the batch grid.
        # TODO(synk): at real scale use pipeline_mode=pl.Buffered(1) here so the
        # resident weights are single-buffered (frees ~half the weight VMEM on v7x).
        return pl.BlockSpec(shape, lambda b: (0, 0))

    return pl.pallas_call(
        kern,
        grid=(B,),
        out_shape=jax.ShapeDtypeStruct((B, S, D), jnp.bfloat16),  # bf16 between layers
        in_specs=[
            pl.BlockSpec((1, S, D), lambda b: (b, 0, 0)),     # x
            pl.BlockSpec((1, 1, S), lambda b: (b, 0, 0)),     # additive mask
            const((1, D)), const((1, D)),                     # fused input LN gamma/beta
            const((D, 3 * D)), const((1, 3 * D)),             # wqkv, bqkv
            const((D, D)), const((1, D)),                     # wo, bo
            const((1, D)), const((1, D)),                     # ln1 gamma, beta
            const((D, I)), const((1, I)),                     # w1, b1
            const((I, D)), const((1, D)),                     # w2, b2
            const((1, D)), const((1, D)),                     # ln2 gamma, beta
        ],
        out_specs=pl.BlockSpec((1, S, D), lambda b: (b, 0, 0)),
        compiler_params=pltpu.CompilerParams(
            dimension_semantics=("parallel",),
            vmem_limit_bytes=_VMEM_LIMIT),
    )(x, addm, emb_ln_g, emb_ln_b,
      lyr["wqkv"], lyr["bqkv"], lyr["wo"], lyr["bo"],
      lyr["ln1_g"], lyr["ln1_b"],
      lyr["w1"], lyr["b1"], lyr["w2"], lyr["b2"],
      lyr["ln2_g"], lyr["ln2_b"])


def _pool_cls_kernel(x_ref, pw_ref, pb_ref, cw_ref, cb_ref, o_ref):
    """[CLS] row -> pooler tanh(Wx+b) -> (Dropout eval identity) -> padded classifier."""
    cls_tok = x_ref[:, 0, :].astype(jnp.bfloat16)     # CLS selected in-kernel
    pooled = jnp.tanh(
        jnp.dot(cls_tok, pw_ref[...],
                preferred_element_type=jnp.float32) + pb_ref[...])
    # TODO(synk): Dropout(0.3) between pooler and classifier is eval-mode identity;
    # training-mode stochastic dropout is not implemented.
    o_ref[...] = jnp.dot(pooled.astype(jnp.bfloat16), cw_ref[...],
                         preferred_element_type=jnp.float32) + cb_ref[...]


def pallas_pool_classify(x, pool_w, pool_b, cls_w_pad, cls_b_pad, num_labels):
    B, S, D = x.shape
    Np = cls_w_pad.shape[1]                  # lane-dense padded width (128)
    Sb = S if S < 8 else 8                   # DMA only the leading rows (CLS is row 0)
    out = pl.pallas_call(
        _pool_cls_kernel,
        grid=(1,),
        out_shape=jax.ShapeDtypeStruct((B, Np), jnp.float32),
        in_specs=[
            pl.BlockSpec((B, Sb, D), lambda i: (0, 0, 0)),
            pl.BlockSpec((D, D), lambda i: (0, 0)),
            pl.BlockSpec((1, D), lambda i: (0, 0)),
            pl.BlockSpec((D, Np), lambda i: (0, 0)),
            pl.BlockSpec((1, Np), lambda i: (0, 0)),
        ],
        out_specs=pl.BlockSpec((B, Np), lambda i: (0, 0)),
        compiler_params=pltpu.CompilerParams(vmem_limit_bytes=_VMEM_LIMIT),
    )(x, pool_w, pool_b, cls_w_pad, cls_b_pad)
    return out[:, :num_labels]


# ----------------------------- Model (glue) -----------------------------

def init_params(key, cfg):
    D, I = cfg["hidden"], cfg["intermediate"]

    def norm(k, shape, std=0.02):
        return std * jax.random.normal(k, shape, dtype=jnp.float32)

    keys = iter(jax.random.split(key, 8 + 16 * cfg["layers"]))

    cls_w = norm(next(keys), (D, cfg["num_labels"]))
    cls_w_pad = jnp.zeros((D, _LANE), jnp.float32).at[:, :cfg["num_labels"]].set(cls_w)

    p = {
        "word_emb": norm(next(keys), (cfg["vocab"], D)),
        "pos_emb": norm(next(keys), (cfg["max_pos"], D)),
        "type_emb": norm(next(keys), (cfg["type_vocab"], D)),
        "emb_ln_g": jnp.ones((1, D), jnp.float32),
        "emb_ln_b": jnp.zeros((1, D), jnp.float32),
        "pool_w": norm(next(keys), (D, D)).astype(jnp.bfloat16),
        "pool_b": jnp.zeros((1, D), jnp.float32),
        "cls_w_pad": cls_w_pad.astype(jnp.bfloat16),
        "cls_b_pad": jnp.zeros((1, _LANE), jnp.float32),
        "layers": [],
    }
    for _ in range(cfg["layers"]):
        wq = norm(next(keys), (D, D))
        wk = norm(next(keys), (D, D))
        wv = norm(next(keys), (D, D))
        p["layers"].append({
            "wqkv": jnp.concatenate([wq, wk, wv], axis=1).astype(jnp.bfloat16),
            "bqkv": jnp.zeros((1, 3 * D), jnp.float32),
            "wo": norm(next(keys), (D, D)).astype(jnp.bfloat16),
            "bo": jnp.zeros((1, D), jnp.float32),
            "ln1_g": jnp.ones((1, D), jnp.float32),
            "ln1_b": jnp.zeros((1, D), jnp.float32),
            "w1": norm(next(keys), (D, I)).astype(jnp.bfloat16),
            "b1": jnp.zeros((1, I), jnp.float32),
            "w2": norm(next(keys), (I, D)).astype(jnp.bfloat16),
            "b2": jnp.zeros((1, D), jnp.float32),
            "ln2_g": jnp.ones((1, D), jnp.float32),
            "ln2_b": jnp.zeros((1, D), jnp.float32),
        })
    return p


def bert_class_forward(params, ids, mask, token_type_ids, cfg):
    B, S = ids.shape
    H = cfg["heads"]

    # --- embedding gathers (wrapper glue); embedding LN is fused into layer 0 ---
    emb = (params["word_emb"][ids]
           + params["pos_emb"][jnp.arange(S)][None, :, :]
           + params["type_emb"][token_type_ids]).astype(jnp.float32)

    # additive attention mask over keys, one row per batch element: (B, 1, S)
    addm = ((1.0 - mask.astype(jnp.float32)) * -10000.0).reshape(B, 1, S)

    # --- encoder: one fused Pallas kernel per layer; bf16 between layers ---
    x = emb
    for li, lyr in enumerate(params["layers"]):
        x = pallas_encoder_layer(x, addm, lyr,
                                 params["emb_ln_g"], params["emb_ln_b"],
                                 H, fuse_input_ln=(li == 0))

    # --- pooler (tanh on [CLS]) -> Dropout(0.3) eval identity -> Linear(D, 24) ---
    return pallas_pool_classify(x, params["pool_w"], params["pool_b"],
                                params["cls_w_pad"], params["cls_b_pad"],
                                cfg["num_labels"])


if __name__ == "__main__":
    key = jax.random.PRNGKey(0)
    k_ids, k_params = jax.random.split(key)

    B, S = 2, 8   # keep B even so both v7x TensorCores get work
    ids = jax.random.randint(k_ids, (B, S), 0, CFG["vocab"], dtype=jnp.int32)
    mask = jnp.concatenate(
        [jnp.ones((B, S - 2), jnp.int32), jnp.zeros((B, 2), jnp.int32)], axis=1)
    token_type_ids = jnp.zeros((B, S), jnp.int32)

    params = init_params(k_params, CFG)

    logits = bert_class_forward(params, ids, mask, token_type_ids, CFG)
    logits = jax.block_until_ready(logits)
    assert logits.shape == (B, CFG["num_labels"])
    assert bool(jnp.all(jnp.isfinite(logits)))
    print("KERNEL_OK")
</pallas_src>

<mosaic_0001>
module attributes {stable_mosaic.version = 11 : i64} {
  func.func @_encoder_layer_kernel(%arg0: i32, %arg1: memref<1x8x32xf32, #tpu.memory_space<vmem>>, %arg2: memref<1x1x8xf32, #tpu.memory_space<vmem>>, %arg3: memref<1x32xf32, #tpu.memory_space<vmem>>, %arg4: memref<1x32xf32, #tpu.memory_space<vmem>>, %arg5: memref<32x96xbf16, #tpu.memory_space<vmem>>, %arg6: memref<1x96xf32, #tpu.memory_space<vmem>>, %arg7: memref<32x32xbf16, #tpu.memory_space<vmem>>, %arg8: memref<1x32xf32, #tpu.memory_space<vmem>>, %arg9: memref<1x32xf32, #tpu.memory_space<vmem>>, %arg10: memref<1x32xf32, #tpu.memory_space<vmem>>, %arg11: memref<32x64xbf16, #tpu.memory_space<vmem>>, %arg12: memref<1x64xf32, #tpu.memory_space<vmem>>, %arg13: memref<64x32xbf16, #tpu.memory_space<vmem>>, %arg14: memref<1x32xf32, #tpu.memory_space<vmem>>, %arg15: memref<1x32xf32, #tpu.memory_space<vmem>>, %arg16: memref<1x32xf32, #tpu.memory_space<vmem>>, %arg17: memref<1x8x32xbf16, #tpu.memory_space<vmem>>) attributes {dimension_semantics = [#tpu.dimension_semantics<parallel>], iteration_bounds = array<i64: 2>, scalar_prefetch = 0 : i64, scratch_operands = 0 : i64, tpu.core_type = #tpu.core_type<tc>, window_params = [{transform_indices = @transform_0, window_bounds = array<i64: 1, 8, 32>}, {transform_indices = @transform_1, window_bounds = array<i64: 1, 1, 8>}, {pipeline_mode = #tpu.pipeline_mode<synchronous>, transform_indices = @transform_2, window_bounds = array<i64: 1, 32>}, {pipeline_mode = #tpu.pipeline_mode<synchronous>, transform_indices = @transform_3, window_bounds = array<i64: 1, 32>}, {pipeline_mode = #tpu.pipeline_mode<synchronous>, transform_indices = @transform_4, window_bounds = array<i64: 32, 96>}, {pipeline_mode = #tpu.pipeline_mode<synchronous>, transform_indices = @transform_5, window_bounds = array<i64: 1, 96>}, {pipeline_mode = #tpu.pipeline_mode<synchronous>, transform_indices = @transform_6, window_bounds = array<i64: 32, 32>}, {pipeline_mode = #tpu.pipeline_mode<synchronous>, transform_indices = @transform_7, window_bounds = array<i64: 1, 32>}, {pipeline_mode = #tpu.pipeline_mode<synchronous>, transform_indices = @transform_8, window_bounds = array<i64: 1, 32>}, {pipeline_mode = #tpu.pipeline_mode<synchronous>, transform_indices = @transform_9, window_bounds = array<i64: 1, 32>}, {pipeline_mode = #tpu.pipeline_mode<synchronous>, transform_indices = @transform_10, window_bounds = array<i64: 32, 64>}, {pipeline_mode = #tpu.pipeline_mode<synchronous>, transform_indices = @transform_11, window_bounds = array<i64: 1, 64>}, {pipeline_mode = #tpu.pipeline_mode<synchronous>, transform_indices = @transform_12, window_bounds = array<i64: 64, 32>}, {pipeline_mode = #tpu.pipeline_mode<synchronous>, transform_indices = @transform_13, window_bounds = array<i64: 1, 32>}, {pipeline_mode = #tpu.pipeline_mode<synchronous>, transform_indices = @transform_14, window_bounds = array<i64: 1, 32>}, {pipeline_mode = #tpu.pipeline_mode<synchronous>, transform_indices = @transform_15, window_bounds = array<i64: 1, 32>}, {transform_indices = @transform_16, window_bounds = array<i64: 1, 8, 32>}]} {
    %c0 = arith.constant 0 : index
    %c0_0 = arith.constant 0 : index
    %c0_1 = arith.constant 0 : index
    %0 = vector.load %arg1[%c0, %c0_0, %c0_1] : memref<1x8x32xf32, #tpu.memory_space<vmem>>, vector<1x8x32xf32>
    %1 = vector.shape_cast %0 : vector<1x8x32xf32> to vector<8x32xf32>
    %c0_2 = arith.constant 0 : index
    %c0_3 = arith.constant 0 : index
    %2 = vector.load %arg3[%c0_2, %c0_3] : memref<1x32xf32, #tpu.memory_space<vmem>>, vector<1x32xf32>
    %c0_4 = arith.constant 0 : index
    %c0_5 = arith.constant 0 : index
    %3 = vector.load %arg4[%c0_4, %c0_5] : memref<1x32xf32, #tpu.memory_space<vmem>>, vector<1x32xf32>
    %cst = arith.constant dense<0.000000e+00> : vector<8xf32>
    %4 = vector.multi_reduction <add>, %1, %cst [1] : vector<8x32xf32> to vector<8xf32>
    %5 = vector.shape_cast %4 : vector<8xf32> to vector<8x1xf32>
    %cst_6 = arith.constant 3.200000e+01 : f32
    %6 = vector.broadcast %cst_6 : f32 to vector<8x1xf32>
    %7 = arith.divf %5, %6 : vector<8x1xf32>
    %8 = vector.broadcast %7 : vector<8x1xf32> to vector<8x32xf32>
    %9 = arith.subf %1, %8 : vector<8x32xf32>
    %10 = vector.broadcast %7 : vector<8x1xf32> to vector<8x32xf32>
    %11 = arith.subf %1, %10 : vector<8x32xf32>
    %12 = arith.mulf %9, %11 : vector<8x32xf32>
    %cst_7 = arith.constant dense<0.000000e+00> : vector<8xf32>
    %13 = vector.multi_reduction <add>, %12, %cst_7 [1] : vector<8x32xf32> to vector<8xf32>
    %14 = vector.shape_cast %13 : vector<8xf32> to vector<8x1xf32>
    %cst_8 = arith.constant 3.200000e+01 : f32
    %15 = vector.broadcast %cst_8 : f32 to vector<8x1xf32>
    %16 = arith.divf %14, %15 : vector<8x1xf32>
    %17 = vector.broadcast %7 : vector<8x1xf32> to vector<8x32xf32>
    %18 = arith.subf %1, %17 : vector<8x32xf32>
    %cst_9 = arith.constant 9.99999996E-13 : f32
    %19 = vector.broadcast %cst_9 : f32 to vector<8x1xf32>
    %20 = arith.addf %16, %19 : vector<8x1xf32>
    %21 = math.rsqrt %20 : vector<8x1xf32>
    %22 = vector.broadcast %21 : vector<8x1xf32> to vector<8x32xf32>
    %23 = arith.mulf %18, %22 : vector<8x32xf32>
    %24 = vector.broadcast %2 : vector<1x32xf32> to vector<8x32xf32>
    %25 = arith.mulf %23, %24 : vector<8x32xf32>
    %26 = vector.broadcast %3 : vector<1x32xf32> to vector<8x32xf32>
    %27 = arith.addf %25, %26 : vector<8x32xf32>
    %28 = arith.truncf %27 : vector<8x32xf32> to vector<8x32xbf16>
    %c0_10 = arith.constant 0 : index
    %c0_11 = arith.constant 0 : index
    %29 = vector.load %arg5[%c0_10, %c0_11] : memref<32x96xbf16, #tpu.memory_space<vmem>>, vector<32x96xbf16>
    %cst_12 = arith.constant dense<0.000000e+00> : vector<8x96xf32>
    %30 = tpu.matmul %28, %29, %cst_12 {dimension_numbers = #tpu.dot_dimension_numbers<[1], [0], [0], [1], [0, 0, 1, 1], [], []>} : vector<8x32xbf16>, vector<32x96xbf16>, vector<8x96xf32> -> vector<8x96xf32>
    %c0_13 = arith.constant 0 : index
    %c0_14 = arith.constant 0 : index
    %31 = vector.load %arg6[%c0_13, %c0_14] : memref<1x96xf32, #tpu.memory_space<vmem>>, vector<1x96xf32>
    %32 = vector.broadcast %31 : vector<1x96xf32> to vector<8x96xf32>
    %33 = arith.addf %30, %32 : vector<8x96xf32>
    %34 = vector.extract_strided_slice %33 {offsets = [0, 0], sizes = [8, 32], strides = [1, 1]} : vector<8x96xf32> to vector<8x32xf32>
    %35 = vector.shape_cast %34 : vector<8x32xf32> to vector<8x2x16xf32>
    %36 = arith.truncf %35 : vector<8x2x16xf32> to vector<8x2x16xbf16>
    %37 = vector.extract_strided_slice %33 {offsets = [0, 32], sizes = [8, 32], strides = [1, 1]} : vector<8x96xf32> to vector<8x32xf32>
    %38 = vector.shape_cast %37 : vector<8x32xf32> to vector<8x2x16xf32>
    %39 = arith.truncf %38 : vector<8x2x16xf32> to vector<8x2x16xbf16>
    %40 = vector.extract_strided_slice %33 {offsets = [0, 64], sizes = [8, 32], strides = [1, 1]} : vector<8x96xf32> to vector<8x32xf32>
    %41 = vector.shape_cast %40 : vector<8x32xf32> to vector<8x2x16xf32>
    %42 = arith.truncf %41 : vector<8x2x16xf32> to vector<8x2x16xbf16>
    "tpu.trace_start"() <{level = 10 : i32, message = "qhd,khd->hqk"}> : () -> ()
    %cst_15 = arith.constant dense<0.000000e+00> : vector<2x8x8xf32>
    %43 = tpu.matmul %36, %39, %cst_15 {dimension_numbers = #tpu.dot_dimension_numbers<[2], [2], [0], [0], [0, 1, 0, 0, 1, 0], [1], [1]>} : vector<8x2x16xbf16>, vector<8x2x16xbf16>, vector<2x8x8xf32> -> vector<2x8x8xf32>
    "tpu.trace_stop"() : () -> ()
    %cst_16 = arith.constant 2.500000e-01 : f32
    %44 = vector.broadcast %cst_16 : f32 to vector<2x8x8xf32>
    %45 = arith.mulf %43, %44 : vector<2x8x8xf32>
    %c0_17 = arith.constant 0 : index
    %c0_18 = arith.constant 0 : index
    %c0_19 = arith.constant 0 : index
    %46 = vector.load %arg2[%c0_17, %c0_18, %c0_19] : memref<1x1x8xf32, #tpu.memory_space<vmem>>, vector<1x1x8xf32>
    %47 = vector.shape_cast %46 : vector<1x1x8xf32> to vector<1x8xf32>
    %48 = vector.shape_cast %47 : vector<1x8xf32> to vector<1x1x8xf32>
    %49 = vector.broadcast %48 : vector<1x1x8xf32> to vector<2x8x8xf32>
    %50 = arith.addf %45, %49 : vector<2x8x8xf32>
    %cst_20 = arith.constant dense<0xFF800000> : vector<2x8xf32>
    %51 = vector.multi_reduction <maximumf>, %50, %cst_20 [2] : vector<2x8x8xf32> to vector<2x8xf32>
    %52 = vector.shape_cast %51 : vector<2x8xf32> to vector<2x8x1xf32>
    %53 = vector.broadcast %52 : vector<2x8x1xf32> to vector<2x8x8xf32>
    %54 = arith.subf %50, %53 : vector<2x8x8xf32>
    %55 = math.exp %54 : vector<2x8x8xf32>
    %cst_21 = arith.constant dense<0.000000e+00> : vector<2x8xf32>
    %56 = vector.multi_reduction <add>, %55, %cst_21 [2] : vector<2x8x8xf32> to vector<2x8xf32>
    %57 = vector.shape_cast %56 : vector<2x8xf32> to vector<2x8x1xf32>
    %58 = tpu.reciprocal %57 {approx = true} : vector<2x8x1xf32> -> vector<2x8x1xf32>
    %59 = vector.broadcast %58 : vector<2x8x1xf32> to vector<2x8x8xf32>
    %60 = arith.mulf %55, %59 : vector<2x8x8xf32>
    %61 = arith.truncf %60 : vector<2x8x8xf32> to vector<2x8x8xbf16>
    "tpu.trace_start"() <{level = 10 : i32, message = "hqk,khd->qhd"}> : () -> ()
    %cst_22 = arith.constant dense<0.000000e+00> : vector<2x16x8xf32>
    %62 = tpu.matmul %42, %61, %cst_22 {dimension_numbers = #tpu.dot_dimension_numbers<[0], [2], [2], [1], [0, 1, 0, 2, 1, 1], [1], [0]>} : vector<8x2x16xbf16>, vector<2x8x8xbf16>, vector<2x16x8xf32> -> vector<2x16x8xf32>
    %63 = tpu.transpose %62, [2, 0, 1] : vector<2x16x8xf32> -> vector<8x2x16xf32>
    "tpu.trace_stop"() : () -> ()
    %64 = vector.shape_cast %63 : vector<8x2x16xf32> to vector<8x32xf32>
    %65 = arith.truncf %64 : vector<8x32xf32> to vector<8x32xbf16>
    %c0_23 = arith.constant 0 : index
    %c0_24 = arith.constant 0 : index
    %66 = vector.load %arg7[%c0_23, %c0_24] : memref<32x32xbf16, #tpu.memory_space<vmem>>, vector<32x32xbf16>
    %cst_25 = arith.constant dense<0.000000e+00> : vector<8x32xf32>
    %67 = tpu.matmul %65, %66, %cst_25 {dimension_numbers = #tpu.dot_dimension_numbers<[1], [0], [0], [1], [0, 0, 1, 1], [], []>} : vector<8x32xbf16>, vector<32x32xbf16>, vector<8x32xf32> -> vector<8x32xf32>
    %c0_26 = arith.constant 0 : index
    %c0_27 = arith.constant 0 : index
    %68 = vector.load %arg8[%c0_26, %c0_27] : memref<1x32xf32, #tpu.memory_space<vmem>>, vector<1x32xf32>
    %69 = vector.broadcast %68 : vector<1x32xf32> to vector<8x32xf32>
    %70 = arith.addf %67, %69 : vector<8x32xf32>
    %71 = arith.addf %27, %70 : vector<8x32xf32>
    %c0_28 = arith.constant 0 : index
    %c0_29 = arith.constant 0 : index
    %72 = vector.load %arg9[%c0_28, %c0_29] : memref<1x32xf32, #tpu.memory_space<vmem>>, vector<1x32xf32>
    %c0_30 = arith.constant 0 : index
    %c0_31 = arith.constant 0 : index
    %73 = vector.load %arg10[%c0_30, %c0_31] : memref<1x32xf32, #tpu.memory_space<vmem>>, vector<1x32xf32>
    %cst_32 = arith.constant dense<0.000000e+00> : vector<8xf32>
    %74 = vector.multi_reduction <add>, %71, %cst_32 [1] : vector<8x32xf32> to vector<8xf32>
    %75 = vector.shape_cast %74 : vector<8xf32> to vector<8x1xf32>
    %cst_33 = arith.constant 3.200000e+01 : f32
    %76 = vector.broadcast %cst_33 : f32 to vector<8x1xf32>
    %77 = arith.divf %75, %76 : vector<8x1xf32>
    %78 = vector.broadcast %77 : vector<8x1xf32> to vector<8x32xf32>
    %79 = arith.subf %71, %78 : vector<8x32xf32>
    %80 = vector.broadcast %77 : vector<8x1xf32> to vector<8x32xf32>
    %81 = arith.subf %71, %80 : vector<8x32xf32>
    %82 = arith.mulf %79, %81 : vector<8x32xf32>
    %cst_34 = arith.constant dense<0.000000e+00> : vector<8xf32>
    %83 = vector.multi_reduction <add>, %82, %cst_34 [1] : vector<8x32xf32> to vector<8xf32>
    %84 = vector.shape_cast %83 : vector<8xf32> to vector<8x1xf32>
    %cst_35 = arith.constant 3.200000e+01 : f32
    %85 = vector.broadcast %cst_35 : f32 to vector<8x1xf32>
    %86 = arith.divf %84, %85 : vector<8x1xf32>
    %87 = vector.broadcast %77 : vector<8x1xf32> to vector<8x32xf32>
    %88 = arith.subf %71, %87 : vector<8x32xf32>
    %cst_36 = arith.constant 9.99999996E-13 : f32
    %89 = vector.broadcast %cst_36 : f32 to vector<8x1xf32>
    %90 = arith.addf %86, %89 : vector<8x1xf32>
    %91 = math.rsqrt %90 : vector<8x1xf32>
    %92 = vector.broadcast %91 : vector<8x1xf32> to vector<8x32xf32>
    %93 = arith.mulf %88, %92 : vector<8x32xf32>
    %94 = vector.broadcast %72 : vector<1x32xf32> to vector<8x32xf32>
    %95 = arith.mulf %93, %94 : vector<8x32xf32>
    %96 = vector.broadcast %73 : vector<1x32xf32> to vector<8x32xf32>
    %97 = arith.addf %95, %96 : vector<8x32xf32>
    %98 = arith.truncf %97 : vector<8x32xf32> to vector<8x32xbf16>
    %c0_37 = arith.constant 0 : index
    %c0_38 = arith.constant 0 : index
    %99 = vector.load %arg11[%c0_37, %c0_38] : memref<32x64xbf16, #tpu.memory_space<vmem>>, vector<32x64xbf16>
    %cst_39 = arith.constant dense<0.000000e+00> : vector<8x64xf32>
    %100 = tpu.matmul %98, %99, %cst_39 {dimension_numbers = #tpu.dot_dimension_numbers<[1], [0], [0], [1], [0, 0, 1, 1], [], []>} : vector<8x32xbf16>, vector<32x64xbf16>, vector<8x64xf32> -> vector<8x64xf32>
    %c0_40 = arith.constant 0 : index
    %c0_41 = arith.constant 0 : index
    %101 = vector.load %arg12[%c0_40, %c0_41] : memref<1x64xf32, #tpu.memory_space<vmem>>, vector<1x64xf32>
    %102 = vector.broadcast %101 : vector<1x64xf32> to vector<8x64xf32>
    %103 = arith.addf %100, %102 : vector<8x64xf32>
    %cst_42 = arith.constant 5.000000e-01 : f32
    %104 = vector.broadcast %cst_42 : f32 to vector<8x64xf32>
    %105 = arith.mulf %104, %103 : vector<8x64xf32>
    %cst_43 = arith.constant 0.707106769 : f32
    %106 = vector.broadcast %cst_43 : f32 to vector<8x64xf32>
    %107 = arith.mulf %103, %106 : vector<8x64xf32>
    %108 = math.erf %107 : vector<8x64xf32>
    %cst_44 = arith.constant 1.000000e+00 : f32
    %109 = vector.broadcast %cst_44 : f32 to vector<8x64xf32>
    %110 = arith.addf %109, %108 : vector<8x64xf32>
    %111 = arith.mulf %105, %110 : vector<8x64xf32>
    %112 = arith.truncf %111 : vector<8x64xf32> to vector<8x64xbf16>
    %c0_45 = arith.constant 0 : index
    %c0_46 = arith.constant 0 : index
    %113 = vector.load %arg13[%c0_45, %c0_46] : memref<64x32xbf16, #tpu.memory_space<vmem>>, vector<64x32xbf16>
    %cst_47 = arith.constant dense<0.000000e+00> : vector<8x32xf32>
    %114 = tpu.matmul %112, %113, %cst_47 {dimension_numbers = #tpu.dot_dimension_numbers<[1], [0], [0], [1], [0, 0, 1, 1], [], []>} : vector<8x64xbf16>, vector<64x32xbf16>, vector<8x32xf32> -> vector<8x32xf32>
    %c0_48 = arith.constant 0 : index
    %c0_49 = arith.constant 0 : index
    %115 = vector.load %arg14[%c0_48, %c0_49] : memref<1x32xf32, #tpu.memory_space<vmem>>, vector<1x32xf32>
    %116 = vector.broadcast %115 : vector<1x32xf32> to vector<8x32xf32>
    %117 = arith.addf %114, %116 : vector<8x32xf32>
    %118 = arith.addf %97, %117 : vector<8x32xf32>
    %c0_50 = arith.constant 0 : index
    %c0_51 = arith.constant 0 : index
    %119 = vector.load %arg15[%c0_50, %c0_51] : memref<1x32xf32, #tpu.memory_space<vmem>>, vector<1x32xf32>
    %c0_52 = arith.constant 0 : index
    %c0_53 = arith.constant 0 : index
    %120 = vector.load %arg16[%c0_52, %c0_53] : memref<1x32xf32, #tpu.memory_space<vmem>>, vector<1x32xf32>
    %cst_54 = arith.constant dense<0.000000e+00> : vector<8xf32>
    %121 = vector.multi_reduction <add>, %118, %cst_54 [1] : vector<8x32xf32> to vector<8xf32>
    %122 = vector.shape_cast %121 : vector<8xf32> to vector<8x1xf32>
    %cst_55 = arith.constant 3.200000e+01 : f32
    %123 = vector.broadcast %cst_55 : f32 to vector<8x1xf32>
    %124 = arith.divf %122, %123 : vector<8x1xf32>
    %125 = vector.broadcast %124 : vector<8x1xf32> to vector<8x32xf32>
    %126 = arith.subf %118, %125 : vector<8x32xf32>
    %127 = vector.broadcast %124 : vector<8x1xf32> to vector<8x32xf32>
    %128 = arith.subf %118, %127 : vector<8x32xf32>
    %129 = arith.mulf %126, %128 : vector<8x32xf32>
    %cst_56 = arith.constant dense<0.000000e+00> : vector<8xf32>
    %130 = vector.multi_reduction <add>, %129, %cst_56 [1] : vector<8x32xf32> to vector<8xf32>
    %131 = vector.shape_cast %130 : vector<8xf32> to vector<8x1xf32>
    %cst_57 = arith.constant 3.200000e+01 : f32
    %132 = vector.broadcast %cst_57 : f32 to vector<8x1xf32>
    %133 = arith.divf %131, %132 : vector<8x1xf32>
    %134 = vector.broadcast %124 : vector<8x1xf32> to vector<8x32xf32>
    %135 = arith.subf %118, %134 : vector<8x32xf32>
    %cst_58 = arith.constant 9.99999996E-13 : f32
    %136 = vector.broadcast %cst_58 : f32 to vector<8x1xf32>
    %137 = arith.addf %133, %136 : vector<8x1xf32>
    %138 = math.rsqrt %137 : vector<8x1xf32>
    %139 = vector.broadcast %138 : vector<8x1xf32> to vector<8x32xf32>
    %140 = arith.mulf %135, %139 : vector<8x32xf32>
    %141 = vector.broadcast %119 : vector<1x32xf32> to vector<8x32xf32>
    %142 = arith.mulf %140, %141 : vector<8x32xf32>
    %143 = vector.broadcast %120 : vector<1x32xf32> to vector<8x32xf32>
    %144 = arith.addf %142, %143 : vector<8x32xf32>
    %145 = arith.truncf %144 : vector<8x32xf32> to vector<8x32xbf16>
    %c0_59 = arith.constant 0 : index
    %c0_60 = arith.constant 0 : index
    %c0_61 = arith.constant 0 : index
    %146 = vector.load %arg17[%c0_59, %c0_60, %c0_61] : memref<1x8x32xbf16, #tpu.memory_space<vmem>>, vector<1x8x32xbf16>
    %147 = vector.shape_cast %146 : vector<1x8x32xbf16> to vector<8x32xbf16>
    %148 = vector.shape_cast %145 : vector<8x32xbf16> to vector<1x8x32xbf16>
    tpu.vector_store %arg17[%c0_59, %c0_60, %c0_61], %148 {strides = array<i32>} : memref<1x8x32xbf16, #tpu.memory_space<vmem>>, vector<1x8x32xbf16>,
    return
  }
  func.func @transform_0(%arg0: i32) -> (i32, i32, i32) {
    %c0_i32 = arith.constant 0 : i32
    %c0_i32_0 = arith.constant 0 : i32
    %c0_i32_1 = arith.constant 0 : i32
    return %arg0, %c0_i32, %c0_i32_0 : i32, i32, i32
  }
  func.func @transform_1(%arg0: i32) -> (i32, i32, i32) {
    %c0_i32 = arith.constant 0 : i32
    %c0_i32_0 = arith.constant 0 : i32
    %c0_i32_1 = arith.constant 0 : i32
    return %arg0, %c0_i32, %c0_i32_0 : i32, i32, i32
  }
  func.func @transform_2(%arg0: i32) -> (i32, i32) {
    %c0_i32 = arith.constant 0 : i32
    %c0_i32_0 = arith.constant 0 : i32
    %c0_i32_1 = arith.constant 0 : i32
    return %c0_i32, %c0_i32_0 : i32, i32
  }
  func.func @transform_3(%arg0: i32) -> (i32, i32) {
    %c0_i32 = arith.constant 0 : i32
    %c0_i32_0 = arith.constant 0 : i32
    %c0_i32_1 = arith.constant 0 : i32
    return %c0_i32, %c0_i32_0 : i32, i32
  }
  func.func @transform_4(%arg0: i32) -> (i32, i32) {
    %c0_i32 = arith.constant 0 : i32
    %c0_i32_0 = arith.constant 0 : i32
    %c0_i32_1 = arith.constant 0 : i32
    return %c0_i32, %c0_i32_0 : i32, i32
  }
  func.func @transform_5(%arg0: i32) -> (i32, i32) {
    %c0_i32 = arith.constant 0 : i32
    %c0_i32_0 = arith.constant 0 : i32
    %c0_i32_1 = arith.constant 0 : i32
    return %c0_i32, %c0_i32_0 : i32, i32
  }
  func.func @transform_6(%arg0: i32) -> (i32, i32) {
    %c0_i32 = arith.constant 0 : i32
    %c0_i32_0 = arith.constant 0 : i32
    %c0_i32_1 = arith.constant 0 : i32
    return %c0_i32, %c0_i32_0 : i32, i32
  }
  func.func @transform_7(%arg0: i32) -> (i32, i32) {
    %c0_i32 = arith.constant 0 : i32
    %c0_i32_0 = arith.constant 0 : i32
    %c0_i32_1 = arith.constant 0 : i32
    return %c0_i32, %c0_i32_0 : i32, i32
  }
  func.func @transform_8(%arg0: i32) -> (i32, i32) {
    %c0_i32 = arith.constant 0 : i32
    %c0_i32_0 = arith.constant 0 : i32
    %c0_i32_1 = arith.constant 0 : i32
    return %c0_i32, %c0_i32_0 : i32, i32
  }
  func.func @transform_9(%arg0: i32) -> (i32, i32) {
    %c0_i32 = arith.constant 0 : i32
    %c0_i32_0 = arith.constant 0 : i32
    %c0_i32_1 = arith.constant 0 : i32
    return %c0_i32, %c0_i32_0 : i32, i32
  }
  func.func @transform_10(%arg0: i32) -> (i32, i32) {
    %c0_i32 = arith.constant 0 : i32
    %c0_i32_0 = arith.constant 0 : i32
    %c0_i32_1 = arith.constant 0 : i32
    return %c0_i32, %c0_i32_0 : i32, i32
  }
  func.func @transform_11(%arg0: i32) -> (i32, i32) {
    %c0_i32 = arith.constant 0 : i32
    %c0_i32_0 = arith.constant 0 : i32
    %c0_i32_1 = arith.constant 0 : i32
    return %c0_i32, %c0_i32_0 : i32, i32
  }
  func.func @transform_12(%arg0: i32) -> (i32, i32) {
    %c0_i32 = arith.constant 0 : i32
    %c0_i32_0 = arith.constant 0 : i32
    %c0_i32_1 = arith.constant 0 : i32
    return %c0_i32, %c0_i32_0 : i32, i32
  }
  func.func @transform_13(%arg0: i32) -> (i32, i32) {
    %c0_i32 = arith.constant 0 : i32
    %c0_i32_0 = arith.constant 0 : i32
    %c0_i32_1 = arith.constant 0 : i32
    return %c0_i32, %c0_i32_0 : i32, i32
  }
  func.func @transform_14(%arg0: i32) -> (i32, i32) {
    %c0_i32 = arith.constant 0 : i32
    %c0_i32_0 = arith.constant 0 : i32
    %c0_i32_1 = arith.constant 0 : i32
    return %c0_i32, %c0_i32_0 : i32, i32
  }
  func.func @transform_15(%arg0: i32) -> (i32, i32) {
    %c0_i32 = arith.constant 0 : i32
    %c0_i32_0 = arith.constant 0 : i32
    %c0_i32_1 = arith.constant 0 : i32
    return %c0_i32, %c0_i32_0 : i32, i32
  }
  func.func @transform_16(%arg0: i32) -> (i32, i32, i32) {
    %c0_i32 = arith.constant 0 : i32
    %c0_i32_0 = arith.constant 0 : i32
    %c0_i32_1 = arith.constant 0 : i32
    return %arg0, %c0_i32, %c0_i32_0 : i32, i32, i32
  }
}

</mosaic_0001>

<llo_original>
// kernel: tpu_custom_call.1
$region0: #{tpu_custom_call.1}
  #allocation0 [shape = 'u32[]', space=smem, size = 0x4, offset = 0x4, fixed_abs, tag = 'smem constant byte address 0x4 - core index']
  #allocation1 [shape = 'u32[144,128]{1,0:T(1,128)}', space=vmem, size = 0x12000, scoped, tag = 'internal scratch']
  %s0 = inlined_call_operand.vmem [shape: f32[2,8,32], index: 0, kind: input, shape index: {}]
  %s1 = inlined_call_operand.vmem [shape: f32[2,1,8], index: 1, kind: input, shape index: {}]
  %s2 = inlined_call_operand.hbm [shape: f32[1,32], index: 2, kind: input, shape index: {}]
  %s3 = inlined_call_operand.hbm [shape: f32[1,32], index: 3, kind: input, shape index: {}]
  %s4 = inlined_call_operand.vmem [shape: bf16[32,96], index: 4, kind: input, shape index: {}]
  %s5 = inlined_call_operand.hbm [shape: f32[1,96], index: 5, kind: input, shape index: {}]
  %s6 = inlined_call_operand.vmem [shape: bf16[32,32], index: 6, kind: input, shape index: {}]
  %s7 = inlined_call_operand.hbm [shape: f32[1,32], index: 7, kind: input, shape index: {}]
  %s8 = inlined_call_operand.hbm [shape: f32[1,32], index: 8, kind: input, shape index: {}]
  %s9 = inlined_call_operand.hbm [shape: f32[1,32], index: 9, kind: input, shape index: {}]
  %s10 = inlined_call_operand.vmem [shape: bf16[32,64], index: 10, kind: input, shape index: {}]
  %s11 = inlined_call_operand.vmem [shape: f32[1,64], index: 11, kind: input, shape index: {}]
  %s12 = inlined_call_operand.vmem [shape: bf16[64,32], index: 12, kind: input, shape index: {}]
  %s13 = inlined_call_operand.vmem [shape: f32[1,32], index: 13, kind: input, shape index: {}]
  %s14 = inlined_call_operand.vmem [shape: f32[1,32], index: 14, kind: input, shape index: {}]
  %s15 = inlined_call_operand.vmem [shape: f32[1,32], index: 15, kind: input, shape index: {}]
  %s16 = inlined_call_operand.hbm [shape: bf16[2,8,32], index: 16, kind: output, shape index: {}]
  %s17 = sld [smem:[#allocation0]]
  $region121: #{tpu_custom_call.1} parent=0
    _
  %s19 = ssub.s32 1, %s17
  %s20 = scalar_select 0, %s19, %s17
  $region1: #{tpu_custom_call.1} parent=0
    #allocation2 [shape = 'u8[512]{0}', space=vmem, size = 0x400, scoped, tag = 'input window, operand 2, single buffered']
    #allocation3 [shape = 's32[2]{0}', space=sflag, size = 0x8, scoped, tag = 'scoped memory for tpu_custom_call.1']
    #allocation4 [shape = 's32[2]{0}', space=sflag, size = 0x8, scoped, tag = 'scoped memory for tpu_custom_call.1']
    #allocation5 [shape = 'u8[512]{0}', space=vmem, size = 0x400, scoped, tag = 'input window, operand 3, single buffered']
    #allocation6 [shape = 's32[1]{0}', space=sflag, size = 0x4, scoped, tag = 'scoped memory for tpu_custom_call.1']
    #allocation7 [shape = 'u8[512]{0}', space=vmem, size = 0x400, scoped, tag = 'input window, operand 5, single buffered']
    #allocation8 [shape = 'u8[512]{0}', space=vmem, size = 0x400, scoped, tag = 'input window, operand 7, single buffered']
    #allocation9 [shape = 's32[1]{0}', space=sflag, size = 0x4, scoped, tag = 'scoped memory for tpu_custom_call.1']
    #allocation10 [shape = 'u8[512]{0}', space=vmem, size = 0x400, scoped, tag = 'input window, operand 8, single buffered']
    #allocation11 [shape = 'u8[512]{0}', space=vmem, size = 0x400, scoped, tag = 'input window, operand 9, single buffered']
    #allocation12 [shape = 's32[1]{0}', space=sflag, size = 0x4, scoped, tag = 'scoped memory for tpu_custom_call.1']
    #allocation13 [shape = 'u8[4096]{0}', space=vmem, size = 0x1000, scoped, tag = 'output window, operand 0']
    %21 = vsyncpa [#allocation3], 0
    %22 = vsyncpa [#allocation6], 0
    %23 = vsyncpa [#allocation9], 0
    %24 = vsyncpa [#allocation12], 0
    %25 = vsyncpa [#allocation4], 0
    %s26 = scalar_lea.sflag [#allocation4], 1
    %27 = vsyncpa %s26, 0
    loop: start=0, step=1, limit=4
    $region2: #{tpu_custom_call.1} parent=1 // loop_pre_header
      _
    $region3: #{tpu_custom_call.1} parent=1 // loop_header
      %s29 = sphi 0, %s33
      %p30 = scmp.ge.s32.totalorder %s29, 4
      %s39 = sphi 0, %s41
      %s42 = sphi 0, %s39
      %s43 = sphi 0, %s42
      %s59 = sphi 0, %s43
      %s65 = sphi 0, %s67
      %s68 = sphi 0, %s65
      %s69 = sphi 0, %s68
      %s85 = sphi 0, %s69
      %s89 = sphi 0, %s89
      %s91 = sphi 0, %s89
      %s92 = sphi 0, %s91
      %s106 = sphi 0, %s92
      %s110 = sphi 0, %s110
      %s112 = sphi 0, %s110
      %s113 = sphi 0, %s112
      %s127 = sphi 0, %s113
      %s131 = sphi 0, %s131
      %s133 = sphi 0, %s131
      %s134 = sphi 0, %s133
      %s148 = sphi 0, %s134
      %s152 = sphi 0, %s152
      %s154 = sphi 0, %s152
      %s155 = sphi 0, %s154
      %s169 = sphi 0, %s155
      %s173 = sphi 0, %s173
      %s175 = sphi 0, %s173
      %s176 = sphi 0, %s175
      %s190 = sphi 0, %s176
      %s194 = sphi 0, %s194
      %s196 = sphi 0, %s194
      %s197 = sphi 0, %s196
      %s211 = sphi 0, %s197
      %s215 = sphi 0, %s215
      %s217 = sphi 0, %s215
      %s218 = sphi 0, %s217
      %s232 = sphi 0, %s218
      %s236 = sphi 0, %s236
      %s238 = sphi 0, %s236
      %s239 = sphi 0, %s238
      %s253 = sphi 0, %s239
      %s257 = sphi 0, %s257
      %s259 = sphi 0, %s257
      %s260 = sphi 0, %s259
      %s274 = sphi 0, %s260
      %s278 = sphi 0, %s278
      %s280 = sphi 0, %s278
      %s281 = sphi 0, %s280
      %s295 = sphi 0, %s281
      %s299 = sphi 0, %s299
      %s301 = sphi 0, %s299
      %s302 = sphi 0, %s301
      %s316 = sphi 0, %s302
      %s320 = sphi 0, %s320
      %s322 = sphi 0, %s320
      %s323 = sphi 0, %s322
      %s337 = sphi 0, %s323
      %s341 = sphi 0, %s341
      %s343 = sphi 0, %s341
      %s344 = sphi 0, %s343
      %s358 = sphi 0, %s344
      %s362 = sphi 0, %s362
      %s364 = sphi 0, %s362
      %s365 = sphi 0, %s364
      %s379 = sphi 0, %s365
      %s385 = sphi 0, %s387
      %s388 = sphi 0, %s385
      %s389 = sphi 0, %s388
      %s405 = sphi 0, %s389
    $region4: #{tpu_custom_call.1} parent=1 // loop_header_branch
      %32 = sbr.rel (%p30) target = $region8
    $region5: #{tpu_custom_call.1} parent=1 // loop_body
      %s34 = ssub.s32 %s29, 1
      %s35 = ssub.s32 %s29, 2
      %s36 = sadd.s32 %s29, 1
      %s37 = ssub.s32 %s29, %s36
      %p38 = scmp.eq.s32.totalorder %s37, 0
      %s40 = sadd.s32 %s39, 1
      %s41 = scalar_select %p38, %s39, %s40
      %p44 = pneg %p38
      %p45 = scmp.eq.s32.totalorder %s29, 1
      %p46 = por %p44, %p45
      %p47 = scmp.ne.s32.totalorder %s39, %s42
      %p48 = scmp.eq.s32.totalorder %s29, 0
      %p49 = por %p47, %p48
      %p50 = scmp.ne.s32.totalorder %s39, %s42
      %p51 = scmp.eq.s32.totalorder %s34, 1
      %p52 = por %p50, %p51
      %p53 = scmp.ne.s32.totalorder %s42, %s43
      %p54 = scmp.eq.s32.totalorder %s34, 0
      %p55 = por %p53, %p54
      %p56 = scmp.ne.s32.totalorder %s42, %s43
      %p57 = scmp.eq.s32.totalorder %s35, 1
      %p58 = por %p56, %p57
      %p60 = scmp.ne.s32.totalorder %s43, %s59
      %p61 = scmp.eq.s32.totalorder %s35, 0
      %p62 = por %p60, %p61
      %s63 = ssub.s32 %s29, %s36
      %p64 = scmp.eq.s32.totalorder %s63, 0
      %s66 = sadd.s32 %s65, 1
      %s67 = scalar_select %p64, %s65, %s66
      %p70 = pneg %p64
      %p71 = scmp.eq.s32.totalorder %s29, 1
      %p72 = por %p70, %p71
      %p73 = scmp.ne.s32.totalorder %s65, %s68
      %p74 = scmp.eq.s32.totalorder %s29, 0
      %p75 = por %p73, %p74
      %p76 = scmp.ne.s32.totalorder %s65, %s68
      %p77 = scmp.eq.s32.totalorder %s34, 1
      %p78 = por %p76, %p77
      %p79 = scmp.ne.s32.totalorder %s68, %s69
      %p80 = scmp.eq.s32.totalorder %s34, 0
      %p81 = por %p79, %p80
      %p82 = scmp.ne.s32.totalorder %s68, %s69
      %p83 = scmp.eq.s32.totalorder %s35, 1
      %p84 = por %p82, %p83
      %p86 = scmp.ne.s32.totalorder %s69, %s85
      %p87 = scmp.eq.s32.totalorder %s35, 0
      %p88 = por %p86, %p87
      %s90 = sadd.s32 %s89, 1
      %p93 = scmp.eq.s32.totalorder %s29, 1
      %p94 = scmp.ne.s32.totalorder %s89, %s91
      %p95 = scmp.eq.s32.totalorder %s29, 0
      %p96 = por %p94, %p95
      %p97 = scmp.ne.s32.totalorder %s89, %s91
      %p98 = scmp.eq.s32.totalorder %s34, 1
      %p99 = por %p97, %p98
      %p100 = scmp.ne.s32.totalorder %s91, %s92
      %p101 = scmp.eq.s32.totalorder %s34, 0
      %p102 = por %p100, %p101
      %p103 = scmp.ne.s32.totalorder %s91, %s92
      %p104 = scmp.eq.s32.totalorder %s35, 1
      %p105 = por %p103, %p104
      %p107 = scmp.ne.s32.totalorder %s92, %s106
      %p108 = scmp.eq.s32.totalorder %s35, 0
      %p109 = por %p107, %p108
      %s111 = sadd.s32 %s110, 1
      %p114 = scmp.eq.s32.totalorder %s29, 1
      %p115 = scmp.ne.s32.totalorder %s110, %s112
      %p116 = scmp.eq.s32.totalorder %s29, 0
      %p117 = por %p115, %p116
      %p118 = scmp.ne.s32.totalorder %s110, %s112
      %p119 = scmp.eq.s32.totalorder %s34, 1
      %p120 = por %p118, %p119
      %p121 = scmp.ne.s32.totalorder %s112, %s113
      %p122 = scmp.eq.s32.totalorder %s34, 0
      %p123 = por %p121, %p122
      %p124 = scmp.ne.s32.totalorder %s112, %s113
      %p125 = scmp.eq.s32.totalorder %s35, 1
      %p126 = por %p124, %p125
      %p128 = scmp.ne.s32.totalorder %s113, %s127
      %p129 = scmp.eq.s32.totalorder %s35, 0
      %p130 = por %p128, %p129
      %s132 = sadd.s32 %s131, 1
      %p135 = scmp.eq.s32.totalorder %s29, 1
      %p136 = scmp.ne.s32.totalorder %s131, %s133
      %p137 = scmp.eq.s32.totalorder %s29, 0
      %p138 = por %p136, %p137
      %p139 = scmp.ne.s32.totalorder %s131, %s133
      %p140 = scmp.eq.s32.totalorder %s34, 1
      %p141 = por %p139, %p140
      %p142 = scmp.ne.s32.totalorder %s133, %s134
      %p143 = scmp.eq.s32.totalorder %s34, 0
      %p144 = por %p142, %p143
      %p145 = scmp.ne.s32.totalorder %s133, %s134
      %p146 = scmp.eq.s32.totalorder %s35, 1
      %p147 = por %p145, %p146
      %p149 = scmp.ne.s32.totalorder %s134, %s148
      %p150 = scmp.eq.s32.totalorder %s35, 0
      %p151 = por %p149, %p150
      %s153 = sadd.s32 %s152, 1
      %p156 = scmp.eq.s32.totalorder %s29, 1
      %p157 = scmp.ne.s32.totalorder %s152, %s154
      %p158 = scmp.eq.s32.totalorder %s29, 0
      %p159 = por %p157, %p158
      %p160 = scmp.ne.s32.totalorder %s152, %s154
      %p161 = scmp.eq.s32.totalorder %s34, 1
      %p162 = por %p160, %p161
      %p163 = scmp.ne.s32.totalorder %s154, %s155
      %p164 = scmp.eq.s32.totalorder %s34, 0
      %p165 = por %p163, %p164
      %p166 = scmp.ne.s32.totalorder %s154, %s155
      %p167 = scmp.eq.s32.totalorder %s35, 1
      %p168 = por %p166, %p167
      %p170 = scmp.ne.s32.totalorder %s155, %s169
      %p171 = scmp.eq.s32.totalorder %s35, 0
      %p172 = por %p170, %p171
      %s174 = sadd.s32 %s173, 1
      %p177 = scmp.eq.s32.totalorder %s29, 1
      %p178 = scmp.ne.s32.totalorder %s173, %s175
      %p179 = scmp.eq.s32.totalorder %s29, 0
      %p180 = por %p178, %p179
      %p181 = scmp.ne.s32.totalorder %s173, %s175
      %p182 = scmp.eq.s32.totalorder %s34, 1
      %p183 = por %p181, %p182
      %p184 = scmp.ne.s32.totalorder %s175, %s176
      %p185 = scmp.eq.s32.totalorder %s34, 0
      %p186 = por %p184, %p185
      %p187 = scmp.ne.s32.totalorder %s175, %s176
      %p188 = scmp.eq.s32.totalorder %s35, 1
      %p189 = por %p187, %p188
      %p191 = scmp.ne.s32.totalorder %s176, %s190
      %p192 = scmp.eq.s32.totalorder %s35, 0
      %p193 = por %p191, %p192
      %s195 = sadd.s32 %s194, 1
      %p198 = scmp.eq.s32.totalorder %s29, 1
      %p199 = scmp.ne.s32.totalorder %s194, %s196
      %p200 = scmp.eq.s32.totalorder %s29, 0
      %p201 = por %p199, %p200
      %p202 = scmp.ne.s32.totalorder %s194, %s196
      %p203 = scmp.eq.s32.totalorder %s34, 1
      %p204 = por %p202, %p203
      %p205 = scmp.ne.s32.totalorder %s196, %s197
      %p206 = scmp.eq.s32.totalorder %s34, 0
      %p207 = por %p205, %p206
      %p208 = scmp.ne.s32.totalorder %s196, %s197
      %p209 = scmp.eq.s32.totalorder %s35, 1
      %p210 = por %p208, %p209
      %p212 = scmp.ne.s32.totalorder %s197, %s211
      %p213 = scmp.eq.s32.totalorder %s35, 0
      %p214 = por %p212, %p213
      %s216 = sadd.s32 %s215, 1
      %p219 = scmp.eq.s32.totalorder %s29, 1
      %p220 = scmp.ne.s32.totalorder %s215, %s217
      %p221 = scmp.eq.s32.totalorder %s29, 0
      %p222 = por %p220, %p221
      %p223 = scmp.ne.s32.totalorder %s215, %s217
      %p224 = scmp.eq.s32.totalorder %s34, 1
      %p225 = por %p223, %p224
      %p226 = scmp.ne.s32.totalorder %s217, %s218
      %p227 = scmp.eq.s32.totalorder %s34, 0
      %p228 = por %p226, %p227
      %p229 = scmp.ne.s32.totalorder %s217, %s218
      %p230 = scmp.eq.s32.totalorder %s35, 1
      %p231 = por %p229, %p230
      %p233 = scmp.ne.s32.totalorder %s218, %s232
      %p234 = scmp.eq.s32.totalorder %s35, 0
      %p235 = por %p233, %p234
      %s237 = sadd.s32 %s236, 1
      %p240 = scmp.eq.s32.totalorder %s29, 1
      %p241 = scmp.ne.s32.totalorder %s236, %s238
      %p242 = scmp.eq.s32.totalorder %s29, 0
      %p243 = por %p241, %p242
      %p244 = scmp.ne.s32.totalorder %s236, %s238
      %p245 = scmp.eq.s32.totalorder %s34, 1
      %p246 = por %p244, %p245
      %p247 = scmp.ne.s32.totalorder %s238, %s239
      %p248 = scmp.eq.s32.totalorder %s34, 0
      %p249 = por %p247, %p248
      %p250 = scmp.ne.s32.totalorder %s238, %s239
      %p251 = scmp.eq.s32.totalorder %s35, 1
      %p252 = por %p250, %p251
      %p254 = scmp.ne.s32.totalorder %s239, %s253
      %p255 = scmp.eq.s32.totalorder %s35, 0
      %p256 = por %p254, %p255
      %s258 = sadd.s32 %s257, 1
      %p261 = scmp.eq.s32.totalorder %s29, 1
      %p262 = scmp.ne.s32.totalorder %s257, %s259
      %p263 = scmp.eq.s32.totalorder %s29, 0
      %p264 = por %p262, %p263
      %p265 = scmp.ne.s32.totalorder %s257, %s259
      %p266 = scmp.eq.s32.totalorder %s34, 1
      %p267 = por %p265, %p266
      %p268 = scmp.ne.s32.totalorder %s259, %s260
      %p269 = scmp.eq.s32.totalorder %s34, 0
      %p270 = por %p268, %p269
      %p271 = scmp.ne.s32.totalorder %s259, %s260
      %p272 = scmp.eq.s32.totalorder %s35, 1
      %p273 = por %p271, %p272
      %p275 = scmp.ne.s32.totalorder %s260, %s274
      %p276 = scmp.eq.s32.totalorder %s35, 0
      %p277 = por %p275, %p276
      %s279 = sadd.s32 %s278, 1
      %p282 = scmp.eq.s32.totalorder %s29, 1
      %p283 = scmp.ne.s32.totalorder %s278, %s280
      %p284 = scmp.eq.s32.totalorder %s29, 0
      %p285 = por %p283, %p284
      %p286 = scmp.ne.s32.totalorder %s278, %s280
      %p287 = scmp.eq.s32.totalorder %s34, 1
      %p288 = por %p286, %p287
      %p289 = scmp.ne.s32.totalorder %s280, %s281
      %p290 = scmp.eq.s32.totalorder %s34, 0
      %p291 = por %p289, %p290
      %p292 = scmp.ne.s32.totalorder %s280, %s281
      %p293 = scmp.eq.s32.totalorder %s35, 1
      %p294 = por %p292, %p293
      %p296 = scmp.ne.s32.totalorder %s281, %s295
      %p297 = scmp.eq.s32.totalorder %s35, 0
      %p298 = por %p296, %p297
      %s300 = sadd.s32 %s299, 1
      %p303 = scmp.eq.s32.totalorder %s29, 1
      %p304 = scmp.ne.s32.totalorder %s299, %s301
      %p305 = scmp.eq.s32.totalorder %s29, 0
      %p306 = por %p304, %p305
      %p307 = scmp.ne.s32.totalorder %s299, %s301
      %p308 = scmp.eq.s32.totalorder %s34, 1
      %p309 = por %p307, %p308
      %p310 = scmp.ne.s32.totalorder %s301, %s302
      %p311 = scmp.eq.s32.totalorder %s34, 0
      %p312 = por %p310, %p311
      %p313 = scmp.ne.s32.totalorder %s301, %s302
      %p314 = scmp.eq.s32.totalorder %s35, 1
      %p315 = por %p313, %p314
      %p317 = scmp.ne.s32.totalorder %s302, %s316
      %p318 = scmp.eq.s32.totalorder %s35, 0
      %p319 = por %p317, %p318
      %s321 = sadd.s32 %s320, 1
      %p324 = scmp.eq.s32.totalorder %s29, 1
      %p325 = scmp.ne.s32.totalorder %s320, %s322
      %p326 = scmp.eq.s32.totalorder %s29, 0
      %p327 = por %p325, %p326
      %p328 = scmp.ne.s32.totalorder %s320, %s322
      %p329 = scmp.eq.s32.totalorder %s34, 1
      %p330 = por %p328, %p329
      %p331 = scmp.ne.s32.totalorder %s322, %s323
      %p332 = scmp.eq.s32.totalorder %s34, 0
      %p333 = por %p331, %p332
      %p334 = scmp.ne.s32.totalorder %s322, %s323
      %p335 = scmp.eq.s32.totalorder %s35, 1
      %p336 = por %p334, %p335
      %p338 = scmp.ne.s32.totalorder %s323, %s337
      %p339 = scmp.eq.s32.totalorder %s35, 0
      %p340 = por %p338, %p339
      %s342 = sadd.s32 %s341, 1
      %p345 = scmp.eq.s32.totalorder %s29, 1
      %p346 = scmp.ne.s32.totalorder %s341, %s343
      %p347 = scmp.eq.s32.totalorder %s29, 0
      %p348 = por %p346, %p347
      %p349 = scmp.ne.s32.totalorder %s341, %s343
      %p350 = scmp.eq.s32.totalorder %s34, 1
      %p351 = por %p349, %p350
      %p352 = scmp.ne.s32.totalorder %s343, %s344
      %p353 = scmp.eq.s32.totalorder %s34, 0
      %p354 = por %p352, %p353
      %p355 = scmp.ne.s32.totalorder %s343, %s344
      %p356 = scmp.eq.s32.totalorder %s35, 1
      %p357 = por %p355, %p356
      %p359 = scmp.ne.s32.totalorder %s344, %s358
      %p360 = scmp.eq.s32.totalorder %s35, 0
      %p361 = por %p359, %p360
      %s363 = sadd.s32 %s362, 1
      %p366 = scmp.eq.s32.totalorder %s29, 1
      %p367 = scmp.ne.s32.totalorder %s362, %s364
      %p368 = scmp.eq.s32.totalorder %s29, 0
      %p369 = por %p367, %p368
      %p370 = scmp.ne.s32.totalorder %s362, %s364
      %p371 = scmp.eq.s32.totalorder %s34, 1
      %p372 = por %p370, %p371
      %p373 = scmp.ne.s32.totalorder %s364, %s365
      %p374 = scmp.eq.s32.totalorder %s34, 0
      %p375 = por %p373, %p374
      %p376 = scmp.ne.s32.totalorder %s364, %s365
      %p377 = scmp.eq.s32.totalorder %s35, 1
      %p378 = por %p376, %p377
      %p380 = scmp.ne.s32.totalorder %s365, %s379
      %p381 = scmp.eq.s32.totalorder %s35, 0
      %p382 = por %p380, %p381
      %s383 = ssub.s32 %s29, %s36
      %p384 = scmp.eq.s32.totalorder %s383, 0
      %s386 = sadd.s32 %s385, 1
      %s387 = scalar_select %p384, %s385, %s386
      %p390 = pneg %p384
      %p391 = scmp.eq.s32.totalorder %s29, 1
      %p392 = por %p390, %p391
      %p393 = scmp.ne.s32.totalorder %s385, %s388
      %p394 = scmp.eq.s32.totalorder %s29, 0
      %p395 = por %p393, %p394
      %p396 = scmp.ne.s32.totalorder %s385, %s388
      %p397 = scmp.eq.s32.totalorder %s34, 1
      %p398 = por %p396, %p397
      %p399 = scmp.ne.s32.totalorder %s388, %s389
      %p400 = scmp.eq.s32.totalorder %s34, 0
      %p401 = por %p399, %p400
      %p402 = scmp.ne.s32.totalorder %s388, %s389
      %p403 = scmp.eq.s32.totalorder %s35, 1
      %p404 = por %p402, %p403
      %p406 = scmp.ne.s32.totalorder %s389, %s405
      %p407 = scmp.eq.s32.totalorder %s35, 0
      %p408 = por %p406, %p407
      %p409 = scmp.le.s32.totalorder 1, %s29
      %p410 = scmp.lt.s32.totalorder %s29, 3
      %p411 = pnand %p409, %p410
      %p412 = pneg %p411
      // Predicated region
      $region9: #{tpu_custom_call.1} parent=5 // pred_check
        _
      $region10: #{tpu_custom_call.1} parent=5 // pred_check_branch
        %414 = sbr.rel (%p411) target = $region12
      $region11: #{tpu_custom_call.1} parent=5 // pred_region
        %s415 = ssub.s32 %s29, 1
        // Predicated region
        $region13: #{tpu_custom_call.1} parent=11 // pred_check
          %p416 = pneg %p102
        $region14: #{tpu_custom_call.1} parent=11 // pred_check_branch
          %418 = sbr.rel (%p416) target = $region16
        $region15: #{tpu_custom_call.1} parent=11 // pred_region
          %s420 = ssub.s32 16, 16
          %421 = vsyncadd [#allocation3], %s420
          %s423 = sshll.u32 [#allocation2], 4
          %s424 = int_to_ptr.vmem [resolvable:$true] %s423
          %426 = dma.hbm_to_vmem [thread:$0]  %s2, 16, %s424, [#allocation3]
        $region16: #{tpu_custom_call.1} parent=11 // pred_fallthru
          _
        // Predicated region
        $region17: #{tpu_custom_call.1} parent=11 // pred_check
          %p427 = pneg %p123
        $region18: #{tpu_custom_call.1} parent=11 // pred_check_branch
          %429 = sbr.rel (%p427) target = $region20
        $region19: #{tpu_custom_call.1} parent=11 // pred_region
          %s431 = ssub.s32 16, 16
          %432 = vsyncadd [#allocation6], %s431
          %s434 = sshll.u32 [#allocation5], 4
          %s435 = int_to_ptr.vmem [resolvable:$true] %s434
          %437 = dma.hbm_to_vmem [thread:$0]  %s3, 16, %s435, [#allocation6]
        $region20: #{tpu_custom_call.1} parent=11 // pred_fallthru
          _
        // Predicated region
        $region21: #{tpu_custom_call.1} parent=11 // pred_check
          %p438 = pneg %p144
        $region22: #{tpu_custom_call.1} parent=11 // pred_check_branch
          %440 = sbr.rel (%p438) target = $region24
        $region23: #{tpu_custom_call.1} parent=11 // pred_region
          _
        $region24: #{tpu_custom_call.1} parent=11 // pred_fallthru
          _
        // Predicated region
        $region25: #{tpu_custom_call.1} parent=11 // pred_check
          %p441 = pneg %p165
        $region26: #{tpu_custom_call.1} parent=11 // pred_check_branch
          %443 = sbr.rel (%p441) target = $region28
        $region27: #{tpu_custom_call.1} parent=11 // pred_region
          %s445 = ssub.s32 16, 16
          %446 = vsyncadd [#allocation6], %s445
          %s448 = sshll.u32 [#allocation7], 4
          %s449 = int_to_ptr.vmem [resolvable:$true] %s448
          %451 = dma.hbm_to_vmem [thread:$0]  %s5, 16, %s449, [#allocation6]
        $region28: #{tpu_custom_call.1} parent=11 // pred_fallthru
          _
        // Predicated region
        $region29: #{tpu_custom_call.1} parent=11 // pred_check
          %p452 = pneg %p186
        $region30: #{tpu_custom_call.1} parent=11 // pred_check_branch
          %454 = sbr.rel (%p452) target = $region32
        $region31: #{tpu_custom_call.1} parent=11 // pred_region
          _
        $region32: #{tpu_custom_call.1} parent=11 // pred_fallthru
          _
        // Predicated region
        $region33: #{tpu_custom_call.1} parent=11 // pred_check
          %p455 = pneg %p207
        $region34: #{tpu_custom_call.1} parent=11 // pred_check_branch
          %457 = sbr.rel (%p455) target = $region36
        $region35: #{tpu_custom_call.1} parent=11 // pred_region
          %s459 = ssub.s32 16, 16
          %460 = vsyncadd [#allocation9], %s459
          %s462 = sshll.u32 [#allocation8], 4
          %s463 = int_to_ptr.vmem [resolvable:$true] %s462
          %465 = dma.hbm_to_vmem [thread:$0]  %s7, 16, %s463, [#allocation9]
        $region36: #{tpu_custom_call.1} parent=11 // pred_fallthru
          _
        // Predicated region
        $region37: #{tpu_custom_call.1} parent=11 // pred_check
          %p466 = pneg %p228
        $region38: #{tpu_custom_call.1} parent=11 // pred_check_branch
          %468 = sbr.rel (%p466) target = $region40
        $region39: #{tpu_custom_call.1} parent=11 // pred_region
          %s470 = ssub.s32 16, 16
          %471 = vsyncadd [#allocation9], %s470
          %s473 = sshll.u32 [#allocation10], 4
          %s474 = int_to_ptr.vmem [resolvable:$true] %s473
          %476 = dma.hbm_to_vmem [thread:$0]  %s8, 16, %s474, [#allocation9]
        $region40: #{tpu_custom_call.1} parent=11 // pred_fallthru
          _
        // Predicated region
        $region41: #{tpu_custom_call.1} parent=11 // pred_check
          %p477 = pneg %p249
        $region42: #{tpu_custom_call.1} parent=11 // pred_check_branch
          %479 = sbr.rel (%p477) target = $region44
        $region43: #{tpu_custom_call.1} parent=11 // pred_region
          %s481 = ssub.s32 16, 16
          %482 = vsyncadd [#allocation12], %s481
          %s484 = sshll.u32 [#allocation11], 4
          %s485 = int_to_ptr.vmem [resolvable:$true] %s484
          %487 = dma.hbm_to_vmem [thread:$0]  %s9, 16, %s485, [#allocation12]
        $region44: #{tpu_custom_call.1} parent=11 // pred_fallthru
          _
        // Predicated region
        $region45: #{tpu_custom_call.1} parent=11 // pred_check
          %p488 = pneg %p270
        $region46: #{tpu_custom_call.1} parent=11 // pred_check_branch
          %490 = sbr.rel (%p488) target = $region48
        $region47: #{tpu_custom_call.1} parent=11 // pred_region
          _
        $region48: #{tpu_custom_call.1} parent=11 // pred_fallthru
          _
        // Predicated region
        $region49: #{tpu_custom_call.1} parent=11 // pred_check
          %p491 = pneg %p291
        $region50: #{tpu_custom_call.1} parent=11 // pred_check_branch
          %493 = sbr.rel (%p491) target = $region52
        $region51: #{tpu_custom_call.1} parent=11 // pred_region
          _
        $region52: #{tpu_custom_call.1} parent=11 // pred_fallthru
          _
        // Predicated region
        $region53: #{tpu_custom_call.1} parent=11 // pred_check
          %p494 = pneg %p312
        $region54: #{tpu_custom_call.1} parent=11 // pred_check_branch
          %496 = sbr.rel (%p494) target = $region56
        $region55: #{tpu_custom_call.1} parent=11 // pred_region
          _
        $region56: #{tpu_custom_call.1} parent=11 // pred_fallthru
          _
        // Predicated region
        $region57: #{tpu_custom_call.1} parent=11 // pred_check
          %p497 = pneg %p333
        $region58: #{tpu_custom_call.1} parent=11 // pred_check_branch
          %499 = sbr.rel (%p497) target = $region60
        $region59: #{tpu_custom_call.1} parent=11 // pred_region
          _
        $region60: #{tpu_custom_call.1} parent=11 // pred_fallthru
          _
        // Predicated region
        $region61: #{tpu_custom_call.1} parent=11 // pred_check
          %p500 = pneg %p354
        $region62: #{tpu_custom_call.1} parent=11 // pred_check_branch
          %502 = sbr.rel (%p500) target = $region64
        $region63: #{tpu_custom_call.1} parent=11 // pred_region
          _
        $region64: #{tpu_custom_call.1} parent=11 // pred_fallthru
          _
        // Predicated region
        $region65: #{tpu_custom_call.1} parent=11 // pred_check
          %p503 = pneg %p375
        $region66: #{tpu_custom_call.1} parent=11 // pred_check_branch
          %505 = sbr.rel (%p503) target = $region68
        $region67: #{tpu_custom_call.1} parent=11 // pred_region
          _
        $region68: #{tpu_custom_call.1} parent=11 // pred_fallthru
          _
      $region12: #{tpu_custom_call.1} parent=5 // pred_fallthru
        _
      %p506 = scmp.lt.s32.totalorder %s29, 2
      // Predicated region
      $region69: #{tpu_custom_call.1} parent=5 // pred_check
        %p507 = pneg %p506
      $region70: #{tpu_custom_call.1} parent=5 // pred_check_branch
        %509 = sbr.rel (%p507) target = $region72
      $region71: #{tpu_custom_call.1} parent=5 // pred_region
        // Predicated region
        $region73: #{tpu_custom_call.1} parent=71 // pred_check
          %p510 = pneg %p49
        $region74: #{tpu_custom_call.1} parent=71 // pred_check_branch
          %512 = sbr.rel (%p510) target = $region76
        $region75: #{tpu_custom_call.1} parent=71 // pred_region
          %p513 = scmp.lt.s32.totalorder %s29, 1
          %s514 = scalar_select %p513, %s29, 1
          %s515 = smul.addr %s514, 8
          %s516 = scalar_lea.vmem %s0, %s515
        $region76: #{tpu_custom_call.1} parent=71 // pred_fallthru
          _
        // Predicated region
        $region77: #{tpu_custom_call.1} parent=71 // pred_check
          %p517 = pneg %p75
        $region78: #{tpu_custom_call.1} parent=71 // pred_check_branch
          %519 = sbr.rel (%p517) target = $region80
        $region79: #{tpu_custom_call.1} parent=71 // pred_region
          %p520 = scmp.lt.s32.totalorder %s29, 1
          %s521 = scalar_select %p520, %s29, 1
          %s522 = scalar_lea.vmem %s1, %s521
        $region80: #{tpu_custom_call.1} parent=71 // pred_fallthru
          _
      $region72: #{tpu_custom_call.1} parent=5 // pred_fallthru
        _
      %p523 = scmp.le.s32.totalorder 1, %s29
      %p524 = scmp.lt.s32.totalorder %s29, 3
      %p525 = pnand %p523, %p524
      %p526 = pneg %p525
      // Predicated region
      $region81: #{tpu_custom_call.1} parent=5 // pred_check
        _
      $region82: #{tpu_custom_call.1} parent=5 // pred_check_branch
        %528 = sbr.rel (%p525) target = $region84
      $region83: #{tpu_custom_call.1} parent=5 // pred_region
        %s529 = ssub.s32 %s29, 1
        // Predicated region
        $region85: #{tpu_custom_call.1} parent=83 // pred_check
          %p530 = pneg %p102
        $region86: #{tpu_custom_call.1} parent=83 // pred_check_branch
          %532 = sbr.rel (%p530) target = $region88
        $region87: #{tpu_custom_call.1} parent=83 // pred_region
          %533 = dma.done [#allocation3], 16
        $region88: #{tpu_custom_call.1} parent=83 // pred_fallthru
          _
        // Predicated region
        $region89: #{tpu_custom_call.1} parent=83 // pred_check
          %p534 = pneg %p123
        $region90: #{tpu_custom_call.1} parent=83 // pred_check_branch
          %536 = sbr.rel (%p534) target = $region92
        $region91: #{tpu_custom_call.1} parent=83 // pred_region
          %537 = dma.done [#allocation6], 16
        $region92: #{tpu_custom_call.1} parent=83 // pred_fallthru
          _
        // Predicated region
        $region93: #{tpu_custom_call.1} parent=83 // pred_check
          %p538 = pneg %p165
        $region94: #{tpu_custom_call.1} parent=83 // pred_check_branch
          %540 = sbr.rel (%p538) target = $region96
        $region95: #{tpu_custom_call.1} parent=83 // pred_region
          %541 = dma.done [#allocation6], 16
        $region96: #{tpu_custom_call.1} parent=83 // pred_fallthru
          _
        // Predicated region
        $region97: #{tpu_custom_call.1} parent=83 // pred_check
          %p542 = pneg %p207
        $region98: #{tpu_custom_call.1} parent=83 // pred_check_branch
          %544 = sbr.rel (%p542) target = $region100
        $region99: #{tpu_custom_call.1} parent=83 // pred_region
          %545 = dma.done [#allocation9], 16
        $region100: #{tpu_custom_call.1} parent=83 // pred_fallthru
          _
        // Predicated region
        $region101: #{tpu_custom_call.1} parent=83 // pred_check
          %p546 = pneg %p228
        $region102: #{tpu_custom_call.1} parent=83 // pred_check_branch
          %548 = sbr.rel (%p546) target = $region104
        $region103: #{tpu_custom_call.1} parent=83 // pred_region
          %549 = dma.done [#allocation9], 16
        $region104: #{tpu_custom_call.1} parent=83 // pred_fallthru
          _
        // Predicated region
        $region105: #{tpu_custom_call.1} parent=83 // pred_check
          %p550 = pneg %p249
        $region106: #{tpu_custom_call.1} parent=83 // pred_check_branch
          %552 = sbr.rel (%p550) target = $region108
        $region107: #{tpu_custom_call.1} parent=83 // pred_region
          %553 = dma.done [#allocation12], 16
        $region108: #{tpu_custom_call.1} parent=83 // pred_fallthru
          _
        %p554 = scmp.lt.s32.totalorder %s34, 1
        %s555 = scalar_select %p554, %s34, 1
        %s556 = smul.addr %s555, 8
        %s557 = scalar_lea.vmem %s0, %s556
        %p558 = pneg %p55
        %p559 = pneg %p52
        %p560 = scmp.lt.s32.totalorder %s34, 1
        %s561 = scalar_select %p560, %s34, 1
        %s562 = scalar_lea.vmem %s1, %s561
        %p563 = pneg %p81
        %p564 = pneg %p78
        %p565 = pneg %p102
        %p566 = pneg %p99
        %p567 = pneg %p123
        %p568 = pneg %p120
        %p569 = pneg %p144
        %p570 = pneg %p141
        %p571 = pneg %p165
        %p572 = pneg %p162
        %p573 = pneg %p186
        %p574 = pneg %p183
        %p575 = pneg %p207
        %p576 = pneg %p204
        %p577 = pneg %p228
        %p578 = pneg %p225
        %p579 = pneg %p249
        %p580 = pneg %p246
        %p581 = pneg %p270
        %p582 = pneg %p267
        %p583 = pneg %p291
        %p584 = pneg %p288
        %p585 = pneg %p312
        %p586 = pneg %p309
        %p587 = pneg %p333
        %p588 = pneg %p330
        %p589 = pneg %p354
        %p590 = pneg %p351
        %p591 = pneg %p375
        %p592 = pneg %p372
        %p593 = pneg %p401
        %p594 = pneg %p398
        %s595 = sand.u32 %s388, 1
        %s596 = scalar_lea.sflag [#allocation4], %s595
        %s597 = sand.u32 %s388, 1
        %s598 = smul.addr %s597, 4
        %s599 = scalar_lea.vmem [#allocation13], %s598
        %p600 = scmp.lt.s32.totalorder %s34, 1
        %s601 = scalar_select %p600, %s34, 1
        %s602 = smul.addr %s601, 8
        %s603 = scalar_lea.vmem %s0, %s602
        %p604 = scmp.lt.s32.totalorder %s34, 1
        %s605 = scalar_select %p604, %s34, 1
        %s606 = scalar_lea.vmem %s1, %s605
        %v608 = vld [vmem:[%s603] sm:$0xff]
        %v609 = vld [vmem:[#allocation2] sm:$0x1]
        %v610 = vld [vmem:[#allocation5] sm:$0x1]
        %vm611 = vcmask 261120
        %v612 = vsel %vm611, %v608, 0.0
        %613 = vadd.xlane.f32.xlu0 %v612
        %v614 = vpop.xlane.xlu0 %613
        %v615 = vrcp.pop 32.0
        %v616 = vmul.f32 %v614, %v615
        %v617 = vsub.f32 %v608, %v616
        %v618 = vmul.f32 %v617, %v617
        %v619 = vsel %vm611, %v618, 0.0
        %620 = vadd.xlane.f32.xlu0 %v619
        %v621 = vpop.xlane.xlu0 %620
        %v622 = vmul.f32 %v621, %v615
        %v623 = vadd.f32 %v622, 1e-12
        %v624 = vrsqrt.pop %v623
        %v625 = vmul.f32 %v617, %v624
        %v627 = vlaneseq
        %v628 = vshrl.u32 %v627, 7
        %v629 = vsub.s32 0, %v628
        %v630 = vrot.slane %v609, %v629
        %v632 = vmul.f32 %v625, %v630
        %v634 = vlaneseq
        %v635 = vshrl.u32 %v634, 7
        %v636 = vsub.s32 0, %v635
        %v637 = vrot.slane %v610, %v636
        %v639 = vadd.f32 %v632, %v637
        %v640 = vpack.c.bf16 %v639, %v639
        %v641 = vld [vmem:[%s4] sm:$0xf]
        %v642 = vld [vmem:[%s4 + $0x4] sm:$0xf]
        %v643 = vld [vmem:[%s4 + $0x8] sm:$0xf]
        %v644 = vld [vmem:[%s4 + $0xc] sm:$0xf]
        %v645 = vld [vmem:[#allocation7] sm:$0x1]
        %v647 = vlaneseq
        %v648 = vshrl.u32 %v647, 7
        %v649 = vsub.s32 0, %v648
        %v650 = vrot.slane %v645, %v649
        %v656 = vunpack.c.l.b16 %v641
        %v657 = vunpack.c.l.b16 %v642
        %v658 = vunpack.c.l.b16 %v643
        %v659 = vunpack.c.l.b16 %v644
        %v660 = vpack.c.b16 %v657, %v656
        %v661 = vpack.c.b16 %v659, %v658
        %v665 = vsel %vm611, %v640, 0
        %667 = vmatprep.subr.bf16.mxu0 0
        %668 = vmatpush1.bf16.msra.mxu0 %v660
        %669 = vmatprep.subr.bf16.mxu0 0
        %670 = vmatpush1.bf16.msra.mxu0 %v661
        %671 = vmatprep.subr.bf16.mxu0 0
        %672 = vmatpush1.bf16.msra.mxu0 0
        %673 = vmatprep.subr.bf16.mxu0 0
        %674 = vmatpush1.bf16.msra.mxu0 0
        %675 = vmatprep.subr.bf16.mxu0 0
        %676 = vmatpush1.bf16.msra.mxu0 0
        %677 = vmatprep.subr.bf16.mxu0 0
        %678 = vmatpush1.bf16.msra.mxu0 0
        %679 = vmatprep.subr.bf16.mxu0 0
        %680 = vmatpush1.bf16.msra.mxu0 0
        %681 = vmatprep.subr.bf16.mxu0 0
        %682 = vmatpush1.bf16.msra.mxu0 0
        %683 = vmatprep.subr.bf16.mxu0 0
        %684 = vmatpush1.bf16.msra.mxu0 0
        %685 = vmatprep.subr.bf16.mxu0 0
        %686 = vmatpush1.bf16.msra.mxu0 0
        %687 = vmatprep.subr.bf16.mxu0 0
        %688 = vmatpush1.bf16.msra.mxu0 0
        %689 = vmatprep.subr.bf16.mxu0 0
        %690 = vmatpush1.bf16.msra.mxu0 0
        %691 = vmatprep.subr.bf16.mxu0 0
        %692 = vmatpush1.bf16.msra.mxu0 0
        %693 = vmatprep.subr.bf16.mxu0 0
        %694 = vmatpush1.bf16.msra.mxu0 0
        %695 = vmatprep.subr.bf16.mxu0 0
        %696 = vmatpush1.bf16.msra.mxu0 0
        %697 = vmatprep.subr.bf16.mxu0 0
        %698 = vmatpush1.bf16.msra.mxu0 0
        %699 = vmatprep.mubr.bf16.mxu0 0
        %700 = vmatmul.mubr.bf16.gmra.mrb[0].mxu0 %v665
        %v701 = vpop.f32.mrb[0].mxu0
        %v702 = vadd.f32 %v650, %v701
        %v703 = vpop.f32.mrb[0].mxu0
        %v704 = vpop.f32.mrb[0].mxu0
        %v705 = vpop.f32.mrb[0].mxu0
        %706 = vdwg.mxu0
        %708 = vrot.lane.b32.xlu0 %v702, 112
        %v709 = vpop.permute.xlu0 %708
        %v711 = vcombine.high %v702, 0.0
        %v713 = vunpack.c.l.s4 1983009808
        %v714 = vunpack.c.0.s8 %v713
        %v715 = vlaneseq
        %v716 = vshrl.u32 %v715, 7
        %v717 = vsub.s32 %v714, %v716
        %v718 = vrot.slane %v702, %v717
        %v720 = vunpack.c.l.s4 1983009808
        %v721 = vunpack.c.0.s8 %v720
        %v722 = vlaneseq
        %v723 = vshrl.u32 %v722, 7
        %v724 = vsub.s32 %v721, %v723
        %v725 = vrot.slane %v711, %v724
        %v726 = vcombine.high %v709, 0.0
        %v728 = vunpack.c.l.s4 1983009808
        %v729 = vunpack.c.0.s8 %v728
        %v730 = vlaneseq
        %v731 = vshrl.u32 %v730, 7
        %v732 = vsub.s32 %v729, %v731
        %v733 = vrot.slane %v709, %v732
        %v735 = vunpack.c.l.s4 1983009808
        %v736 = vunpack.c.0.s8 %v735
        %v737 = vlaneseq
        %v738 = vshrl.u32 %v737, 7
        %v739 = vsub.s32 %v736, %v738
        %v740 = vrot.slane %v726, %v739
        %v741 = vcombine.low %v718, %v733
        %v742 = vcombine.high %v718, %v733
        %v744 = vunpack.c.l.s4 1934713408
        %v745 = vunpack.c.0.s8 %v744
        %v746 = vlaneseq
        %v747 = vshrl.u32 %v746, 7
        %v748 = vsub.s32 %v745, %v747
        %v749 = vrot.slane %v741, %v748
        %v751 = vunpack.c.l.s4 1934713408
        %v752 = vunpack.c.0.s8 %v751
        %v753 = vlaneseq
        %v754 = vshrl.u32 %v753, 7
        %v755 = vsub.s32 %v752, %v754
        %v756 = vrot.slane %v742, %v755
        %v757 = vcombine.low %v725, %v740
        %v758 = vcombine.high %v725, %v740
        %v760 = vunpack.c.l.s4 1934713408
        %v761 = vunpack.c.0.s8 %v760
        %v762 = vlaneseq
        %v763 = vshrl.u32 %v762, 7
        %v764 = vsub.s32 %v761, %v763
        %v765 = vrot.slane %v757, %v764
        %v767 = vunpack.c.l.s4 1934713408
        %v768 = vunpack.c.0.s8 %v767
        %v769 = vlaneseq
        %v770 = vshrl.u32 %v769, 7
        %v771 = vsub.s32 %v768, %v770
        %v772 = vrot.slane %v758, %v771
        %v773 = vcombine.high %v749, 0.0
        %v774 = vcombine.high %v756, 0.0
        %v775 = vcombine.high %v765, 0.0
        %v776 = vcombine.high %v772, 0.0
        %v777 = vpack.c.bf16 %v749, %v749
        %v778 = vpack.c.bf16 %v773, %v773
        %v779 = vpack.c.bf16 %v756, %v756
        %v780 = vpack.c.bf16 %v774, %v774
        %v781 = vpack.c.bf16 %v765, %v765
        %v782 = vpack.c.bf16 %v775, %v775
        %v783 = vpack.c.bf16 %v772, %v772
        %v784 = vpack.c.bf16 %v776, %v776
        %785 = vrot.lane.b32.xlu0 %v702, 96
        %v786 = vpop.permute.xlu0 %785
        %787 = vrot.lane.b32.xlu0 %v709, 96
        %v788 = vpop.permute.xlu0 %787
        %v791 = vcombine.high %v786, 0.0
        %v793 = vunpack.c.l.s4 1983009808
        %v794 = vunpack.c.0.s8 %v793
        %v795 = vlaneseq
        %v796 = vshrl.u32 %v795, 7
        %v797 = vsub.s32 %v794, %v796
        %v798 = vrot.slane %v786, %v797
        %v800 = vunpack.c.l.s4 1983009808
        %v801 = vunpack.c.0.s8 %v800
        %v802 = vlaneseq
        %v803 = vshrl.u32 %v802, 7
        %v804 = vsub.s32 %v801, %v803
        %v805 = vrot.slane %v791, %v804
        %v806 = vcombine.high %v788, 0.0
        %v808 = vunpack.c.l.s4 1983009808
        %v809 = vunpack.c.0.s8 %v808
        %v810 = vlaneseq
        %v811 = vshrl.u32 %v810, 7
        %v812 = vsub.s32 %v809, %v811
        %v813 = vrot.slane %v788, %v812
        %v815 = vunpack.c.l.s4 1983009808
        %v816 = vunpack.c.0.s8 %v815
        %v817 = vlaneseq
        %v818 = vshrl.u32 %v817, 7
        %v819 = vsub.s32 %v816, %v818
        %v820 = vrot.slane %v806, %v819
        %v821 = vcombine.low %v798, %v813
        %v822 = vcombine.high %v798, %v813
        %v824 = vunpack.c.l.s4 1934713408
        %v825 = vunpack.c.0.s8 %v824
        %v826 = vlaneseq
        %v827 = vshrl.u32 %v826, 7
        %v828 = vsub.s32 %v825, %v827
        %v829 = vrot.slane %v821, %v828
        %v831 = vunpack.c.l.s4 1934713408
        %v832 = vunpack.c.0.s8 %v831
        %v833 = vlaneseq
        %v834 = vshrl.u32 %v833, 7
        %v835 = vsub.s32 %v832, %v834
        %v836 = vrot.slane %v822, %v835
        %v837 = vcombine.low %v805, %v820
        %v838 = vcombine.high %v805, %v820
        %v840 = vunpack.c.l.s4 1934713408
        %v841 = vunpack.c.0.s8 %v840
        %v842 = vlaneseq
        %v843 = vshrl.u32 %v842, 7
        %v844 = vsub.s32 %v841, %v843
        %v845 = vrot.slane %v837, %v844
        %v847 = vunpack.c.l.s4 1934713408
        %v848 = vunpack.c.0.s8 %v847
        %v849 = vlaneseq
        %v850 = vshrl.u32 %v849, 7
        %v851 = vsub.s32 %v848, %v850
        %v852 = vrot.slane %v838, %v851
        %v853 = vcombine.high %v829, 0.0
        %v854 = vcombine.high %v836, 0.0
        %v855 = vcombine.high %v845, 0.0
        %v856 = vcombine.high %v852, 0.0
        %v857 = vpack.c.bf16 %v829, %v829
        %v858 = vpack.c.bf16 %v853, %v853
        %v859 = vpack.c.bf16 %v836, %v836
        %v860 = vpack.c.bf16 %v854, %v854
        %v861 = vpack.c.bf16 %v845, %v845
        %v862 = vpack.c.bf16 %v855, %v855
        %v863 = vpack.c.bf16 %v852, %v852
        %v864 = vpack.c.bf16 %v856, %v856
        %865 = vrot.lane.b32.xlu0 %v702, 64
        %v866 = vpop.permute.xlu0 %865
        %867 = vrot.lane.b32.xlu0 %v709, 64
        %v868 = vpop.permute.xlu0 %867
        %v871 = vcombine.high %v866, 0.0
        %v873 = vunpack.c.l.s4 1983009808
        %v874 = vunpack.c.0.s8 %v873
        %v875 = vlaneseq
        %v876 = vshrl.u32 %v875, 7
        %v877 = vsub.s32 %v874, %v876
        %v878 = vrot.slane %v866, %v877
        %v880 = vunpack.c.l.s4 1983009808
        %v881 = vunpack.c.0.s8 %v880
        %v882 = vlaneseq
        %v883 = vshrl.u32 %v882, 7
        %v884 = vsub.s32 %v881, %v883
        %v885 = vrot.slane %v871, %v884
        %v886 = vcombine.high %v868, 0.0
        %v888 = vunpack.c.l.s4 1983009808
        %v889 = vunpack.c.0.s8 %v888
        %v890 = vlaneseq
        %v891 = vshrl.u32 %v890, 7
        %v892 = vsub.s32 %v889, %v891
        %v893 = vrot.slane %v868, %v892
        %v895 = vunpack.c.l.s4 1983009808
        %v896 = vunpack.c.0.s8 %v895
        %v897 = vlaneseq
        %v898 = vshrl.u32 %v897, 7
        %v899 = vsub.s32 %v896, %v898
        %v900 = vrot.slane %v886, %v899
        %v901 = vcombine.low %v878, %v893
        %v902 = vcombine.high %v878, %v893
        %v904 = vunpack.c.l.s4 1934713408
        %v905 = vunpack.c.0.s8 %v904
        %v906 = vlaneseq
        %v907 = vshrl.u32 %v906, 7
        %v908 = vsub.s32 %v905, %v907
        %v909 = vrot.slane %v901, %v908
        %v911 = vunpack.c.l.s4 1934713408
        %v912 = vunpack.c.0.s8 %v911
        %v913 = vlaneseq
        %v914 = vshrl.u32 %v913, 7
        %v915 = vsub.s32 %v912, %v914
        %v916 = vrot.slane %v902, %v915
        %v917 = vcombine.low %v885, %v900
        %v918 = vcombine.high %v885, %v900
        %v920 = vunpack.c.l.s4 1934713408
        %v921 = vunpack.c.0.s8 %v920
        %v922 = vlaneseq
        %v923 = vshrl.u32 %v922, 7
        %v924 = vsub.s32 %v921, %v923
        %v925 = vrot.slane %v917, %v924
        %v927 = vunpack.c.l.s4 1934713408
        %v928 = vunpack.c.0.s8 %v927
        %v929 = vlaneseq
        %v930 = vshrl.u32 %v929, 7
        %v931 = vsub.s32 %v928, %v930
        %v932 = vrot.slane %v918, %v931
        %v933 = vcombine.high %v909, 0.0
        %v934 = vcombine.high %v916, 0.0
        %v935 = vcombine.high %v925, 0.0
        %v936 = vcombine.high %v932, 0.0
        %v937 = vpack.c.bf16 %v909, %v909
        %v938 = vpack.c.bf16 %v933, %v933
        %v939 = vpack.c.bf16 %v916, %v916
        %v940 = vpack.c.bf16 %v934, %v934
        %v941 = vpack.c.bf16 %v925, %v925
        %v942 = vpack.c.bf16 %v935, %v935
        %v943 = vpack.c.bf16 %v932, %v932
        %v944 = vpack.c.bf16 %v936, %v936
        %v945 = vcombine.low %v777, %v781
        %v947 = vunpack.c.l.s4 1983009808
        %v948 = vunpack.c.0.s8 %v947
        %v949 = vlaneseq
        %v950 = vshrl.u32 %v949, 7
        %v951 = vsub.s32 %v948, %v950
        %v952 = vrot.slane %v945, %v951
        %v953 = vcombine.low %v779, %v783
        %v955 = vunpack.c.l.s4 1983009808
        %v956 = vunpack.c.0.s8 %v955
        %v957 = vlaneseq
        %v958 = vshrl.u32 %v957, 7
        %v959 = vsub.s32 %v956, %v958
        %v960 = vrot.slane %v953, %v959
        %v961 = vcombine.low %v952, %v960
        %v963 = vunpack.c.l.s4 1934713408
        %v964 = vunpack.c.0.s8 %v963
        %v965 = vlaneseq
        %v966 = vshrl.u32 %v965, 7
        %v967 = vsub.s32 %v964, %v966
        %v968 = vrot.slane %v961, %v967
        %v969 = vcombine.low %v778, %v782
        %v971 = vunpack.c.l.s4 1983009808
        %v972 = vunpack.c.0.s8 %v971
        %v973 = vlaneseq
        %v974 = vshrl.u32 %v973, 7
        %v975 = vsub.s32 %v972, %v974
        %v976 = vrot.slane %v969, %v975
        %v977 = vcombine.low %v780, %v784
        %v979 = vunpack.c.l.s4 1983009808
        %v980 = vunpack.c.0.s8 %v979
        %v981 = vlaneseq
        %v982 = vshrl.u32 %v981, 7
        %v983 = vsub.s32 %v980, %v982
        %v984 = vrot.slane %v977, %v983
        %v985 = vcombine.low %v976, %v984
        %v987 = vunpack.c.l.s4 1934713408
        %v988 = vunpack.c.0.s8 %v987
        %v989 = vlaneseq
        %v990 = vshrl.u32 %v989, 7
        %v991 = vsub.s32 %v988, %v990
        %v992 = vrot.slane %v985, %v991
        %v995 = vpack.i.b16 %v992, %v968
        %v996 = vshrl.u32 %v968, 16
        %v997 = vshrl.u32 %v992, 16
        %v998 = vpack.i.b16 %v997, %v996
        %999 = vxpose.xlu0.c.b16.start [1/8] %v857, 128
        %1000 = vxpose.xlu0.c.b16.cont [2/8] 0, 128
        %1001 = vxpose.xlu0.c.b16.cont [3/8] 0, 128
        %1002 = vxpose.xlu0.c.b16.cont [4/8] 0, 128
        %1003 = vxpose.xlu0.c.b16.cont [5/8] 0, 128
        %1004 = vxpose.xlu0.c.b16.cont [6/8] 0, 128
        %1005 = vxpose.xlu0.c.b16.cont [7/8] 0, 128
        %1006 = vxpose.xlu0.c.b16.end [8/8] 0, 128
        %v1007 = vpop.trf.xlu0
        %v1008 = vpop.trf.xlu0
        %v1009 = vpop.trf.xlu0
        %v1010 = vpop.trf.xlu0
        %v1011 = vpop.trf.xlu0
        %v1012 = vpop.trf.xlu0
        %v1013 = vpop.trf.xlu0
        %v1014 = vpop.trf.xlu0
        %1015 = vxpose.xlu0.c.b16.start [1/8] %v858, 128
        %1016 = vxpose.xlu0.c.b16.cont [2/8] 0, 128
        %1017 = vxpose.xlu0.c.b16.cont [3/8] 0, 128
        %1018 = vxpose.xlu0.c.b16.cont [4/8] 0, 128
        %1019 = vxpose.xlu0.c.b16.cont [5/8] 0, 128
        %1020 = vxpose.xlu0.c.b16.cont [6/8] 0, 128
        %1021 = vxpose.xlu0.c.b16.cont [7/8] 0, 128
        %1022 = vxpose.xlu0.c.b16.end [8/8] 0, 128
        %v1023 = vpop.trf.xlu0
        %v1024 = vpop.trf.xlu0
        %v1025 = vpop.trf.xlu0
        %v1026 = vpop.trf.xlu0
        %v1027 = vpop.trf.xlu0
        %v1028 = vpop.trf.xlu0
        %v1029 = vpop.trf.xlu0
        %v1030 = vpop.trf.xlu0
        %1031 = vxpose.xlu0.c.b16.start [1/8] %v859, 128
        %1032 = vxpose.xlu0.c.b16.cont [2/8] 0, 128
        %1033 = vxpose.xlu0.c.b16.cont [3/8] 0, 128
        %1034 = vxpose.xlu0.c.b16.cont [4/8] 0, 128
        %1035 = vxpose.xlu0.c.b16.cont [5/8] 0, 128
        %1036 = vxpose.xlu0.c.b16.cont [6/8] 0, 128
        %1037 = vxpose.xlu0.c.b16.cont [7/8] 0, 128
        %1038 = vxpose.xlu0.c.b16.end [8/8] 0, 128
        %v1039 = vpop.trf.xlu0
        %v1040 = vpop.trf.xlu0
        %v1041 = vpop.trf.xlu0
        %v1042 = vpop.trf.xlu0
        %v1043 = vpop.trf.xlu0
        %v1044 = vpop.trf.xlu0
        %v1045 = vpop.trf.xlu0
        %v1046 = vpop.trf.xlu0
        %1047 = vxpose.xlu0.c.b16.start [1/8] %v860, 128
        %1048 = vxpose.xlu0.c.b16.cont [2/8] 0, 128
        %1049 = vxpose.xlu0.c.b16.cont [3/8] 0, 128
        %1050 = vxpose.xlu0.c.b16.cont [4/8] 0, 128
        %1051 = vxpose.xlu0.c.b16.cont [5/8] 0, 128
        %1052 = vxpose.xlu0.c.b16.cont [6/8] 0, 128
        %1053 = vxpose.xlu0.c.b16.cont [7/8] 0, 128
        %1054 = vxpose.xlu0.c.b16.end [8/8] 0, 128
        %v1055 = vpop.trf.xlu0
        %v1056 = vpop.trf.xlu0
        %v1057 = vpop.trf.xlu0
        %v1058 = vpop.trf.xlu0
        %v1059 = vpop.trf.xlu0
        %v1060 = vpop.trf.xlu0
        %v1061 = vpop.trf.xlu0
        %v1062 = vpop.trf.xlu0
        %1063 = vxpose.xlu0.c.b16.start [1/8] %v861, 128
        %1064 = vxpose.xlu0.c.b16.cont [2/8] 0, 128
        %1065 = vxpose.xlu0.c.b16.cont [3/8] 0, 128
        %1066 = vxpose.xlu0.c.b16.cont [4/8] 0, 128
        %1067 = vxpose.xlu0.c.b16.cont [5/8] 0, 128
        %1068 = vxpose.xlu0.c.b16.cont [6/8] 0, 128
        %1069 = vxpose.xlu0.c.b16.cont [7/8] 0, 128
        %1070 = vxpose.xlu0.c.b16.end [8/8] 0, 128
        %v1071 = vpop.trf.xlu0
        %v1072 = vpop.trf.xlu0
        %v1073 = vpop.trf.xlu0
        %v1074 = vpop.trf.xlu0
        %v1075 = vpop.trf.xlu0
        %v1076 = vpop.trf.xlu0
        %v1077 = vpop.trf.xlu0
        %v1078 = vpop.trf.xlu0
        %1079 = vxpose.xlu0.c.b16.start [1/8] %v862, 128
        %1080 = vxpose.xlu0.c.b16.cont [2/8] 0, 128
        %1081 = vxpose.xlu0.c.b16.cont [3/8] 0, 128
        %1082 = vxpose.xlu0.c.b16.cont [4/8] 0, 128
        %1083 = vxpose.xlu0.c.b16.cont [5/8] 0, 128
        %1084 = vxpose.xlu0.c.b16.cont [6/8] 0, 128
        %1085 = vxpose.xlu0.c.b16.cont [7/8] 0, 128
        %1086 = vxpose.xlu0.c.b16.end [8/8] 0, 128
        %v1087 = vpop.trf.xlu0
        %v1088 = vpop.trf.xlu0
        %v1089 = vpop.trf.xlu0
        %v1090 = vpop.trf.xlu0
        %v1091 = vpop.trf.xlu0
        %v1092 = vpop.trf.xlu0
        %v1093 = vpop.trf.xlu0
        %v1094 = vpop.trf.xlu0
        %1095 = vxpose.xlu0.c.b16.start [1/8] %v863, 128
        %1096 = vxpose.xlu0.c.b16.cont [2/8] 0, 128
        %1097 = vxpose.xlu0.c.b16.cont [3/8] 0, 128
        %1098 = vxpose.xlu0.c.b16.cont [4/8] 0, 128
        %1099 = vxpose.xlu0.c.b16.cont [5/8] 0, 128
        %1100 = vxpose.xlu0.c.b16.cont [6/8] 0, 128
        %1101 = vxpose.xlu0.c.b16.cont [7/8] 0, 128
        %1102 = vxpose.xlu0.c.b16.end [8/8] 0, 128
        %v1103 = vpop.trf.xlu0
        %v1104 = vpop.trf.xlu0
        %v1105 = vpop.trf.xlu0
        %v1106 = vpop.trf.xlu0
        %v1107 = vpop.trf.xlu0
        %v1108 = vpop.trf.xlu0
        %v1109 = vpop.trf.xlu0
        %v1110 = vpop.trf.xlu0
        %1111 = vxpose.xlu0.c.b16.start [1/8] %v864, 128
        %1112 = vxpose.xlu0.c.b16.cont [2/8] 0, 128
        %1113 = vxpose.xlu0.c.b16.cont [3/8] 0, 128
        %1114 = vxpose.xlu0.c.b16.cont [4/8] 0, 128
        %1115 = vxpose.xlu0.c.b16.cont [5/8] 0, 128
        %1116 = vxpose.xlu0.c.b16.cont [6/8] 0, 128
        %1117 = vxpose.xlu0.c.b16.cont [7/8] 0, 128
        %1118 = vxpose.xlu0.c.b16.end [8/8] 0, 128
        %v1119 = vpop.trf.xlu0
        %v1120 = vpop.trf.xlu0
        %v1121 = vpop.trf.xlu0
        %v1122 = vpop.trf.xlu0
        %v1123 = vpop.trf.xlu0
        %v1124 = vpop.trf.xlu0
        %v1125 = vpop.trf.xlu0
        %v1126 = vpop.trf.xlu0
        %v1129 = vpack.i.b16 %v1023, %v1007
        %v1131 = vshrl.u32 %v1007, 16
        %v1132 = vshrl.u32 %v1023, 16
        %v1133 = vpack.i.b16 %v1132, %v1131
        %v1137 = vpack.i.b16 %v1055, %v1039
        %v1139 = vshrl.u32 %v1039, 16
        %v1140 = vshrl.u32 %v1055, 16
        %v1141 = vpack.i.b16 %v1140, %v1139
        %v1145 = vpack.i.b16 %v1087, %v1071
        %v1147 = vshrl.u32 %v1071, 16
        %v1148 = vshrl.u32 %v1087, 16
        %v1149 = vpack.i.b16 %v1148, %v1147
        %v1153 = vpack.i.b16 %v1119, %v1103
        %v1155 = vshrl.u32 %v1103, 16
        %v1156 = vshrl.u32 %v1119, 16
        %v1157 = vpack.i.b16 %v1156, %v1155
        %v1159 = vcombine.low %v1129, %v1145
        %v1160 = vcombine.high %v1129, %v1145
        %v1162 = vunpack.c.l.s4 1983009808
        %v1163 = vunpack.c.0.s8 %v1162
        %v1164 = vlaneseq
        %v1165 = vshrl.u32 %v1164, 7
        %v1166 = vsub.s32 %v1163, %v1165
        %v1167 = vrot.slane %v1159, %v1166
        %v1169 = vunpack.c.l.s4 1983009808
        %v1170 = vunpack.c.0.s8 %v1169
        %v1171 = vlaneseq
        %v1172 = vshrl.u32 %v1171, 7
        %v1173 = vsub.s32 %v1170, %v1172
        %v1174 = vrot.slane %v1160, %v1173
        %v1175 = vcombine.low %v1137, %v1153
        %v1176 = vcombine.high %v1137, %v1153
        %v1178 = vunpack.c.l.s4 1983009808
        %v1179 = vunpack.c.0.s8 %v1178
        %v1180 = vlaneseq
        %v1181 = vshrl.u32 %v1180, 7
        %v1182 = vsub.s32 %v1179, %v1181
        %v1183 = vrot.slane %v1175, %v1182
        %v1185 = vunpack.c.l.s4 1983009808
        %v1186 = vunpack.c.0.s8 %v1185
        %v1187 = vlaneseq
        %v1188 = vshrl.u32 %v1187, 7
        %v1189 = vsub.s32 %v1186, %v1188
        %v1190 = vrot.slane %v1176, %v1189
        %v1191 = vcombine.low %v1167, %v1183
        %v1192 = vcombine.high %v1167, %v1183
        %v1194 = vunpack.c.l.s4 1934713408
        %v1195 = vunpack.c.0.s8 %v1194
        %v1196 = vlaneseq
        %v1197 = vshrl.u32 %v1196, 7
        %v1198 = vsub.s32 %v1195, %v1197
        %v1199 = vrot.slane %v1191, %v1198
        %v1201 = vunpack.c.l.s4 1934713408
        %v1202 = vunpack.c.0.s8 %v1201
        %v1203 = vlaneseq
        %v1204 = vshrl.u32 %v1203, 7
        %v1205 = vsub.s32 %v1202, %v1204
        %v1206 = vrot.slane %v1192, %v1205
        %v1207 = vcombine.low %v1174, %v1190
        %v1208 = vcombine.high %v1174, %v1190
        %v1210 = vunpack.c.l.s4 1934713408
        %v1211 = vunpack.c.0.s8 %v1210
        %v1212 = vlaneseq
        %v1213 = vshrl.u32 %v1212, 7
        %v1214 = vsub.s32 %v1211, %v1213
        %v1215 = vrot.slane %v1207, %v1214
        %v1217 = vunpack.c.l.s4 1934713408
        %v1218 = vunpack.c.0.s8 %v1217
        %v1219 = vlaneseq
        %v1220 = vshrl.u32 %v1219, 7
        %v1221 = vsub.s32 %v1218, %v1220
        %v1222 = vrot.slane %v1208, %v1221
        %v1223 = vcombine.high %v1199, 0
        %v1224 = vcombine.high %v1206, 0
        %v1225 = vcombine.high %v1215, 0
        %v1226 = vcombine.high %v1222, 0
        %v1227 = vcombine.low %v1133, %v1149
        %v1228 = vcombine.high %v1133, %v1149
        %v1230 = vunpack.c.l.s4 1983009808
        %v1231 = vunpack.c.0.s8 %v1230
        %v1232 = vlaneseq
        %v1233 = vshrl.u32 %v1232, 7
        %v1234 = vsub.s32 %v1231, %v1233
        %v1235 = vrot.slane %v1227, %v1234
        %v1237 = vunpack.c.l.s4 1983009808
        %v1238 = vunpack.c.0.s8 %v1237
        %v1239 = vlaneseq
        %v1240 = vshrl.u32 %v1239, 7
        %v1241 = vsub.s32 %v1238, %v1240
        %v1242 = vrot.slane %v1228, %v1241
        %v1243 = vcombine.low %v1141, %v1157
        %v1244 = vcombine.high %v1141, %v1157
        %v1246 = vunpack.c.l.s4 1983009808
        %v1247 = vunpack.c.0.s8 %v1246
        %v1248 = vlaneseq
        %v1249 = vshrl.u32 %v1248, 7
        %v1250 = vsub.s32 %v1247, %v1249
        %v1251 = vrot.slane %v1243, %v1250
        %v1253 = vunpack.c.l.s4 1983009808
        %v1254 = vunpack.c.0.s8 %v1253
        %v1255 = vlaneseq
        %v1256 = vshrl.u32 %v1255, 7
        %v1257 = vsub.s32 %v1254, %v1256
        %v1258 = vrot.slane %v1244, %v1257
        %v1259 = vcombine.low %v1235, %v1251
        %v1260 = vcombine.high %v1235, %v1251
        %v1262 = vunpack.c.l.s4 1934713408
        %v1263 = vunpack.c.0.s8 %v1262
        %v1264 = vlaneseq
        %v1265 = vshrl.u32 %v1264, 7
        %v1266 = vsub.s32 %v1263, %v1265
        %v1267 = vrot.slane %v1259, %v1266
        %v1269 = vunpack.c.l.s4 1934713408
        %v1270 = vunpack.c.0.s8 %v1269
        %v1271 = vlaneseq
        %v1272 = vshrl.u32 %v1271, 7
        %v1273 = vsub.s32 %v1270, %v1272
        %v1274 = vrot.slane %v1260, %v1273
        %v1275 = vcombine.low %v1242, %v1258
        %v1276 = vcombine.high %v1242, %v1258
        %v1278 = vunpack.c.l.s4 1934713408
        %v1279 = vunpack.c.0.s8 %v1278
        %v1280 = vlaneseq
        %v1281 = vshrl.u32 %v1280, 7
        %v1282 = vsub.s32 %v1279, %v1281
        %v1283 = vrot.slane %v1275, %v1282
        %v1285 = vunpack.c.l.s4 1934713408
        %v1286 = vunpack.c.0.s8 %v1285
        %v1287 = vlaneseq
        %v1288 = vshrl.u32 %v1287, 7
        %v1289 = vsub.s32 %v1286, %v1288
        %v1290 = vrot.slane %v1276, %v1289
        %v1291 = vcombine.high %v1267, 0
        %v1292 = vcombine.high %v1274, 0
        %v1293 = vcombine.high %v1283, 0
        %v1294 = vcombine.high %v1290, 0
        %1295 = vxpose.xlu0.c.b16.start [1/8] %v1199, 128
        %1296 = vxpose.xlu0.c.b16.cont [2/8] 0, 128
        %1297 = vxpose.xlu0.c.b16.cont [3/8] 0, 128
        %1298 = vxpose.xlu0.c.b16.cont [4/8] 0, 128
        %1299 = vxpose.xlu0.c.b16.cont [5/8] 0, 128
        %1300 = vxpose.xlu0.c.b16.cont [6/8] 0, 128
        %1301 = vxpose.xlu0.c.b16.cont [7/8] 0, 128
        %1302 = vxpose.xlu0.c.b16.end [8/8] 0, 128
        %v1303 = vpop.trf.xlu0
        %v1304 = vpop.trf.xlu0
        %v1305 = vpop.trf.xlu0
        %v1306 = vpop.trf.xlu0
        %v1307 = vpop.trf.xlu0
        %v1308 = vpop.trf.xlu0
        %v1309 = vpop.trf.xlu0
        %v1310 = vpop.trf.xlu0
        %1311 = vxpose.xlu0.c.b16.start [1/8] %v1267, 128
        %1312 = vxpose.xlu0.c.b16.cont [2/8] 0, 128
        %1313 = vxpose.xlu0.c.b16.cont [3/8] 0, 128
        %1314 = vxpose.xlu0.c.b16.cont [4/8] 0, 128
        %1315 = vxpose.xlu0.c.b16.cont [5/8] 0, 128
        %1316 = vxpose.xlu0.c.b16.cont [6/8] 0, 128
        %1317 = vxpose.xlu0.c.b16.cont [7/8] 0, 128
        %1318 = vxpose.xlu0.c.b16.end [8/8] 0, 128
        %v1319 = vpop.trf.xlu0
        %v1320 = vpop.trf.xlu0
        %v1321 = vpop.trf.xlu0
        %v1322 = vpop.trf.xlu0
        %v1323 = vpop.trf.xlu0
        %v1324 = vpop.trf.xlu0
        %v1325 = vpop.trf.xlu0
        %v1326 = vpop.trf.xlu0
        %1327 = vxpose.xlu0.c.b16.start [1/8] %v1223, 128
        %1328 = vxpose.xlu0.c.b16.cont [2/8] 0, 128
        %1329 = vxpose.xlu0.c.b16.cont [3/8] 0, 128
        %1330 = vxpose.xlu0.c.b16.cont [4/8] 0, 128
        %1331 = vxpose.xlu0.c.b16.cont [5/8] 0, 128
        %1332 = vxpose.xlu0.c.b16.cont [6/8] 0, 128
        %1333 = vxpose.xlu0.c.b16.cont [7/8] 0, 128
        %1334 = vxpose.xlu0.c.b16.end [8/8] 0, 128
        %v1335 = vpop.trf.xlu0
        %v1336 = vpop.trf.xlu0
        %v1337 = vpop.trf.xlu0
        %v1338 = vpop.trf.xlu0
        %v1339 = vpop.trf.xlu0
        %v1340 = vpop.trf.xlu0
        %v1341 = vpop.trf.xlu0
        %v1342 = vpop.trf.xlu0
        %1343 = vxpose.xlu0.c.b16.start [1/8] %v1291, 128
        %1344 = vxpose.xlu0.c.b16.cont [2/8] 0, 128
        %1345 = vxpose.xlu0.c.b16.cont [3/8] 0, 128
        %1346 = vxpose.xlu0.c.b16.cont [4/8] 0, 128
        %1347 = vxpose.xlu0.c.b16.cont [5/8] 0, 128
        %1348 = vxpose.xlu0.c.b16.cont [6/8] 0, 128
        %1349 = vxpose.xlu0.c.b16.cont [7/8] 0, 128
        %1350 = vxpose.xlu0.c.b16.end [8/8] 0, 128
        %v1351 = vpop.trf.xlu0
        %v1352 = vpop.trf.xlu0
        %v1353 = vpop.trf.xlu0
        %v1354 = vpop.trf.xlu0
        %v1355 = vpop.trf.xlu0
        %v1356 = vpop.trf.xlu0
        %v1357 = vpop.trf.xlu0
        %v1358 = vpop.trf.xlu0
        %1359 = vxpose.xlu0.c.b16.start [1/8] %v1206, 128
        %1360 = vxpose.xlu0.c.b16.cont [2/8] 0, 128
        %1361 = vxpose.xlu0.c.b16.cont [3/8] 0, 128
        %1362 = vxpose.xlu0.c.b16.cont [4/8] 0, 128
        %1363 = vxpose.xlu0.c.b16.cont [5/8] 0, 128
        %1364 = vxpose.xlu0.c.b16.cont [6/8] 0, 128
        %1365 = vxpose.xlu0.c.b16.cont [7/8] 0, 128
        %1366 = vxpose.xlu0.c.b16.end [8/8] 0, 128
        %v1367 = vpop.trf.xlu0
        %v1368 = vpop.trf.xlu0
        %v1369 = vpop.trf.xlu0
        %v1370 = vpop.trf.xlu0
        %v1371 = vpop.trf.xlu0
        %v1372 = vpop.trf.xlu0
        %v1373 = vpop.trf.xlu0
        %v1374 = vpop.trf.xlu0
        %1375 = vxpose.xlu0.c.b16.start [1/8] %v1274, 128
        %1376 = vxpose.xlu0.c.b16.cont [2/8] 0, 128
        %1377 = vxpose.xlu0.c.b16.cont [3/8] 0, 128
        %1378 = vxpose.xlu0.c.b16.cont [4/8] 0, 128
        %1379 = vxpose.xlu0.c.b16.cont [5/8] 0, 128
        %1380 = vxpose.xlu0.c.b16.cont [6/8] 0, 128
        %1381 = vxpose.xlu0.c.b16.cont [7/8] 0, 128
        %1382 = vxpose.xlu0.c.b16.end [8/8] 0, 128
        %v1383 = vpop.trf.xlu0
        %v1384 = vpop.trf.xlu0
        %v1385 = vpop.trf.xlu0
        %v1386 = vpop.trf.xlu0
        %v1387 = vpop.trf.xlu0
        %v1388 = vpop.trf.xlu0
        %v1389 = vpop.trf.xlu0
        %v1390 = vpop.trf.xlu0
        %1391 = vxpose.xlu0.c.b16.start [1/8] %v1224, 128
        %1392 = vxpose.xlu0.c.b16.cont [2/8] 0, 128
        %1393 = vxpose.xlu0.c.b16.cont [3/8] 0, 128
        %1394 = vxpose.xlu0.c.b16.cont [4/8] 0, 128
        %1395 = vxpose.xlu0.c.b16.cont [5/8] 0, 128
        %1396 = vxpose.xlu0.c.b16.cont [6/8] 0, 128
        %1397 = vxpose.xlu0.c.b16.cont [7/8] 0, 128
        %1398 = vxpose.xlu0.c.b16.end [8/8] 0, 128
        %v1399 = vpop.trf.xlu0
        %v1400 = vpop.trf.xlu0
        %v1401 = vpop.trf.xlu0
        %v1402 = vpop.trf.xlu0
        %v1403 = vpop.trf.xlu0
        %v1404 = vpop.trf.xlu0
        %v1405 = vpop.trf.xlu0
        %v1406 = vpop.trf.xlu0
        %1407 = vxpose.xlu0.c.b16.start [1/8] %v1292, 128
        %1408 = vxpose.xlu0.c.b16.cont [2/8] 0, 128
        %1409 = vxpose.xlu0.c.b16.cont [3/8] 0, 128
        %1410 = vxpose.xlu0.c.b16.cont [4/8] 0, 128
        %1411 = vxpose.xlu0.c.b16.cont [5/8] 0, 128
        %1412 = vxpose.xlu0.c.b16.cont [6/8] 0, 128
        %1413 = vxpose.xlu0.c.b16.cont [7/8] 0, 128
        %1414 = vxpose.xlu0.c.b16.end [8/8] 0, 128
        %v1415 = vpop.trf.xlu0
        %v1416 = vpop.trf.xlu0
        %v1417 = vpop.trf.xlu0
        %v1418 = vpop.trf.xlu0
        %v1419 = vpop.trf.xlu0
        %v1420 = vpop.trf.xlu0
        %v1421 = vpop.trf.xlu0
        %v1422 = vpop.trf.xlu0
        %1423 = vxpose.xlu0.c.b16.start [1/8] %v1215, 128
        %1424 = vxpose.xlu0.c.b16.cont [2/8] 0, 128
        %1425 = vxpose.xlu0.c.b16.cont [3/8] 0, 128
        %1426 = vxpose.xlu0.c.b16.cont [4/8] 0, 128
        %1427 = vxpose.xlu0.c.b16.cont [5/8] 0, 128
        %1428 = vxpose.xlu0.c.b16.cont [6/8] 0, 128
        %1429 = vxpose.xlu0.c.b16.cont [7/8] 0, 128
        %1430 = vxpose.xlu0.c.b16.end [8/8] 0, 128
        %v1431 = vpop.trf.xlu0
        %v1432 = vpop.trf.xlu0
        %v1433 = vpop.trf.xlu0
        %v1434 = vpop.trf.xlu0
        %v1435 = vpop.trf.xlu0
        %v1436 = vpop.trf.xlu0
        %v1437 = vpop.trf.xlu0
        %v1438 = vpop.trf.xlu0
        %1439 = vxpose.xlu0.c.b16.start [1/8] %v1283, 128
        %1440 = vxpose.xlu0.c.b16.cont [2/8] 0, 128
        %1441 = vxpose.xlu0.c.b16.cont [3/8] 0, 128
        %1442 = vxpose.xlu0.c.b16.cont [4/8] 0, 128
        %1443 = vxpose.xlu0.c.b16.cont [5/8] 0, 128
        %1444 = vxpose.xlu0.c.b16.cont [6/8] 0, 128
        %1445 = vxpose.xlu0.c.b16.cont [7/8] 0, 128
        %1446 = vxpose.xlu0.c.b16.end [8/8] 0, 128
        %v1447 = vpop.trf.xlu0
        %v1448 = vpop.trf.xlu0
        %v1449 = vpop.trf.xlu0
        %v1450 = vpop.trf.xlu0
        %v1451 = vpop.trf.xlu0
        %v1452 = vpop.trf.xlu0
        %v1453 = vpop.trf.xlu0
        %v1454 = vpop.trf.xlu0
        %1455 = vxpose.xlu0.c.b16.start [1/8] %v1225, 128
        %1456 = vxpose.xlu0.c.b16.cont [2/8] 0, 128
        %1457 = vxpose.xlu0.c.b16.cont [3/8] 0, 128
        %1458 = vxpose.xlu0.c.b16.cont [4/8] 0, 128
        %1459 = vxpose.xlu0.c.b16.cont [5/8] 0, 128
        %1460 = vxpose.xlu0.c.b16.cont [6/8] 0, 128
        %1461 = vxpose.xlu0.c.b16.cont [7/8] 0, 128
        %1462 = vxpose.xlu0.c.b16.end [8/8] 0, 128
        %v1463 = vpop.trf.xlu0
        %v1464 = vpop.trf.xlu0
        %v1465 = vpop.trf.xlu0
        %v1466 = vpop.trf.xlu0
        %v1467 = vpop.trf.xlu0
        %v1468 = vpop.trf.xlu0
        %v1469 = vpop.trf.xlu0
        %v1470 = vpop.trf.xlu0
        %1471 = vxpose.xlu0.c.b16.start [1/8] %v1293, 128
        %1472 = vxpose.xlu0.c.b16.cont [2/8] 0, 128
        %1473 = vxpose.xlu0.c.b16.cont [3/8] 0, 128
        %1474 = vxpose.xlu0.c.b16.cont [4/8] 0, 128
        %1475 = vxpose.xlu0.c.b16.cont [5/8] 0, 128
        %1476 = vxpose.xlu0.c.b16.cont [6/8] 0, 128
        %1477 = vxpose.xlu0.c.b16.cont [7/8] 0, 128
        %1478 = vxpose.xlu0.c.b16.end [8/8] 0, 128
        %v1479 = vpop.trf.xlu0
        %v1480 = vpop.trf.xlu0
        %v1481 = vpop.trf.xlu0
        %v1482 = vpop.trf.xlu0
        %v1483 = vpop.trf.xlu0
        %v1484 = vpop.trf.xlu0
        %v1485 = vpop.trf.xlu0
        %v1486 = vpop.trf.xlu0
        %1487 = vxpose.xlu0.c.b16.start [1/8] %v1222, 128
        %1488 = vxpose.xlu0.c.b16.cont [2/8] 0, 128
        %1489 = vxpose.xlu0.c.b16.cont [3/8] 0, 128
        %1490 = vxpose.xlu0.c.b16.cont [4/8] 0, 128
        %1491 = vxpose.xlu0.c.b16.cont [5/8] 0, 128
        %1492 = vxpose.xlu0.c.b16.cont [6/8] 0, 128
        %1493 = vxpose.xlu0.c.b16.cont [7/8] 0, 128
        %1494 = vxpose.xlu0.c.b16.end [8/8] 0, 128
        %v1495 = vpop.trf.xlu0
        %v1496 = vpop.trf.xlu0
        %v1497 = vpop.trf.xlu0
        %v1498 = vpop.trf.xlu0
        %v1499 = vpop.trf.xlu0
        %v1500 = vpop.trf.xlu0
        %v1501 = vpop.trf.xlu0
        %v1502 = vpop.trf.xlu0
        %1503 = vxpose.xlu0.c.b16.start [1/8] %v1290, 128
        %1504 = vxpose.xlu0.c.b16.cont [2/8] 0, 128
        %1505 = vxpose.xlu0.c.b16.cont [3/8] 0, 128
        %1506 = vxpose.xlu0.c.b16.cont [4/8] 0, 128
        %1507 = vxpose.xlu0.c.b16.cont [5/8] 0, 128
        %1508 = vxpose.xlu0.c.b16.cont [6/8] 0, 128
        %1509 = vxpose.xlu0.c.b16.cont [7/8] 0, 128
        %1510 = vxpose.xlu0.c.b16.end [8/8] 0, 128
        %v1511 = vpop.trf.xlu0
        %v1512 = vpop.trf.xlu0
        %v1513 = vpop.trf.xlu0
        %v1514 = vpop.trf.xlu0
        %v1515 = vpop.trf.xlu0
        %v1516 = vpop.trf.xlu0
        %v1517 = vpop.trf.xlu0
        %v1518 = vpop.trf.xlu0
        %1519 = vxpose.xlu0.c.b16.start [1/8] %v1226, 128
        %1520 = vxpose.xlu0.c.b16.cont [2/8] 0, 128
        %1521 = vxpose.xlu0.c.b16.cont [3/8] 0, 128
        %1522 = vxpose.xlu0.c.b16.cont [4/8] 0, 128
        %1523 = vxpose.xlu0.c.b16.cont [5/8] 0, 128
        %1524 = vxpose.xlu0.c.b16.cont [6/8] 0, 128
        %1525 = vxpose.xlu0.c.b16.cont [7/8] 0, 128
        %1526 = vxpose.xlu0.c.b16.end [8/8] 0, 128
        %v1527 = vpop.trf.xlu0
        %v1528 = vpop.trf.xlu0
        %v1529 = vpop.trf.xlu0
        %v1530 = vpop.trf.xlu0
        %v1531 = vpop.trf.xlu0
        %v1532 = vpop.trf.xlu0
        %v1533 = vpop.trf.xlu0
        %v1534 = vpop.trf.xlu0
        %1535 = vxpose.xlu0.c.b16.start [1/8] %v1294, 128
        %1536 = vxpose.xlu0.c.b16.cont [2/8] 0, 128
        %1537 = vxpose.xlu0.c.b16.cont [3/8] 0, 128
        %1538 = vxpose.xlu0.c.b16.cont [4/8] 0, 128
        %1539 = vxpose.xlu0.c.b16.cont [5/8] 0, 128
        %1540 = vxpose.xlu0.c.b16.cont [6/8] 0, 128
        %1541 = vxpose.xlu0.c.b16.cont [7/8] 0, 128
        %1542 = vxpose.xlu0.c.b16.end [8/8] 0, 128
        %v1543 = vpop.trf.xlu0
        %v1544 = vpop.trf.xlu0
        %v1545 = vpop.trf.xlu0
        %v1546 = vpop.trf.xlu0
        %v1547 = vpop.trf.xlu0
        %v1548 = vpop.trf.xlu0
        %v1549 = vpop.trf.xlu0
        %v1550 = vpop.trf.xlu0
        %v1551 = vcombine.low %v1303, %v1367
        %v1553 = vunpack.c.l.s4 1983009808
        %v1554 = vunpack.c.0.s8 %v1553
        %v1555 = vlaneseq
        %v1556 = vshrl.u32 %v1555, 7
        %v1557 = vsub.s32 %v1554, %v1556
        %v1558 = vrot.slane %v1551, %v1557
        %v1559 = vcombine.low %v1335, %v1399
        %v1561 = vunpack.c.l.s4 1983009808
        %v1562 = vunpack.c.0.s8 %v1561
        %v1563 = vlaneseq
        %v1564 = vshrl.u32 %v1563, 7
        %v1565 = vsub.s32 %v1562, %v1564
        %v1566 = vrot.slane %v1559, %v1565
        %v1567 = vcombine.low %v1431, %v1495
        %v1569 = vunpack.c.l.s4 1983009808
        %v1570 = vunpack.c.0.s8 %v1569
        %v1571 = vlaneseq
        %v1572 = vshrl.u32 %v1571, 7
        %v1573 = vsub.s32 %v1570, %v1572
        %v1574 = vrot.slane %v1567, %v1573
        %v1575 = vcombine.low %v1463, %v1527
        %v1577 = vunpack.c.l.s4 1983009808
        %v1578 = vunpack.c.0.s8 %v1577
        %v1579 = vlaneseq
        %v1580 = vshrl.u32 %v1579, 7
        %v1581 = vsub.s32 %v1578, %v1580
        %v1582 = vrot.slane %v1575, %v1581
        %v1583 = vcombine.low %v1558, %v1566
        %v1585 = vunpack.c.l.s4 1934713408
        %v1586 = vunpack.c.0.s8 %v1585
        %v1587 = vlaneseq
        %v1588 = vshrl.u32 %v1587, 7
        %v1589 = vsub.s32 %v1586, %v1588
        %v1590 = vrot.slane %v1583, %v1589
        %v1591 = vcombine.low %v1574, %v1582
        %v1593 = vunpack.c.l.s4 1934713408
        %v1594 = vunpack.c.0.s8 %v1593
        %v1595 = vlaneseq
        %v1596 = vshrl.u32 %v1595, 7
        %v1597 = vsub.s32 %v1594, %v1596
        %v1598 = vrot.slane %v1591, %v1597
        %v1599 = vcombine.low %v1590, %v1598
        %v1600 = vcombine.low %v1319, %v1383
        %v1602 = vunpack.c.l.s4 1983009808
        %v1603 = vunpack.c.0.s8 %v1602
        %v1604 = vlaneseq
        %v1605 = vshrl.u32 %v1604, 7
        %v1606 = vsub.s32 %v1603, %v1605
        %v1607 = vrot.slane %v1600, %v1606
        %v1608 = vcombine.low %v1351, %v1415
        %v1610 = vunpack.c.l.s4 1983009808
        %v1611 = vunpack.c.0.s8 %v1610
        %v1612 = vlaneseq
        %v1613 = vshrl.u32 %v1612, 7
        %v1614 = vsub.s32 %v1611, %v1613
        %v1615 = vrot.slane %v1608, %v1614
        %v1616 = vcombine.low %v1447, %v1511
        %v1618 = vunpack.c.l.s4 1983009808
        %v1619 = vunpack.c.0.s8 %v1618
        %v1620 = vlaneseq
        %v1621 = vshrl.u32 %v1620, 7
        %v1622 = vsub.s32 %v1619, %v1621
        %v1623 = vrot.slane %v1616, %v1622
        %v1624 = vcombine.low %v1479, %v1543
        %v1626 = vunpack.c.l.s4 1983009808
        %v1627 = vunpack.c.0.s8 %v1626
        %v1628 = vlaneseq
        %v1629 = vshrl.u32 %v1628, 7
        %v1630 = vsub.s32 %v1627, %v1629
        %v1631 = vrot.slane %v1624, %v1630
        %v1632 = vcombine.low %v1607, %v1615
        %v1634 = vunpack.c.l.s4 1934713408
        %v1635 = vunpack.c.0.s8 %v1634
        %v1636 = vlaneseq
        %v1637 = vshrl.u32 %v1636, 7
        %v1638 = vsub.s32 %v1635, %v1637
        %v1639 = vrot.slane %v1632, %v1638
        %v1640 = vcombine.low %v1623, %v1631
        %v1642 = vunpack.c.l.s4 1934713408
        %v1643 = vunpack.c.0.s8 %v1642
        %v1644 = vlaneseq
        %v1645 = vshrl.u32 %v1644, 7
        %v1646 = vsub.s32 %v1643, %v1645
        %v1647 = vrot.slane %v1640, %v1646
        %v1648 = vcombine.low %v1639, %v1647
        %v1651 = vpack.i.b16 %v1648, %v1599
        %v1653 = vshrl.u32 %v1599, 16
        %v1654 = vshrl.u32 %v1648, 16
        %v1655 = vpack.i.b16 %v1654, %v1653
        %vm1657 = vcmask 130048
        %v1659 = vsel %vm1657, %v995, 0
        %1661 = vmatprep.subr.bf16.mxu0 0
        %1662 = vmatpush1.bf16.msra.mxu0 %v1651
        %1663 = vmatprep.subr.bf16.mxu0 0
        %1664 = vmatpush1.bf16.msra.mxu0 0
        %1665 = vmatprep.subr.bf16.mxu0 0
        %1666 = vmatpush1.bf16.msra.mxu0 0
        %1667 = vmatprep.subr.bf16.mxu0 0
        %1668 = vmatpush1.bf16.msra.mxu0 0
        %1669 = vmatprep.subr.bf16.mxu0 0
        %1670 = vmatpush1.bf16.msra.mxu0 0
        %1671 = vmatprep.subr.bf16.mxu0 0
        %1672 = vmatpush1.bf16.msra.mxu0 0
        %1673 = vmatprep.subr.bf16.mxu0 0
        %1674 = vmatpush1.bf16.msra.mxu0 0
        %1675 = vmatprep.subr.bf16.mxu0 0
        %1676 = vmatpush1.bf16.msra.mxu0 0
        %1677 = vmatprep.subr.bf16.mxu0 0
        %1678 = vmatpush1.bf16.msra.mxu0 0
        %1679 = vmatprep.subr.bf16.mxu0 0
        %1680 = vmatpush1.bf16.msra.mxu0 0
        %1681 = vmatprep.subr.bf16.mxu0 0
        %1682 = vmatpush1.bf16.msra.mxu0 0
        %1683 = vmatprep.subr.bf16.mxu0 0
        %1684 = vmatpush1.bf16.msra.mxu0 0
        %1685 = vmatprep.subr.bf16.mxu0 0
        %1686 = vmatpush1.bf16.msra.mxu0 0
        %1687 = vmatprep.subr.bf16.mxu0 0
        %1688 = vmatpush1.bf16.msra.mxu0 0
        %1689 = vmatprep.subr.bf16.mxu0 0
        %1690 = vmatpush1.bf16.msra.mxu0 0
        %1691 = vmatprep.subr.bf16.mxu0 0
        %1692 = vmatpush1.bf16.msra.mxu0 0
        %1693 = vmatprep.mubr.bf16.mxu0 0
        %1694 = vmatmul.mubr.bf16.gmra.mrb[0].mxu0 %v1659
        %v1695 = vpop.f32.mrb[0].mxu0
        %v1696 = vadd.f32 0.0, %v1695
        %v1697 = vpop.f32.mrb[0].mxu0
        %v1698 = vpop.f32.mrb[0].mxu0
        %v1699 = vpop.f32.mrb[0].mxu0
        %1700 = vdwg.mxu0
        %v1702 = vsel %vm1657, %v998, 0
        %1704 = vmatprep.subr.bf16.mxu0 0
        %1705 = vmatpush1.bf16.msra.mxu0 %v1655
        %1706 = vmatprep.subr.bf16.mxu0 0
        %1707 = vmatpush1.bf16.msra.mxu0 0
        %1708 = vmatprep.subr.bf16.mxu0 0
        %1709 = vmatpush1.bf16.msra.mxu0 0
        %1710 = vmatprep.subr.bf16.mxu0 0
        %1711 = vmatpush1.bf16.msra.mxu0 0
        %1712 = vmatprep.subr.bf16.mxu0 0
        %1713 = vmatpush1.bf16.msra.mxu0 0
        %1714 = vmatprep.subr.bf16.mxu0 0
        %1715 = vmatpush1.bf16.msra.mxu0 0
        %1716 = vmatprep.subr.bf16.mxu0 0
        %1717 = vmatpush1.bf16.msra.mxu0 0
        %1718 = vmatprep.subr.bf16.mxu0 0
        %1719 = vmatpush1.bf16.msra.mxu0 0
        %1720 = vmatprep.subr.bf16.mxu0 0
        %1721 = vmatpush1.bf16.msra.mxu0 0
        %1722 = vmatprep.subr.bf16.mxu0 0
        %1723 = vmatpush1.bf16.msra.mxu0 0
        %1724 = vmatprep.subr.bf16.mxu0 0
        %1725 = vmatpush1.bf16.msra.mxu0 0
        %1726 = vmatprep.subr.bf16.mxu0 0
        %1727 = vmatpush1.bf16.msra.mxu0 0
        %1728 = vmatprep.subr.bf16.mxu0 0
        %1729 = vmatpush1.bf16.msra.mxu0 0
        %1730 = vmatprep.subr.bf16.mxu0 0
        %1731 = vmatpush1.bf16.msra.mxu0 0
        %1732 = vmatprep.subr.bf16.mxu0 0
        %1733 = vmatpush1.bf16.msra.mxu0 0
        %1734 = vmatprep.subr.bf16.mxu0 0
        %1735 = vmatpush1.bf16.msra.mxu0 0
        %1736 = vmatprep.mubr.bf16.mxu0 0
        %1737 = vmatmul.mubr.bf16.gmra.mrb[0].mxu0 %v1702
        %v1738 = vpop.f32.mrb[0].mxu0
        %v1739 = vadd.f32 0.0, %v1738
        %v1740 = vpop.f32.mrb[0].mxu0
        %v1741 = vpop.f32.mrb[0].mxu0
        %v1742 = vpop.f32.mrb[0].mxu0
        %1743 = vdwg.mxu0
        %v1744 = vmul.f32 %v1696, 0.25
        %v1745 = vmul.f32 %v1739, 0.25
        %v1746 = vld [vmem:[%s606] sm:$0x1]
        %v1748 = vlaneseq
        %v1749 = vshrl.u32 %v1748, 7
        %v1750 = vsub.s32 0, %v1749
        %v1751 = vrot.slane %v1746, %v1750
        %v1753 = vadd.f32 %v1744, %v1751
        %v1754 = vadd.f32 %v1745, %v1751
        %vm1755 = vcmask 64512
        %v1756 = vsel %vm1755, %v1753, -inf
        %1757 = vmax.xlane.f32.xlu0 %v1756
        %v1758 = vpop.xlane.xlu0 %1757
        %v1759 = vsel %vm1755, %v1754, -inf
        %1760 = vmax.xlane.f32.xlu0 %v1759
        %v1761 = vpop.xlane.xlu0 %1760
        %v1762 = vsub.f32 %v1753, %v1758
        %v1763 = vsub.f32 %v1754, %v1761
        %v1764 = vmul.f32 %v1762, 1.442695
        %v1765 = vpow.pop %v1764
        %v1766 = vmul.f32 %v1763, 1.442695
        %v1767 = vpow.pop %v1766
        %v1768 = vsel %vm1755, %v1765, 0.0
        %1769 = vadd.xlane.f32.xlu0 %v1768
        %v1770 = vpop.xlane.xlu0 %1769
        %v1771 = vsel %vm1755, %v1767, 0.0
        %1772 = vadd.xlane.f32.xlu0 %v1771
        %v1773 = vpop.xlane.xlu0 %1772
        %v1774 = vrcp.pop %v1770
        %v1775 = vrcp.pop %v1773
        %v1776 = vmul.f32 %v1765, %v1774
        %v1777 = vmul.f32 %v1767, %v1775
        %v1778 = vpack.c.bf16 %v1776, %v1776
        %v1779 = vpack.c.bf16 %v1777, %v1777
        %1780 = vxpose.xlu0.c.b16.start [1/8] %v937, 128
        %1781 = vxpose.xlu0.c.b16.cont [2/8] 0, 128
        %1782 = vxpose.xlu0.c.b16.cont [3/8] 0, 128
        %1783 = vxpose.xlu0.c.b16.cont [4/8] 0, 128
        %1784 = vxpose.xlu0.c.b16.cont [5/8] 0, 128
        %1785 = vxpose.xlu0.c.b16.cont [6/8] 0, 128
        %1786 = vxpose.xlu0.c.b16.cont [7/8] 0, 128
        %1787 = vxpose.xlu0.c.b16.end [8/8] 0, 128
        %v1788 = vpop.trf.xlu0
        %v1789 = vpop.trf.xlu0
        %v1790 = vpop.trf.xlu0
        %v1791 = vpop.trf.xlu0
        %v1792 = vpop.trf.xlu0
        %v1793 = vpop.trf.xlu0
        %v1794 = vpop.trf.xlu0
        %v1795 = vpop.trf.xlu0
        %1796 = vxpose.xlu0.c.b16.start [1/8] %v938, 128
        %1797 = vxpose.xlu0.c.b16.cont [2/8] 0, 128
        %1798 = vxpose.xlu0.c.b16.cont [3/8] 0, 128
        %1799 = vxpose.xlu0.c.b16.cont [4/8] 0, 128
        %1800 = vxpose.xlu0.c.b16.cont [5/8] 0, 128
        %1801 = vxpose.xlu0.c.b16.cont [6/8] 0, 128
        %1802 = vxpose.xlu0.c.b16.cont [7/8] 0, 128
        %1803 = vxpose.xlu0.c.b16.end [8/8] 0, 128
        %v1804 = vpop.trf.xlu0
        %v1805 = vpop.trf.xlu0
        %v1806 = vpop.trf.xlu0
        %v1807 = vpop.trf.xlu0
        %v1808 = vpop.trf.xlu0
        %v1809 = vpop.trf.xlu0
        %v1810 = vpop.trf.xlu0
        %v1811 = vpop.trf.xlu0
        %1812 = vxpose.xlu0.c.b16.start [1/8] %v939, 128
        %1813 = vxpose.xlu0.c.b16.cont [2/8] 0, 128
        %1814 = vxpose.xlu0.c.b16.cont [3/8] 0, 128
        %1815 = vxpose.xlu0.c.b16.cont [4/8] 0, 128
        %1816 = vxpose.xlu0.c.b16.cont [5/8] 0, 128
        %1817 = vxpose.xlu0.c.b16.cont [6/8] 0, 128
        %1818 = vxpose.xlu0.c.b16.cont [7/8] 0, 128
        %1819 = vxpose.xlu0.c.b16.end [8/8] 0, 128
        %v1820 = vpop.trf.xlu0
        %v1821 = vpop.trf.xlu0
        %v1822 = vpop.trf.xlu0
        %v1823 = vpop.trf.xlu0
        %v1824 = vpop.trf.xlu0
        %v1825 = vpop.trf.xlu0
        %v1826 = vpop.trf.xlu0
        %v1827 = vpop.trf.xlu0
        %1828 = vxpose.xlu0.c.b16.start [1/8] %v940, 128
        %1829 = vxpose.xlu0.c.b16.cont [2/8] 0, 128
        %1830 = vxpose.xlu0.c.b16.cont [3/8] 0, 128
        %1831 = vxpose.xlu0.c.b16.cont [4/8] 0, 128
        %1832 = vxpose.xlu0.c.b16.cont [5/8] 0, 128
        %1833 = vxpose.xlu0.c.b16.cont [6/8] 0, 128
        %1834 = vxpose.xlu0.c.b16.cont [7/8] 0, 128
        %1835 = vxpose.xlu0.c.b16.end [8/8] 0, 128
        %v1836 = vpop.trf.xlu0
        %v1837 = vpop.trf.xlu0
        %v1838 = vpop.trf.xlu0
        %v1839 = vpop.trf.xlu0
        %v1840 = vpop.trf.xlu0
        %v1841 = vpop.trf.xlu0
        %v1842 = vpop.trf.xlu0
        %v1843 = vpop.trf.xlu0
        %1844 = vxpose.xlu0.c.b16.start [1/8] %v941, 128
        %1845 = vxpose.xlu0.c.b16.cont [2/8] 0, 128
        %1846 = vxpose.xlu0.c.b16.cont [3/8] 0, 128
        %1847 = vxpose.xlu0.c.b16.cont [4/8] 0, 128
        %1848 = vxpose.xlu0.c.b16.cont [5/8] 0, 128
        %1849 = vxpose.xlu0.c.b16.cont [6/8] 0, 128
        %1850 = vxpose.xlu0.c.b16.cont [7/8] 0, 128
        %1851 = vxpose.xlu0.c.b16.end [8/8] 0, 128
        %v1852 = vpop.trf.xlu0
        %v1853 = vpop.trf.xlu0
        %v1854 = vpop.trf.xlu0
        %v1855 = vpop.trf.xlu0
        %v1856 = vpop.trf.xlu0
        %v1857 = vpop.trf.xlu0
        %v1858 = vpop.trf.xlu0
        %v1859 = vpop.trf.xlu0
        %1860 = vxpose.xlu0.c.b16.start [1/8] %v942, 128
        %1861 = vxpose.xlu0.c.b16.cont [2/8] 0, 128
        %1862 = vxpose.xlu0.c.b16.cont [3/8] 0, 128
        %1863 = vxpose.xlu0.c.b16.cont [4/8] 0, 128
        %1864 = vxpose.xlu0.c.b16.cont [5/8] 0, 128
        %1865 = vxpose.xlu0.c.b16.cont [6/8] 0, 128
        %1866 = vxpose.xlu0.c.b16.cont [7/8] 0, 128
        %1867 = vxpose.xlu0.c.b16.end [8/8] 0, 128
        %v1868 = vpop.trf.xlu0
        %v1869 = vpop.trf.xlu0
        %v1870 = vpop.trf.xlu0
        %v1871 = vpop.trf.xlu0
        %v1872 = vpop.trf.xlu0
        %v1873 = vpop.trf.xlu0
        %v1874 = vpop.trf.xlu0
        %v1875 = vpop.trf.xlu0
        %1876 = vxpose.xlu0.c.b16.start [1/8] %v943, 128
        %1877 = vxpose.xlu0.c.b16.cont [2/8] 0, 128
        %1878 = vxpose.xlu0.c.b16.cont [3/8] 0, 128
        %1879 = vxpose.xlu0.c.b16.cont [4/8] 0, 128
        %1880 = vxpose.xlu0.c.b16.cont [5/8] 0, 128
        %1881 = vxpose.xlu0.c.b16.cont [6/8] 0, 128
        %1882 = vxpose.xlu0.c.b16.cont [7/8] 0, 128
        %1883 = vxpose.xlu0.c.b16.end [8/8] 0, 128
        %v1884 = vpop.trf.xlu0
        %v1885 = vpop.trf.xlu0
        %v1886 = vpop.trf.xlu0
        %v1887 = vpop.trf.xlu0
        %v1888 = vpop.trf.xlu0
        %v1889 = vpop.trf.xlu0
        %v1890 = vpop.trf.xlu0
        %v1891 = vpop.trf.xlu0
        %1892 = vxpose.xlu0.c.b16.start [1/8] %v944, 128
        %1893 = vxpose.xlu0.c.b16.cont [2/8] 0, 128
        %1894 = vxpose.xlu0.c.b16.cont [3/8] 0, 128
        %1895 = vxpose.xlu0.c.b16.cont [4/8] 0, 128
        %1896 = vxpose.xlu0.c.b16.cont [5/8] 0, 128
        %1897 = vxpose.xlu0.c.b16.cont [6/8] 0, 128
        %1898 = vxpose.xlu0.c.b16.cont [7/8] 0, 128
        %1899 = vxpose.xlu0.c.b16.end [8/8] 0, 128
        %v1900 = vpop.trf.xlu0
        %v1901 = vpop.trf.xlu0
        %v1902 = vpop.trf.xlu0
        %v1903 = vpop.trf.xlu0
        %v1904 = vpop.trf.xlu0
        %v1905 = vpop.trf.xlu0
        %v1906 = vpop.trf.xlu0
        %v1907 = vpop.trf.xlu0
        %v1910 = vpack.i.b16 %v1804, %v1788
        %v1912 = vshrl.u32 %v1788, 16
        %v1913 = vshrl.u32 %v1804, 16
        %v1914 = vpack.i.b16 %v1913, %v1912
        %v1918 = vpack.i.b16 %v1836, %v1820
        %v1920 = vshrl.u32 %v1820, 16
        %v1921 = vshrl.u32 %v1836, 16
        %v1922 = vpack.i.b16 %v1921, %v1920
        %v1926 = vpack.i.b16 %v1868, %v1852
        %v1928 = vshrl.u32 %v1852, 16
        %v1929 = vshrl.u32 %v1868, 16
        %v1930 = vpack.i.b16 %v1929, %v1928
        %v1934 = vpack.i.b16 %v1900, %v1884
        %v1936 = vshrl.u32 %v1884, 16
        %v1937 = vshrl.u32 %v1900, 16
        %v1938 = vpack.i.b16 %v1937, %v1936
        %v1940 = vcombine.low %v1910, %v1926
        %v1941 = vcombine.high %v1910, %v1926
        %v1943 = vunpack.c.l.s4 1983009808
        %v1944 = vunpack.c.0.s8 %v1943
        %v1945 = vlaneseq
        %v1946 = vshrl.u32 %v1945, 7
        %v1947 = vsub.s32 %v1944, %v1946
        %v1948 = vrot.slane %v1940, %v1947
        %v1950 = vunpack.c.l.s4 1983009808
        %v1951 = vunpack.c.0.s8 %v1950
        %v1952 = vlaneseq
        %v1953 = vshrl.u32 %v1952, 7
        %v1954 = vsub.s32 %v1951, %v1953
        %v1955 = vrot.slane %v1941, %v1954
        %v1956 = vcombine.low %v1918, %v1934
        %v1957 = vcombine.high %v1918, %v1934
        %v1959 = vunpack.c.l.s4 1983009808
        %v1960 = vunpack.c.0.s8 %v1959
        %v1961 = vlaneseq
        %v1962 = vshrl.u32 %v1961, 7
        %v1963 = vsub.s32 %v1960, %v1962
        %v1964 = vrot.slane %v1956, %v1963
        %v1966 = vunpack.c.l.s4 1983009808
        %v1967 = vunpack.c.0.s8 %v1966
        %v1968 = vlaneseq
        %v1969 = vshrl.u32 %v1968, 7
        %v1970 = vsub.s32 %v1967, %v1969
        %v1971 = vrot.slane %v1957, %v1970
        %v1972 = vcombine.low %v1948, %v1964
        %v1973 = vcombine.high %v1948, %v1964
        %v1975 = vunpack.c.l.s4 1934713408
        %v1976 = vunpack.c.0.s8 %v1975
        %v1977 = vlaneseq
        %v1978 = vshrl.u32 %v1977, 7
        %v1979 = vsub.s32 %v1976, %v1978
        %v1980 = vrot.slane %v1972, %v1979
        %v1982 = vunpack.c.l.s4 1934713408
        %v1983 = vunpack.c.0.s8 %v1982
        %v1984 = vlaneseq
        %v1985 = vshrl.u32 %v1984, 7
        %v1986 = vsub.s32 %v1983, %v1985
        %v1987 = vrot.slane %v1973, %v1986
        %v1988 = vcombine.low %v1955, %v1971
        %v1989 = vcombine.high %v1955, %v1971
        %v1991 = vunpack.c.l.s4 1934713408
        %v1992 = vunpack.c.0.s8 %v1991
        %v1993 = vlaneseq
        %v1994 = vshrl.u32 %v1993, 7
        %v1995 = vsub.s32 %v1992, %v1994
        %v1996 = vrot.slane %v1988, %v1995
        %v1998 = vunpack.c.l.s4 1934713408
        %v1999 = vunpack.c.0.s8 %v1998
        %v2000 = vlaneseq
        %v2001 = vshrl.u32 %v2000, 7
        %v2002 = vsub.s32 %v1999, %v2001
        %v2003 = vrot.slane %v1989, %v2002
        %v2004 = vcombine.high %v1980, 0
        %v2005 = vcombine.high %v1987, 0
        %v2006 = vcombine.high %v1996, 0
        %v2007 = vcombine.high %v2003, 0
        %v2008 = vcombine.low %v1914, %v1930
        %v2009 = vcombine.high %v1914, %v1930
        %v2011 = vunpack.c.l.s4 1983009808
        %v2012 = vunpack.c.0.s8 %v2011
        %v2013 = vlaneseq
        %v2014 = vshrl.u32 %v2013, 7
        %v2015 = vsub.s32 %v2012, %v2014
        %v2016 = vrot.slane %v2008, %v2015
        %v2018 = vunpack.c.l.s4 1983009808
        %v2019 = vunpack.c.0.s8 %v2018
        %v2020 = vlaneseq
        %v2021 = vshrl.u32 %v2020, 7
        %v2022 = vsub.s32 %v2019, %v2021
        %v2023 = vrot.slane %v2009, %v2022
        %v2024 = vcombine.low %v1922, %v1938
        %v2025 = vcombine.high %v1922, %v1938
        %v2027 = vunpack.c.l.s4 1983009808
        %v2028 = vunpack.c.0.s8 %v2027
        %v2029 = vlaneseq
        %v2030 = vshrl.u32 %v2029, 7
        %v2031 = vsub.s32 %v2028, %v2030
        %v2032 = vrot.slane %v2024, %v2031
        %v2034 = vunpack.c.l.s4 1983009808
        %v2035 = vunpack.c.0.s8 %v2034
        %v2036 = vlaneseq
        %v2037 = vshrl.u32 %v2036, 7
        %v2038 = vsub.s32 %v2035, %v2037
        %v2039 = vrot.slane %v2025, %v2038
        %v2040 = vcombine.low %v2016, %v2032
        %v2041 = vcombine.high %v2016, %v2032
        %v2043 = vunpack.c.l.s4 1934713408
        %v2044 = vunpack.c.0.s8 %v2043
        %v2045 = vlaneseq
        %v2046 = vshrl.u32 %v2045, 7
        %v2047 = vsub.s32 %v2044, %v2046
        %v2048 = vrot.slane %v2040, %v2047
        %v2050 = vunpack.c.l.s4 1934713408
        %v2051 = vunpack.c.0.s8 %v2050
        %v2052 = vlaneseq
        %v2053 = vshrl.u32 %v2052, 7
        %v2054 = vsub.s32 %v2051, %v2053
        %v2055 = vrot.slane %v2041, %v2054
        %v2056 = vcombine.low %v2023, %v2039
        %v2057 = vcombine.high %v2023, %v2039
        %v2059 = vunpack.c.l.s4 1934713408
        %v2060 = vunpack.c.0.s8 %v2059
        %v2061 = vlaneseq
        %v2062 = vshrl.u32 %v2061, 7
        %v2063 = vsub.s32 %v2060, %v2062
        %v2064 = vrot.slane %v2056, %v2063
        %v2066 = vunpack.c.l.s4 1934713408
        %v2067 = vunpack.c.0.s8 %v2066
        %v2068 = vlaneseq
        %v2069 = vshrl.u32 %v2068, 7
        %v2070 = vsub.s32 %v2067, %v2069
        %v2071 = vrot.slane %v2057, %v2070
        %v2072 = vcombine.high %v2048, 0
        %v2073 = vcombine.high %v2055, 0
        %v2074 = vcombine.high %v2064, 0
        %v2075 = vcombine.high %v2071, 0
        %2076 = vxpose.xlu0.c.b16.start [1/8] %v1980, 128
        %2077 = vxpose.xlu0.c.b16.cont [2/8] 0, 128
        %2078 = vxpose.xlu0.c.b16.cont [3/8] 0, 128
        %2079 = vxpose.xlu0.c.b16.cont [4/8] 0, 128
        %2080 = vxpose.xlu0.c.b16.cont [5/8] 0, 128
        %2081 = vxpose.xlu0.c.b16.cont [6/8] 0, 128
        %2082 = vxpose.xlu0.c.b16.cont [7/8] 0, 128
        %2083 = vxpose.xlu0.c.b16.end [8/8] 0, 128
        %v2084 = vpop.trf.xlu0
        %v2085 = vpop.trf.xlu0
        %v2086 = vpop.trf.xlu0
        %v2087 = vpop.trf.xlu0
        %v2088 = vpop.trf.xlu0
        %v2089 = vpop.trf.xlu0
        %v2090 = vpop.trf.xlu0
        %v2091 = vpop.trf.xlu0
        %2092 = vxpose.xlu0.c.b16.start [1/8] %v2048, 128
        %2093 = vxpose.xlu0.c.b16.cont [2/8] 0, 128
        %2094 = vxpose.xlu0.c.b16.cont [3/8] 0, 128
        %2095 = vxpose.xlu0.c.b16.cont [4/8] 0, 128
        %2096 = vxpose.xlu0.c.b16.cont [5/8] 0, 128
        %2097 = vxpose.xlu0.c.b16.cont [6/8] 0, 128
        %2098 = vxpose.xlu0.c.b16.cont [7/8] 0, 128
        %2099 = vxpose.xlu0.c.b16.end [8/8] 0, 128
        %v2100 = vpop.trf.xlu0
        %v2101 = vpop.trf.xlu0
        %v2102 = vpop.trf.xlu0
        %v2103 = vpop.trf.xlu0
        %v2104 = vpop.trf.xlu0
        %v2105 = vpop.trf.xlu0
        %v2106 = vpop.trf.xlu0
        %v2107 = vpop.trf.xlu0
        %2108 = vxpose.xlu0.c.b16.start [1/8] %v2004, 128
        %2109 = vxpose.xlu0.c.b16.cont [2/8] 0, 128
        %2110 = vxpose.xlu0.c.b16.cont [3/8] 0, 128
        %2111 = vxpose.xlu0.c.b16.cont [4/8] 0, 128
        %2112 = vxpose.xlu0.c.b16.cont [5/8] 0, 128
        %2113 = vxpose.xlu0.c.b16.cont [6/8] 0, 128
        %2114 = vxpose.xlu0.c.b16.cont [7/8] 0, 128
        %2115 = vxpose.xlu0.c.b16.end [8/8] 0, 128
        %v2116 = vpop.trf.xlu0
        %v2117 = vpop.trf.xlu0
        %v2118 = vpop.trf.xlu0
        %v2119 = vpop.trf.xlu0
        %v2120 = vpop.trf.xlu0
        %v2121 = vpop.trf.xlu0
        %v2122 = vpop.trf.xlu0
        %v2123 = vpop.trf.xlu0
        %2124 = vxpose.xlu0.c.b16.start [1/8] %v2072, 128
        %2125 = vxpose.xlu0.c.b16.cont [2/8] 0, 128
        %2126 = vxpose.xlu0.c.b16.cont [3/8] 0, 128
        %2127 = vxpose.xlu0.c.b16.cont [4/8] 0, 128
        %2128 = vxpose.xlu0.c.b16.cont [5/8] 0, 128
        %2129 = vxpose.xlu0.c.b16.cont [6/8] 0, 128
        %2130 = vxpose.xlu0.c.b16.cont [7/8] 0, 128
        %2131 = vxpose.xlu0.c.b16.end [8/8] 0, 128
        %v2132 = vpop.trf.xlu0
        %v2133 = vpop.trf.xlu0
        %v2134 = vpop.trf.xlu0
        %v2135 = vpop.trf.xlu0
        %v2136 = vpop.trf.xlu0
        %v2137 = vpop.trf.xlu0
        %v2138 = vpop.trf.xlu0
        %v2139 = vpop.trf.xlu0
        %2140 = vxpose.xlu0.c.b16.start [1/8] %v1987, 128
        %2141 = vxpose.xlu0.c.b16.cont [2/8] 0, 128
        %2142 = vxpose.xlu0.c.b16.cont [3/8] 0, 128
        %2143 = vxpose.xlu0.c.b16.cont [4/8] 0, 128
        %2144 = vxpose.xlu0.c.b16.cont [5/8] 0, 128
        %2145 = vxpose.xlu0.c.b16.cont [6/8] 0, 128
        %2146 = vxpose.xlu0.c.b16.cont [7/8] 0, 128
        %2147 = vxpose.xlu0.c.b16.end [8/8] 0, 128
        %v2148 = vpop.trf.xlu0
        %v2149 = vpop.trf.xlu0
        %v2150 = vpop.trf.xlu0
        %v2151 = vpop.trf.xlu0
        %v2152 = vpop.trf.xlu0
        %v2153 = vpop.trf.xlu0
        %v2154 = vpop.trf.xlu0
        %v2155 = vpop.trf.xlu0
        %2156 = vxpose.xlu0.c.b16.start [1/8] %v2055, 128
        %2157 = vxpose.xlu0.c.b16.cont [2/8] 0, 128
        %2158 = vxpose.xlu0.c.b16.cont [3/8] 0, 128
        %2159 = vxpose.xlu0.c.b16.cont [4/8] 0, 128
        %2160 = vxpose.xlu0.c.b16.cont [5/8] 0, 128
        %2161 = vxpose.xlu0.c.b16.cont [6/8] 0, 128
        %2162 = vxpose.xlu0.c.b16.cont [7/8] 0, 128
        %2163 = vxpose.xlu0.c.b16.end [8/8] 0, 128
        %v2164 = vpop.trf.xlu0
        %v2165 = vpop.trf.xlu0
        %v2166 = vpop.trf.xlu0
        %v2167 = vpop.trf.xlu0
        %v2168 = vpop.trf.xlu0
        %v2169 = vpop.trf.xlu0
        %v2170 = vpop.trf.xlu0
        %v2171 = vpop.trf.xlu0
        %2172 = vxpose.xlu0.c.b16.start [1/8] %v2005, 128
        %2173 = vxpose.xlu0.c.b16.cont [2/8] 0, 128
        %2174 = vxpose.xlu0.c.b16.cont [3/8] 0, 128
        %2175 = vxpose.xlu0.c.b16.cont [4/8] 0, 128
        %2176 = vxpose.xlu0.c.b16.cont [5/8] 0, 128
        %2177 = vxpose.xlu0.c.b16.cont [6/8] 0, 128
        %2178 = vxpose.xlu0.c.b16.cont [7/8] 0, 128
        %2179 = vxpose.xlu0.c.b16.end [8/8] 0, 128
        %v2180 = vpop.trf.xlu0
        %v2181 = vpop.trf.xlu0
        %v2182 = vpop.trf.xlu0
        %v2183 = vpop.trf.xlu0
        %v2184 = vpop.trf.xlu0
        %v2185 = vpop.trf.xlu0
        %v2186 = vpop.trf.xlu0
        %v2187 = vpop.trf.xlu0
        %2188 = vxpose.xlu0.c.b16.start [1/8] %v2073, 128
        %2189 = vxpose.xlu0.c.b16.cont [2/8] 0, 128
        %2190 = vxpose.xlu0.c.b16.cont [3/8] 0, 128
        %2191 = vxpose.xlu0.c.b16.cont [4/8] 0, 128
        %2192 = vxpose.xlu0.c.b16.cont [5/8] 0, 128
        %2193 = vxpose.xlu0.c.b16.cont [6/8] 0, 128
        %2194 = vxpose.xlu0.c.b16.cont [7/8] 0, 128
        %2195 = vxpose.xlu0.c.b16.end [8/8] 0, 128
        %v2196 = vpop.trf.xlu0
        %v2197 = vpop.trf.xlu0
        %v2198 = vpop.trf.xlu0
        %v2199 = vpop.trf.xlu0
        %v2200 = vpop.trf.xlu0
        %v2201 = vpop.trf.xlu0
        %v2202 = vpop.trf.xlu0
        %v2203 = vpop.trf.xlu0
        %2204 = vxpose.xlu0.c.b16.start [1/8] %v1996, 128
        %2205 = vxpose.xlu0.c.b16.cont [2/8] 0, 128
        %2206 = vxpose.xlu0.c.b16.cont [3/8] 0, 128
        %2207 = vxpose.xlu0.c.b16.cont [4/8] 0, 128
        %2208 = vxpose.xlu0.c.b16.cont [5/8] 0, 128
        %2209 = vxpose.xlu0.c.b16.cont [6/8] 0, 128
        %2210 = vxpose.xlu0.c.b16.cont [7/8] 0, 128
        %2211 = vxpose.xlu0.c.b16.end [8/8] 0, 128
        %v2212 = vpop.trf.xlu0
        %v2213 = vpop.trf.xlu0
        %v2214 = vpop.trf.xlu0
        %v2215 = vpop.trf.xlu0
        %v2216 = vpop.trf.xlu0
        %v2217 = vpop.trf.xlu0
        %v2218 = vpop.trf.xlu0
        %v2219 = vpop.trf.xlu0
        %2220 = vxpose.xlu0.c.b16.start [1/8] %v2064, 128
        %2221 = vxpose.xlu0.c.b16.cont [2/8] 0, 128
        %2222 = vxpose.xlu0.c.b16.cont [3/8] 0, 128
        %2223 = vxpose.xlu0.c.b16.cont [4/8] 0, 128
        %2224 = vxpose.xlu0.c.b16.cont [5/8] 0, 128
        %2225 = vxpose.xlu0.c.b16.cont [6/8] 0, 128
        %2226 = vxpose.xlu0.c.b16.cont [7/8] 0, 128
        %2227 = vxpose.xlu0.c.b16.end [8/8] 0, 128
        %v2228 = vpop.trf.xlu0
        %v2229 = vpop.trf.xlu0
        %v2230 = vpop.trf.xlu0
        %v2231 = vpop.trf.xlu0
        %v2232 = vpop.trf.xlu0
        %v2233 = vpop.trf.xlu0
        %v2234 = vpop.trf.xlu0
        %v2235 = vpop.trf.xlu0
        %2236 = vxpose.xlu0.c.b16.start [1/8] %v2006, 128
        %2237 = vxpose.xlu0.c.b16.cont [2/8] 0, 128
        %2238 = vxpose.xlu0.c.b16.cont [3/8] 0, 128
        %2239 = vxpose.xlu0.c.b16.cont [4/8] 0, 128
        %2240 = vxpose.xlu0.c.b16.cont [5/8] 0, 128
        %2241 = vxpose.xlu0.c.b16.cont [6/8] 0, 128
        %2242 = vxpose.xlu0.c.b16.cont [7/8] 0, 128
        %2243 = vxpose.xlu0.c.b16.end [8/8] 0, 128
        %v2244 = vpop.trf.xlu0
        %v2245 = vpop.trf.xlu0
        %v2246 = vpop.trf.xlu0
        %v2247 = vpop.trf.xlu0
        %v2248 = vpop.trf.xlu0
        %v2249 = vpop.trf.xlu0
        %v2250 = vpop.trf.xlu0
        %v2251 = vpop.trf.xlu0
        %2252 = vxpose.xlu0.c.b16.start [1/8] %v2074, 128
        %2253 = vxpose.xlu0.c.b16.cont [2/8] 0, 128
        %2254 = vxpose.xlu0.c.b16.cont [3/8] 0, 128
        %2255 = vxpose.xlu0.c.b16.cont [4/8] 0, 128
        %2256 = vxpose.xlu0.c.b16.cont [5/8] 0, 128
        %2257 = vxpose.xlu0.c.b16.cont [6/8] 0, 128
        %2258 = vxpose.xlu0.c.b16.cont [7/8] 0, 128
        %2259 = vxpose.xlu0.c.b16.end [8/8] 0, 128
        %v2260 = vpop.trf.xlu0
        %v2261 = vpop.trf.xlu0
        %v2262 = vpop.trf.xlu0
        %v2263 = vpop.trf.xlu0
        %v2264 = vpop.trf.xlu0
        %v2265 = vpop.trf.xlu0
        %v2266 = vpop.trf.xlu0
        %v2267 = vpop.trf.xlu0
        %2268 = vxpose.xlu0.c.b16.start [1/8] %v2003, 128
        %2269 = vxpose.xlu0.c.b16.cont [2/8] 0, 128
        %2270 = vxpose.xlu0.c.b16.cont [3/8] 0, 128
        %2271 = vxpose.xlu0.c.b16.cont [4/8] 0, 128
        %2272 = vxpose.xlu0.c.b16.cont [5/8] 0, 128
        %2273 = vxpose.xlu0.c.b16.cont [6/8] 0, 128
        %2274 = vxpose.xlu0.c.b16.cont [7/8] 0, 128
        %2275 = vxpose.xlu0.c.b16.end [8/8] 0, 128
        %v2276 = vpop.trf.xlu0
        %v2277 = vpop.trf.xlu0
        %v2278 = vpop.trf.xlu0
        %v2279 = vpop.trf.xlu0
        %v2280 = vpop.trf.xlu0
        %v2281 = vpop.trf.xlu0
        %v2282 = vpop.trf.xlu0
        %v2283 = vpop.trf.xlu0
        %2284 = vxpose.xlu0.c.b16.start [1/8] %v2071, 128
        %2285 = vxpose.xlu0.c.b16.cont [2/8] 0, 128
        %2286 = vxpose.xlu0.c.b16.cont [3/8] 0, 128
        %2287 = vxpose.xlu0.c.b16.cont [4/8] 0, 128
        %2288 = vxpose.xlu0.c.b16.cont [5/8] 0, 128
        %2289 = vxpose.xlu0.c.b16.cont [6/8] 0, 128
        %2290 = vxpose.xlu0.c.b16.cont [7/8] 0, 128
        %2291 = vxpose.xlu0.c.b16.end [8/8] 0, 128
        %v2292 = vpop.trf.xlu0
        %v2293 = vpop.trf.xlu0
        %v2294 = vpop.trf.xlu0
        %v2295 = vpop.trf.xlu0
        %v2296 = vpop.trf.xlu0
        %v2297 = vpop.trf.xlu0
        %v2298 = vpop.trf.xlu0
        %v2299 = vpop.trf.xlu0
        %2300 = vxpose.xlu0.c.b16.start [1/8] %v2007, 128
        %2301 = vxpose.xlu0.c.b16.cont [2/8] 0, 128
        %2302 = vxpose.xlu0.c.b16.cont [3/8] 0, 128
        %2303 = vxpose.xlu0.c.b16.cont [4/8] 0, 128
        %2304 = vxpose.xlu0.c.b16.cont [5/8] 0, 128
        %2305 = vxpose.xlu0.c.b16.cont [6/8] 0, 128
        %2306 = vxpose.xlu0.c.b16.cont [7/8] 0, 128
        %2307 = vxpose.xlu0.c.b16.end [8/8] 0, 128
        %v2308 = vpop.trf.xlu0
        %v2309 = vpop.trf.xlu0
        %v2310 = vpop.trf.xlu0
        %v2311 = vpop.trf.xlu0
        %v2312 = vpop.trf.xlu0
        %v2313 = vpop.trf.xlu0
        %v2314 = vpop.trf.xlu0
        %v2315 = vpop.trf.xlu0
        %2316 = vxpose.xlu0.c.b16.start [1/8] %v2075, 128
        %2317 = vxpose.xlu0.c.b16.cont [2/8] 0, 128
        %2318 = vxpose.xlu0.c.b16.cont [3/8] 0, 128
        %2319 = vxpose.xlu0.c.b16.cont [4/8] 0, 128
        %2320 = vxpose.xlu0.c.b16.cont [5/8] 0, 128
        %2321 = vxpose.xlu0.c.b16.cont [6/8] 0, 128
        %2322 = vxpose.xlu0.c.b16.cont [7/8] 0, 128
        %2323 = vxpose.xlu0.c.b16.end [8/8] 0, 128
        %v2324 = vpop.trf.xlu0
        %v2325 = vpop.trf.xlu0
        %v2326 = vpop.trf.xlu0
        %v2327 = vpop.trf.xlu0
        %v2328 = vpop.trf.xlu0
        %v2329 = vpop.trf.xlu0
        %v2330 = vpop.trf.xlu0
        %v2331 = vpop.trf.xlu0
        %v2332 = vcombine.low %v2084, %v2148
        %v2334 = vunpack.c.l.s4 1983009808
        %v2335 = vunpack.c.0.s8 %v2334
        %v2336 = vlaneseq
        %v2337 = vshrl.u32 %v2336, 7
        %v2338 = vsub.s32 %v2335, %v2337
        %v2339 = vrot.slane %v2332, %v2338
        %v2340 = vcombine.low %v2116, %v2180
        %v2342 = vunpack.c.l.s4 1983009808
        %v2343 = vunpack.c.0.s8 %v2342
        %v2344 = vlaneseq
        %v2345 = vshrl.u32 %v2344, 7
        %v2346 = vsub.s32 %v2343, %v2345
        %v2347 = vrot.slane %v2340, %v2346
        %v2348 = vcombine.low %v2212, %v2276
        %v2350 = vunpack.c.l.s4 1983009808
        %v2351 = vunpack.c.0.s8 %v2350
        %v2352 = vlaneseq
        %v2353 = vshrl.u32 %v2352, 7
        %v2354 = vsub.s32 %v2351, %v2353
        %v2355 = vrot.slane %v2348, %v2354
        %v2356 = vcombine.low %v2244, %v2308
        %v2358 = vunpack.c.l.s4 1983009808
        %v2359 = vunpack.c.0.s8 %v2358
        %v2360 = vlaneseq
        %v2361 = vshrl.u32 %v2360, 7
        %v2362 = vsub.s32 %v2359, %v2361
        %v2363 = vrot.slane %v2356, %v2362
        %v2364 = vcombine.low %v2339, %v2347
        %v2366 = vunpack.c.l.s4 1934713408
        %v2367 = vunpack.c.0.s8 %v2366
        %v2368 = vlaneseq
        %v2369 = vshrl.u32 %v2368, 7
        %v2370 = vsub.s32 %v2367, %v2369
        %v2371 = vrot.slane %v2364, %v2370
        %v2372 = vcombine.low %v2355, %v2363
        %v2374 = vunpack.c.l.s4 1934713408
        %v2375 = vunpack.c.0.s8 %v2374
        %v2376 = vlaneseq
        %v2377 = vshrl.u32 %v2376, 7
        %v2378 = vsub.s32 %v2375, %v2377
        %v2379 = vrot.slane %v2372, %v2378
        %v2380 = vcombine.low %v2371, %v2379
        %v2381 = vcombine.low %v2100, %v2164
        %v2383 = vunpack.c.l.s4 1983009808
        %v2384 = vunpack.c.0.s8 %v2383
        %v2385 = vlaneseq
        %v2386 = vshrl.u32 %v2385, 7
        %v2387 = vsub.s32 %v2384, %v2386
        %v2388 = vrot.slane %v2381, %v2387
        %v2389 = vcombine.low %v2132, %v2196
        %v2391 = vunpack.c.l.s4 1983009808
        %v2392 = vunpack.c.0.s8 %v2391
        %v2393 = vlaneseq
        %v2394 = vshrl.u32 %v2393, 7
        %v2395 = vsub.s32 %v2392, %v2394
        %v2396 = vrot.slane %v2389, %v2395
        %v2397 = vcombine.low %v2228, %v2292
        %v2399 = vunpack.c.l.s4 1983009808
        %v2400 = vunpack.c.0.s8 %v2399
        %v2401 = vlaneseq
        %v2402 = vshrl.u32 %v2401, 7
        %v2403 = vsub.s32 %v2400, %v2402
        %v2404 = vrot.slane %v2397, %v2403
        %v2405 = vcombine.low %v2260, %v2324
        %v2407 = vunpack.c.l.s4 1983009808
        %v2408 = vunpack.c.0.s8 %v2407
        %v2409 = vlaneseq
        %v2410 = vshrl.u32 %v2409, 7
        %v2411 = vsub.s32 %v2408, %v2410
        %v2412 = vrot.slane %v2405, %v2411
        %v2413 = vcombine.low %v2388, %v2396
        %v2415 = vunpack.c.l.s4 1934713408
        %v2416 = vunpack.c.0.s8 %v2415
        %v2417 = vlaneseq
        %v2418 = vshrl.u32 %v2417, 7
        %v2419 = vsub.s32 %v2416, %v2418
        %v2420 = vrot.slane %v2413, %v2419
        %v2421 = vcombine.low %v2404, %v2412
        %v2423 = vunpack.c.l.s4 1934713408
        %v2424 = vunpack.c.0.s8 %v2423
        %v2425 = vlaneseq
        %v2426 = vshrl.u32 %v2425, 7
        %v2427 = vsub.s32 %v2424, %v2426
        %v2428 = vrot.slane %v2421, %v2427
        %v2429 = vcombine.low %v2420, %v2428
        %v2432 = vpack.i.b16 %v2429, %v2380
        %v2433 = vshrl.u32 %v2380, 16
        %v2434 = vshrl.u32 %v2429, 16
        %v2435 = vpack.i.b16 %v2434, %v2433
        %v2437 = vsel %vm1755, %v2432, 0
        %v2440 = vsel %vm1755, %v1778, 0
        %2442 = vmatprep.subr.bf16.mxu0 0
        %2443 = vmatpush1.bf16.xpose.msra.mxu0 %v2440
        %2444 = vmatprep.subr.bf16.mxu0 0
        %2445 = vmatpush1.bf16.xpose.msra.mxu0 0
        %2446 = vmatprep.subr.bf16.mxu0 0
        %2447 = vmatpush1.bf16.xpose.msra.mxu0 0
        %2448 = vmatprep.subr.bf16.mxu0 0
        %2449 = vmatpush1.bf16.xpose.msra.mxu0 0
        %2450 = vmatprep.subr.bf16.mxu0 0
        %2451 = vmatpush1.bf16.xpose.msra.mxu0 0
        %2452 = vmatprep.subr.bf16.mxu0 0
        %2453 = vmatpush1.bf16.xpose.msra.mxu0 0
        %2454 = vmatprep.subr.bf16.mxu0 0
        %2455 = vmatpush1.bf16.xpose.msra.mxu0 0
        %2456 = vmatprep.subr.bf16.mxu0 0
        %2457 = vmatpush1.bf16.xpose.msra.mxu0 0
        %2458 = vmatprep.subr.bf16.mxu0 0
        %2459 = vmatpush1.bf16.xpose.msra.mxu0 0
        %2460 = vmatprep.subr.bf16.mxu0 0
        %2461 = vmatpush1.bf16.xpose.msra.mxu0 0
        %2462 = vmatprep.subr.bf16.mxu0 0
        %2463 = vmatpush1.bf16.xpose.msra.mxu0 0
        %2464 = vmatprep.subr.bf16.mxu0 0
        %2465 = vmatpush1.bf16.xpose.msra.mxu0 0
        %2466 = vmatprep.subr.bf16.mxu0 0
        %2467 = vmatpush1.bf16.xpose.msra.mxu0 0
        %2468 = vmatprep.subr.bf16.mxu0 0
        %2469 = vmatpush1.bf16.xpose.msra.mxu0 0
        %2470 = vmatprep.subr.bf16.mxu0 0
        %2471 = vmatpush1.bf16.xpose.msra.mxu0 0
        %2472 = vmatprep.subr.bf16.mxu0 0
        %2473 = vmatpush1.bf16.xpose.msra.mxu0 0
        %2474 = vmatprep.mubr.bf16.mxu0 0
        %2475 = vmatmul.mubr.bf16.gmra.mrb[0].mxu0 %v2437
        %v2476 = vpop.f32.mrb[0].mxu0
        %v2477 = vadd.f32 0.0, %v2476
        %v2478 = vpop.f32.mrb[0].mxu0
        %v2479 = vpop.f32.mrb[0].mxu0
        %v2480 = vadd.f32 0.0, %v2479
        %v2481 = vpop.f32.mrb[0].mxu0
        %2482 = vdwg.mxu0
        %v2484 = vsel %vm1755, %v2435, 0
        %v2487 = vsel %vm1755, %v1779, 0
        %2489 = vmatprep.subr.bf16.mxu0 0
        %2490 = vmatpush1.bf16.xpose.msra.mxu0 %v2487
        %2491 = vmatprep.subr.bf16.mxu0 0
        %2492 = vmatpush1.bf16.xpose.msra.mxu0 0
        %2493 = vmatprep.subr.bf16.mxu0 0
        %2494 = vmatpush1.bf16.xpose.msra.mxu0 0
        %2495 = vmatprep.subr.bf16.mxu0 0
        %2496 = vmatpush1.bf16.xpose.msra.mxu0 0
        %2497 = vmatprep.subr.bf16.mxu0 0
        %2498 = vmatpush1.bf16.xpose.msra.mxu0 0
        %2499 = vmatprep.subr.bf16.mxu0 0
        %2500 = vmatpush1.bf16.xpose.msra.mxu0 0
        %2501 = vmatprep.subr.bf16.mxu0 0
        %2502 = vmatpush1.bf16.xpose.msra.mxu0 0
        %2503 = vmatprep.subr.bf16.mxu0 0
        %2504 = vmatpush1.bf16.xpose.msra.mxu0 0
        %2505 = vmatprep.subr.bf16.mxu0 0
        %2506 = vmatpush1.bf16.xpose.msra.mxu0 0
        %2507 = vmatprep.subr.bf16.mxu0 0
        %2508 = vmatpush1.bf16.xpose.msra.mxu0 0
        %2509 = vmatprep.subr.bf16.mxu0 0
        %2510 = vmatpush1.bf16.xpose.msra.mxu0 0
        %2511 = vmatprep.subr.bf16.mxu0 0
        %2512 = vmatpush1.bf16.xpose.msra.mxu0 0
        %2513 = vmatprep.subr.bf16.mxu0 0
        %2514 = vmatpush1.bf16.xpose.msra.mxu0 0
        %2515 = vmatprep.subr.bf16.mxu0 0
        %2516 = vmatpush1.bf16.xpose.msra.mxu0 0
        %2517 = vmatprep.subr.bf16.mxu0 0
        %2518 = vmatpush1.bf16.xpose.msra.mxu0 0
        %2519 = vmatprep.subr.bf16.mxu0 0
        %2520 = vmatpush1.bf16.xpose.msra.mxu0 0
        %2521 = vmatprep.mubr.bf16.mxu0 0
        %2522 = vmatmul.mubr.bf16.gmra.mrb[0].mxu0 %v2484
        %v2523 = vpop.f32.mrb[0].mxu0
        %v2524 = vadd.f32 0.0, %v2523
        %v2525 = vpop.f32.mrb[0].mxu0
        %v2526 = vpop.f32.mrb[0].mxu0
        %v2527 = vadd.f32 0.0, %v2526
        %v2528 = vpop.f32.mrb[0].mxu0
        %2529 = vdwg.mxu0
        %2530 = vxpose.xlu0.b32.start [1/16] %v2477, 128
        %2531 = vxpose.xlu0.b32.cont [2/16] %v2480, 128
        %2532 = vxpose.xlu0.b32.cont [3/16] 0.0, 128
        %2533 = vxpose.xlu0.b32.cont [4/16] 0.0, 128
        %2534 = vxpose.xlu0.b32.cont [5/16] 0.0, 128
        %2535 = vxpose.xlu0.b32.cont [6/16] 0.0, 128
        %2536 = vxpose.xlu0.b32.cont [7/16] 0.0, 128
        %2537 = vxpose.xlu0.b32.cont [8/16] 0.0, 128
        %2538 = vxpose.xlu0.b32.cont [9/16] 0.0, 128
        %2539 = vxpose.xlu0.b32.cont [10/16] 0.0, 128
        %2540 = vxpose.xlu0.b32.cont [11/16] 0.0, 128
        %2541 = vxpose.xlu0.b32.cont [12/16] 0.0, 128
        %2542 = vxpose.xlu0.b32.cont [13/16] 0.0, 128
        %2543 = vxpose.xlu0.b32.cont [14/16] 0.0, 128
        %2544 = vxpose.xlu0.b32.cont [15/16] 0.0, 128
        %2545 = vxpose.xlu0.b32.end [16/16] 0.0, 128
        %v2546 = vpop.trf.xlu0
        %v2547 = vpop.trf.xlu0
        %v2548 = vpop.trf.xlu0
        %v2549 = vpop.trf.xlu0
        %v2550 = vpop.trf.xlu0
        %v2551 = vpop.trf.xlu0
        %v2552 = vpop.trf.xlu0
        %v2553 = vpop.trf.xlu0
        %v2554 = vpop.trf.xlu0
        %v2555 = vpop.trf.xlu0
        %v2556 = vpop.trf.xlu0
        %v2557 = vpop.trf.xlu0
        %v2558 = vpop.trf.xlu0
        %v2559 = vpop.trf.xlu0
        %v2560 = vpop.trf.xlu0
        %v2561 = vpop.trf.xlu0
        %2562 = vxpose.xlu0.b32.start [1/16] %v2524, 128
        %2563 = vxpose.xlu0.b32.cont [2/16] %v2527, 128
        %2564 = vxpose.xlu0.b32.cont [3/16] 0.0, 128
        %2565 = vxpose.xlu0.b32.cont [4/16] 0.0, 128
        %2566 = vxpose.xlu0.b32.cont [5/16] 0.0, 128
        %2567 = vxpose.xlu0.b32.cont [6/16] 0.0, 128
        %2568 = vxpose.xlu0.b32.cont [7/16] 0.0, 128
        %2569 = vxpose.xlu0.b32.cont [8/16] 0.0, 128
        %2570 = vxpose.xlu0.b32.cont [9/16] 0.0, 128
        %2571 = vxpose.xlu0.b32.cont [10/16] 0.0, 128
        %2572 = vxpose.xlu0.b32.cont [11/16] 0.0, 128
        %2573 = vxpose.xlu0.b32.cont [12/16] 0.0, 128
        %2574 = vxpose.xlu0.b32.cont [13/16] 0.0, 128
        %2575 = vxpose.xlu0.b32.cont [14/16] 0.0, 128
        %2576 = vxpose.xlu0.b32.cont [15/16] 0.0, 128
        %2577 = vxpose.xlu0.b32.end [16/16] 0.0, 128
        %v2578 = vpop.trf.xlu0
        %v2579 = vpop.trf.xlu0
        %v2580 = vpop.trf.xlu0
        %v2581 = vpop.trf.xlu0
        %v2582 = vpop.trf.xlu0
        %v2583 = vpop.trf.xlu0
        %v2584 = vpop.trf.xlu0
        %v2585 = vpop.trf.xlu0
        %v2586 = vpop.trf.xlu0
        %v2587 = vpop.trf.xlu0
        %v2588 = vpop.trf.xlu0
        %v2589 = vpop.trf.xlu0
        %v2590 = vpop.trf.xlu0
        %v2591 = vpop.trf.xlu0
        %v2592 = vpop.trf.xlu0
        %v2593 = vpop.trf.xlu0
        %v2594 = vcombine.high %v2546, 0.0
        %v2596 = vunpack.c.l.s4 1983009808
        %v2597 = vunpack.c.0.s8 %v2596
        %v2598 = vlaneseq
        %v2599 = vshrl.u32 %v2598, 7
        %v2600 = vsub.s32 %v2597, %v2599
        %v2601 = vrot.slane %v2546, %v2600
        %v2603 = vunpack.c.l.s4 1983009808
        %v2604 = vunpack.c.0.s8 %v2603
        %v2605 = vlaneseq
        %v2606 = vshrl.u32 %v2605, 7
        %v2607 = vsub.s32 %v2604, %v2606
        %v2608 = vrot.slane %v2594, %v2607
        %v2609 = vcombine.high %v2578, 0.0
        %v2611 = vunpack.c.l.s4 1983009808
        %v2612 = vunpack.c.0.s8 %v2611
        %v2613 = vlaneseq
        %v2614 = vshrl.u32 %v2613, 7
        %v2615 = vsub.s32 %v2612, %v2614
        %v2616 = vrot.slane %v2578, %v2615
        %v2618 = vunpack.c.l.s4 1983009808
        %v2619 = vunpack.c.0.s8 %v2618
        %v2620 = vlaneseq
        %v2621 = vshrl.u32 %v2620, 7
        %v2622 = vsub.s32 %v2619, %v2621
        %v2623 = vrot.slane %v2609, %v2622
        %v2624 = vcombine.low %v2601, %v2616
        %v2625 = vcombine.high %v2601, %v2616
        %v2627 = vunpack.c.l.s4 1934713408
        %v2628 = vunpack.c.0.s8 %v2627
        %v2629 = vlaneseq
        %v2630 = vshrl.u32 %v2629, 7
        %v2631 = vsub.s32 %v2628, %v2630
        %v2632 = vrot.slane %v2624, %v2631
        %v2634 = vunpack.c.l.s4 1934713408
        %v2635 = vunpack.c.0.s8 %v2634
        %v2636 = vlaneseq
        %v2637 = vshrl.u32 %v2636, 7
        %v2638 = vsub.s32 %v2635, %v2637
        %v2639 = vrot.slane %v2625, %v2638
        %v2640 = vcombine.low %v2608, %v2623
        %v2641 = vcombine.high %v2608, %v2623
        %v2643 = vunpack.c.l.s4 1934713408
        %v2644 = vunpack.c.0.s8 %v2643
        %v2645 = vlaneseq
        %v2646 = vshrl.u32 %v2645, 7
        %v2647 = vsub.s32 %v2644, %v2646
        %v2648 = vrot.slane %v2640, %v2647
        %v2650 = vunpack.c.l.s4 1934713408
        %v2651 = vunpack.c.0.s8 %v2650
        %v2652 = vlaneseq
        %v2653 = vshrl.u32 %v2652, 7
        %v2654 = vsub.s32 %v2651, %v2653
        %v2655 = vrot.slane %v2641, %v2654
        %v2656 = vcombine.high %v2632, 0.0
        %v2657 = vcombine.high %v2639, 0.0
        %v2658 = vcombine.high %v2648, 0.0
        %v2659 = vcombine.high %v2655, 0.0
        %v2660 = vcombine.low %v2632, %v2639
        %v2662 = vunpack.c.l.s4 1983009808
        %v2663 = vunpack.c.0.s8 %v2662
        %v2664 = vlaneseq
        %v2665 = vshrl.u32 %v2664, 7
        %v2666 = vsub.s32 %v2663, %v2665
        %v2667 = vrot.slane %v2660, %v2666
        %v2668 = vcombine.low %v2656, %v2657
        %v2670 = vunpack.c.l.s4 1983009808
        %v2671 = vunpack.c.0.s8 %v2670
        %v2672 = vlaneseq
        %v2673 = vshrl.u32 %v2672, 7
        %v2674 = vsub.s32 %v2671, %v2673
        %v2675 = vrot.slane %v2668, %v2674
        %v2676 = vcombine.low %v2648, %v2655
        %v2678 = vunpack.c.l.s4 1983009808
        %v2679 = vunpack.c.0.s8 %v2678
        %v2680 = vlaneseq
        %v2681 = vshrl.u32 %v2680, 7
        %v2682 = vsub.s32 %v2679, %v2681
        %v2683 = vrot.slane %v2676, %v2682
        %v2684 = vcombine.low %v2658, %v2659
        %v2686 = vunpack.c.l.s4 1983009808
        %v2687 = vunpack.c.0.s8 %v2686
        %v2688 = vlaneseq
        %v2689 = vshrl.u32 %v2688, 7
        %v2690 = vsub.s32 %v2687, %v2689
        %v2691 = vrot.slane %v2684, %v2690
        %v2692 = vcombine.low %v2667, %v2675
        %v2694 = vunpack.c.l.s4 1934713408
        %v2695 = vunpack.c.0.s8 %v2694
        %v2696 = vlaneseq
        %v2697 = vshrl.u32 %v2696, 7
        %v2698 = vsub.s32 %v2695, %v2697
        %v2699 = vrot.slane %v2692, %v2698
        %v2700 = vcombine.low %v2683, %v2691
        %v2702 = vunpack.c.l.s4 1934713408
        %v2703 = vunpack.c.0.s8 %v2702
        %v2704 = vlaneseq
        %v2705 = vshrl.u32 %v2704, 7
        %v2706 = vsub.s32 %v2703, %v2705
        %v2707 = vrot.slane %v2700, %v2706
        %v2708 = vcombine.low %v2699, %v2707
        %v2709 = vcombine.high %v2699, %v2707
        %2711 = vrot.lane.b32.xlu0 %v2709, 16
        %v2712 = vpop.permute.xlu0 %2711
        %v2714 = vsel %vm1657, %v2708, %v2712
        %v2715 = vpack.c.bf16 %v2714, %v2714
        %v2716 = vld [vmem:[%s6] sm:$0xf]
        %v2717 = vld [vmem:[%s6 + $0x4] sm:$0xf]
        %v2718 = vld [vmem:[%s6 + $0x8] sm:$0xf]
        %v2719 = vld [vmem:[%s6 + $0xc] sm:$0xf]
        %v2720 = vld [vmem:[#allocation8] sm:$0x1]
        %v2722 = vlaneseq
        %v2723 = vshrl.u32 %v2722, 7
        %v2724 = vsub.s32 0, %v2723
        %v2725 = vrot.slane %v2720, %v2724
        %v2731 = vunpack.c.l.b16 %v2716
        %v2732 = vunpack.c.l.b16 %v2717
        %v2733 = vunpack.c.l.b16 %v2718
        %v2734 = vunpack.c.l.b16 %v2719
        %v2735 = vpack.c.b16 %v2732, %v2731
        %v2736 = vpack.c.b16 %v2734, %v2733
        %v2740 = vsel %vm611, %v2715, 0
        %2742 = vmatprep.subr.bf16.mxu0 0
        %2743 = vmatpush1.bf16.msra.mxu0 %v2735
        %2744 = vmatprep.subr.bf16.mxu0 0
        %2745 = vmatpush1.bf16.msra.mxu0 %v2736
        %2746 = vmatprep.subr.bf16.mxu0 0
        %2747 = vmatpush1.bf16.msra.mxu0 0
        %2748 = vmatprep.subr.bf16.mxu0 0
        %2749 = vmatpush1.bf16.msra.mxu0 0
        %2750 = vmatprep.subr.bf16.mxu0 0
        %2751 = vmatpush1.bf16.msra.mxu0 0
        %2752 = vmatprep.subr.bf16.mxu0 0
        %2753 = vmatpush1.bf16.msra.mxu0 0
        %2754 = vmatprep.subr.bf16.mxu0 0
        %2755 = vmatpush1.bf16.msra.mxu0 0
        %2756 = vmatprep.subr.bf16.mxu0 0
        %2757 = vmatpush1.bf16.msra.mxu0 0
        %2758 = vmatprep.subr.bf16.mxu0 0
        %2759 = vmatpush1.bf16.msra.mxu0 0
        %2760 = vmatprep.subr.bf16.mxu0 0
        %2761 = vmatpush1.bf16.msra.mxu0 0
        %2762 = vmatprep.subr.bf16.mxu0 0
        %2763 = vmatpush1.bf16.msra.mxu0 0
        %2764 = vmatprep.subr.bf16.mxu0 0
        %2765 = vmatpush1.bf16.msra.mxu0 0
        %2766 = vmatprep.subr.bf16.mxu0 0
        %2767 = vmatpush1.bf16.msra.mxu0 0
        %2768 = vmatprep.subr.bf16.mxu0 0
        %2769 = vmatpush1.bf16.msra.mxu0 0
        %2770 = vmatprep.subr.bf16.mxu0 0
        %2771 = vmatpush1.bf16.msra.mxu0 0
        %2772 = vmatprep.subr.bf16.mxu0 0
        %2773 = vmatpush1.bf16.msra.mxu0 0
        %2774 = vmatprep.mubr.bf16.mxu0 0
        %2775 = vmatmul.mubr.bf16.gmra.mrb[0].mxu0 %v2740
        %v2776 = vpop.f32.mrb[0].mxu0
        %v2777 = vadd.f32 %v2725, %v2776
        %v2778 = vpop.f32.mrb[0].mxu0
        %v2779 = vpop.f32.mrb[0].mxu0
        %v2780 = vpop.f32.mrb[0].mxu0
        %2781 = vdwg.mxu0
        %v2782 = vadd.f32 %v639, %v2777
        %v2783 = vld [vmem:[#allocation10] sm:$0x1]
        %v2784 = vld [vmem:[#allocation11] sm:$0x1]
        %v2785 = vsel %vm611, %v2782, 0.0
        %2786 = vadd.xlane.f32.xlu0 %v2785
        %v2787 = vpop.xlane.xlu0 %2786
        %v2788 = vmul.f32 %v2787, %v615
        %v2789 = vsub.f32 %v2782, %v2788
        %v2790 = vmul.f32 %v2789, %v2789
        %v2791 = vsel %vm611, %v2790, 0.0
        %2792 = vadd.xlane.f32.xlu0 %v2791
        %v2793 = vpop.xlane.xlu0 %2792
        %v2794 = vmul.f32 %v2793, %v615
        %v2795 = vadd.f32 %v2794, 1e-12
        %v2796 = vrsqrt.pop %v2795
        %v2797 = vmul.f32 %v2789, %v2796
        %v2799 = vlaneseq
        %v2800 = vshrl.u32 %v2799, 7
        %v2801 = vsub.s32 0, %v2800
        %v2802 = vrot.slane %v2783, %v2801
        %v2804 = vmul.f32 %v2797, %v2802
        %v2806 = vlaneseq
        %v2807 = vshrl.u32 %v2806, 7
        %v2808 = vsub.s32 0, %v2807
        %v2809 = vrot.slane %v2784, %v2808
        %v2811 = vadd.f32 %v2804, %v2809
        %v2812 = vpack.c.bf16 %v2811, %v2811
        %v2813 = vld [vmem:[%s10] sm:$0xf]
        %v2814 = vld [vmem:[%s10 + $0x4] sm:$0xf]
        %v2815 = vld [vmem:[%s10 + $0x8] sm:$0xf]
        %v2816 = vld [vmem:[%s10 + $0xc] sm:$0xf]
        %v2817 = vld [vmem:[%s11] sm:$0x1]
        %v2819 = vlaneseq
        %v2820 = vshrl.u32 %v2819, 7
        %v2821 = vsub.s32 0, %v2820
        %v2822 = vrot.slane %v2817, %v2821
        %v2828 = vunpack.c.l.b16 %v2813
        %v2829 = vunpack.c.l.b16 %v2814
        %v2830 = vunpack.c.l.b16 %v2815
        %v2831 = vunpack.c.l.b16 %v2816
        %v2832 = vpack.c.b16 %v2829, %v2828
        %v2833 = vpack.c.b16 %v2831, %v2830
        %v2837 = vsel %vm611, %v2812, 0
        %2839 = vmatprep.subr.bf16.mxu0 0
        %2840 = vmatpush1.bf16.msra.mxu0 %v2832
        %2841 = vmatprep.subr.bf16.mxu0 0
        %2842 = vmatpush1.bf16.msra.mxu0 %v2833
        %2843 = vmatprep.subr.bf16.mxu0 0
        %2844 = vmatpush1.bf16.msra.mxu0 0
        %2845 = vmatprep.subr.bf16.mxu0 0
        %2846 = vmatpush1.bf16.msra.mxu0 0
        %2847 = vmatprep.subr.bf16.mxu0 0
        %2848 = vmatpush1.bf16.msra.mxu0 0
        %2849 = vmatprep.subr.bf16.mxu0 0
        %2850 = vmatpush1.bf16.msra.mxu0 0
        %2851 = vmatprep.subr.bf16.mxu0 0
        %2852 = vmatpush1.bf16.msra.mxu0 0
        %2853 = vmatprep.subr.bf16.mxu0 0
        %2854 = vmatpush1.bf16.msra.mxu0 0
        %2855 = vmatprep.subr.bf16.mxu0 0
        %2856 = vmatpush1.bf16.msra.mxu0 0
        %2857 = vmatprep.subr.bf16.mxu0 0
        %2858 = vmatpush1.bf16.msra.mxu0 0
        %2859 = vmatprep.subr.bf16.mxu0 0
        %2860 = vmatpush1.bf16.msra.mxu0 0
        %2861 = vmatprep.subr.bf16.mxu0 0
        %2862 = vmatpush1.bf16.msra.mxu0 0
        %2863 = vmatprep.subr.bf16.mxu0 0
        %2864 = vmatpush1.bf16.msra.mxu0 0
        %2865 = vmatprep.subr.bf16.mxu0 0
        %2866 = vmatpush1.bf16.msra.mxu0 0
        %2867 = vmatprep.subr.bf16.mxu0 0
        %2868 = vmatpush1.bf16.msra.mxu0 0
        %2869 = vmatprep.subr.bf16.mxu0 0
        %2870 = vmatpush1.bf16.msra.mxu0 0
        %2871 = vmatprep.mubr.bf16.mxu0 0
        %2872 = vmatmul.mubr.bf16.gmra.mrb[0].mxu0 %v2837
        %v2873 = vpop.f32.mrb[0].mxu0
        %v2874 = vadd.f32 %v2822, %v2873
        %v2875 = vpop.f32.mrb[0].mxu0
        %v2876 = vpop.f32.mrb[0].mxu0
        %v2877 = vpop.f32.mrb[0].mxu0
        %2878 = vdwg.mxu0
        %v2879 = vmul.f32 %v2874, 0.5
        %v2880 = vmul.f32 %v2874, 0.70710677
        %v2881 = verf.f32.pop %v2880
        %v2882 = vadd.f32 %v2881, 1.0
        %v2883 = vmul.f32 %v2879, %v2882
        %v2884 = vpack.c.bf16 %v2883, %v2883
        %v2885 = vld [vmem:[%s12] sm:$0xf]
        %v2886 = vld [vmem:[%s12 + $0x4] sm:$0xf]
        %v2887 = vld [vmem:[%s12 + $0x8] sm:$0xf]
        %v2888 = vld [vmem:[%s12 + $0xc] sm:$0xf]
        %v2889 = vld [vmem:[%s12 + $0x10] sm:$0xf]
        %v2890 = vld [vmem:[%s12 + $0x14] sm:$0xf]
        %v2891 = vld [vmem:[%s12 + $0x18] sm:$0xf]
        %v2892 = vld [vmem:[%s12 + $0x1c] sm:$0xf]
        %v2893 = vld [vmem:[%s13] sm:$0x1]
        %v2895 = vlaneseq
        %v2896 = vshrl.u32 %v2895, 7
        %v2897 = vsub.s32 0, %v2896
        %v2898 = vrot.slane %v2893, %v2897
        %v2908 = vunpack.c.l.b16 %v2885
        %v2909 = vunpack.c.l.b16 %v2886
        %v2910 = vunpack.c.l.b16 %v2887
        %v2911 = vunpack.c.l.b16 %v2888
        %v2912 = vunpack.c.l.b16 %v2889
        %v2913 = vunpack.c.l.b16 %v2890
        %v2914 = vunpack.c.l.b16 %v2891
        %v2915 = vunpack.c.l.b16 %v2892
        %v2916 = vpack.c.b16 %v2909, %v2908
        %v2917 = vpack.c.b16 %v2911, %v2910
        %v2918 = vpack.c.b16 %v2913, %v2912
        %v2919 = vpack.c.b16 %v2915, %v2914
        %vm2924 = vcmask 523264
        %v2926 = vsel %vm2924, %v2884, 0
        %2928 = vmatprep.subr.bf16.mxu0 0
        %2929 = vmatpush1.bf16.msra.mxu0 %v2916
        %2930 = vmatprep.subr.bf16.mxu0 0
        %2931 = vmatpush1.bf16.msra.mxu0 %v2917
        %2932 = vmatprep.subr.bf16.mxu0 0
        %2933 = vmatpush1.bf16.msra.mxu0 %v2918
        %2934 = vmatprep.subr.bf16.mxu0 0
        %2935 = vmatpush1.bf16.msra.mxu0 %v2919
        %2936 = vmatprep.subr.bf16.mxu0 0
        %2937 = vmatpush1.bf16.msra.mxu0 0
        %2938 = vmatprep.subr.bf16.mxu0 0
        %2939 = vmatpush1.bf16.msra.mxu0 0
        %2940 = vmatprep.subr.bf16.mxu0 0
        %2941 = vmatpush1.bf16.msra.mxu0 0
        %2942 = vmatprep.subr.bf16.mxu0 0
        %2943 = vmatpush1.bf16.msra.mxu0 0
        %2944 = vmatprep.subr.bf16.mxu0 0
        %2945 = vmatpush1.bf16.msra.mxu0 0
        %2946 = vmatprep.subr.bf16.mxu0 0
        %2947 = vmatpush1.bf16.msra.mxu0 0
        %2948 = vmatprep.subr.bf16.mxu0 0
        %2949 = vmatpush1.bf16.msra.mxu0 0
        %2950 = vmatprep.subr.bf16.mxu0 0
        %2951 = vmatpush1.bf16.msra.mxu0 0
        %2952 = vmatprep.subr.bf16.mxu0 0
        %2953 = vmatpush1.bf16.msra.mxu0 0
        %2954 = vmatprep.subr.bf16.mxu0 0
        %2955 = vmatpush1.bf16.msra.mxu0 0
        %2956 = vmatprep.subr.bf16.mxu0 0
        %2957 = vmatpush1.bf16.msra.mxu0 0
        %2958 = vmatprep.subr.bf16.mxu0 0
        %2959 = vmatpush1.bf16.msra.mxu0 0
        %2960 = vmatprep.mubr.bf16.mxu0 0
        %2961 = vmatmul.mubr.bf16.gmra.mrb[0].mxu0 %v2926
        %v2962 = vpop.f32.mrb[0].mxu0
        %v2963 = vadd.f32 %v2898, %v2962
        %v2964 = vpop.f32.mrb[0].mxu0
        %v2965 = vpop.f32.mrb[0].mxu0
        %v2966 = vpop.f32.mrb[0].mxu0
        %2967 = vdwg.mxu0
        %v2968 = vadd.f32 %v2811, %v2963
        %v2969 = vld [vmem:[%s14] sm:$0x1]
        %v2970 = vld [vmem:[%s15] sm:$0x1]
        %v2971 = vsel %vm611, %v2968, 0.0
        %2972 = vadd.xlane.f32.xlu0 %v2971
        %v2973 = vpop.xlane.xlu0 %2972
        %v2974 = vmul.f32 %v2973, %v615
        %v2975 = vsub.f32 %v2968, %v2974
        %v2976 = vmul.f32 %v2975, %v2975
        %v2977 = vsel %vm611, %v2976, 0.0
        %2978 = vadd.xlane.f32.xlu0 %v2977
        %v2979 = vpop.xlane.xlu0 %2978
        %v2980 = vmul.f32 %v2979, %v615
        %v2981 = vadd.f32 %v2980, 1e-12
        %v2982 = vrsqrt.pop %v2981
        %v2983 = vmul.f32 %v2975, %v2982
        %v2985 = vlaneseq
        %v2986 = vshrl.u32 %v2985, 7
        %v2987 = vsub.s32 0, %v2986
        %v2988 = vrot.slane %v2969, %v2987
        %v2990 = vmul.f32 %v2983, %v2988
        %v2992 = vlaneseq
        %v2993 = vshrl.u32 %v2992, 7
        %v2994 = vsub.s32 0, %v2993
        %v2995 = vrot.slane %v2970, %v2994
        %v2997 = vadd.f32 %v2990, %v2995
        %v2998 = vpack.c.bf16 %v2997, %v2997
        %vm2999 = vcmask 257024
        %3000 = vst.msk [vmem:[%s599] sm:$0xf] %vm2999, %v2998
        %s3001 = sand.u32 %s388, 1
        %s3002 = scalar_lea.sflag [#allocation4], %s3001
        %s3003 = sand.u32 %s388, 1
        %s3004 = smul.addr %s3003, 4
        %s3005 = scalar_lea.vmem [#allocation13], %s3004
        // Predicated region
        $region109: #{tpu_custom_call.1} parent=83 // pred_check
          %p3006 = pneg %p398
        $region110: #{tpu_custom_call.1} parent=83 // pred_check_branch
          %3008 = sbr.rel (%p3006) target = $region112
        $region111: #{tpu_custom_call.1} parent=83 // pred_region
          %s3010 = ssub.s32 64, 64
          %3011 = vsyncadd %s3002, %s3010
          %s3012 = smul.addr %s34, 64
          %s3013 = scalar_lea.hbm %s16, %s3012
          %s3015 = sshll.u32 %s3005, 4
          %s3016 = int_to_ptr.vmem [resolvable:$true] %s3015
          %3018 = dma.vmem_to_hbm [thread:$0]  %s3016, 64, %s3013, %s3002
        $region112: #{tpu_custom_call.1} parent=83 // pred_fallthru
          _
      $region84: #{tpu_custom_call.1} parent=5 // pred_fallthru
        _
      %p3019 = scmp.le.s32.totalorder 2, %s29
      // Predicated region
      $region113: #{tpu_custom_call.1} parent=5 // pred_check
        %p3020 = pneg %p3019
      $region114: #{tpu_custom_call.1} parent=5 // pred_check_branch
        %3022 = sbr.rel (%p3020) target = $region116
      $region115: #{tpu_custom_call.1} parent=5 // pred_region
        %s3023 = ssub.s32 %s29, 2
        // Predicated region
        $region117: #{tpu_custom_call.1} parent=115 // pred_check
          %p3024 = pneg %p404
        $region118: #{tpu_custom_call.1} parent=115 // pred_check_branch
          %3026 = sbr.rel (%p3024) target = $region120
        $region119: #{tpu_custom_call.1} parent=115 // pred_region
          %s3027 = sand.u32 %s389, 1
          %s3028 = scalar_lea.sflag [#allocation4], %s3027
          %s3029 = sand.u32 %s389, 1
          %s3030 = smul.addr %s3029, 4
          %s3031 = scalar_lea.vmem [#allocation13], %s3030
          %3032 = dma.done %s3028, 64
        $region120: #{tpu_custom_call.1} parent=115 // pred_fallthru
          _
      $region116: #{tpu_custom_call.1} parent=5 // pred_fallthru
        _
    $region6: #{tpu_custom_call.1} parent=1 // loop_footer
      %s33 = sadd.s32 1, %s29
    $region7: #{tpu_custom_call.1} parent=1 // loop_footer_branch
      %28 = sbr.rel target = $region3
    $region8: #{tpu_custom_call.1} parent=1 // loop_exit
      _
    %3033 = vsyncpa [#allocation3], 1
    %s3034 = scalar_lea.sflag [#allocation3], 1
    %3035 = vsyncpa %s3034, 1
    %3036 = vsyncpa [#allocation6], 1
    %3037 = vsyncpa [#allocation9], 1
    %3038 = vsyncpa [#allocation12], 1
    %3039 = vsyncpa [#allocation4], 1
    %s3040 = scalar_lea.sflag [#allocation4], 1
    %3041 = vsyncpa %s3040, 1

</llo_original>
